<compile_context>
chip_gen: v6e
topology: v6e:2x2x1
jax: 0.10.0
libtpu: 0.0.40
codegen_flags: <defaults>
</compile_context>

<pallas_src>
import functools
import math

import jax
import jax.numpy as jnp
from jax import lax
from jax.experimental import pallas as pl
from jax.experimental.pallas import tpu as pltpu

F32 = jnp.float32
BF16 = jnp.bfloat16
_NEG_INF = -1e18
_LN_EPS = 1e-6          # nn.LayerNorm(d_model, eps=1e-06) in the reference module


# ----------------------------------------------------------------------------
# helpers
# ----------------------------------------------------------------------------
def _pick_tile(dim, pref, aligns):
    """Largest tile <= pref that divides `dim` and is aligned, else full dim."""
    if dim <= pref:
        return dim
    for align in aligns:
        t = (min(pref, dim) // align) * align
        while t >= align:
            if dim % t == 0:
                return t
            t -= align
    return dim


@functools.lru_cache(maxsize=None)
def _vmem_limit_bytes():
    # Per-generation scoped VMEM: ~96 MiB on v5e/v6e (128 MiB physical),
    # ~48 MiB on v7x (64 MiB/TC physical).  Fallback conservative.
    cap = 64 * 1024 * 1024
    try:
        info = pltpu.get_tpu_info()
        cap = int(getattr(info, "vmem_capacity_bytes", cap))
    except Exception:
        pass
    return min((cap * 3) // 4, 100 * 1024 * 1024)


def _compiler_params(semantics):
    return pltpu.CompilerParams(
        dimension_semantics=semantics,
        vmem_limit_bytes=_vmem_limit_bytes(),
    )


# ----------------------------------------------------------------------------
# Tiled matmul (+bias, optional relu, optional fused residual add)
# ----------------------------------------------------------------------------
def _matmul_kernel(x_ref, w_ref, b_ref, *rest, activation, has_residual):
    if has_residual:
        res_ref, o_ref, acc_ref = rest
    else:
        o_ref, acc_ref = rest

    @pl.when(pl.program_id(2) == 0)
    def _():
        acc_ref[...] = jnp.zeros_like(acc_ref)

    acc_ref[...] += jnp.dot(x_ref[...].astype(BF16), w_ref[...],
                            preferred_element_type=jnp.float32)

    @pl.when(pl.program_id(2) == pl.num_programs(2) - 1)
    def _():
        y = acc_ref[...] + b_ref[...].astype(jnp.float32)
        if activation == "relu":
            y = jnp.maximum(y, 0.0)
        if has_residual:
            y = y + res_ref[...].astype(jnp.float32)
        o_ref[...] = y.astype(o_ref.dtype)


def matmul(x2d, w, b, *, activation="none", residual=None, out_dtype=F32,
           tm_pref=512, tn_pref=512, tk_pref=512):
    M, K = x2d.shape
    N = w.shape[1]
    tm = _pick_tile(M, tm_pref, (16, 8))
    tn = _pick_tile(N, tn_pref, (128,))
    tk = _pick_tile(K, tk_pref, (256, 128))   # prefer 256-deep MXU feed (v6e/v7x)
    grid = (M // tm, N // tn, K // tk)

    in_specs = [
        pl.BlockSpec((tm, tk), lambda i, j, k: (i, k)),
        pl.BlockSpec((tk, tn), lambda i, j, k: (k, j)),
        pl.BlockSpec((1, tn), lambda i, j, k: (0, j)),
    ]
    args = [x2d, w.astype(BF16), b.reshape(1, N).astype(F32)]
    if residual is not None:
        in_specs.append(pl.BlockSpec((tm, tn), lambda i, j, k: (i, j)))
        args.append(residual)

    kern = functools.partial(_matmul_kernel, activation=activation,
                             has_residual=residual is not None)
    return pl.pallas_call(
        kern,
        grid=grid,
        in_specs=in_specs,
        out_specs=pl.BlockSpec((tm, tn), lambda i, j, k: (i, j)),
        out_shape=jax.ShapeDtypeStruct((M, N), out_dtype),
        scratch_shapes=[pltpu.VMEM((tm, tn), jnp.float32)],
        compiler_params=_compiler_params(("parallel", "parallel", "arbitrary")),
    )(*args)


# ----------------------------------------------------------------------------
# LayerNorm fused into a matmul.  LN (full-K mean/var/rsqrt) is computed once
# per row block (j == 0), cached in a bf16 VMEM scratch, and reused for all
# output tiles of that row block.
# ----------------------------------------------------------------------------
def _ln_matmul_kernel(x_ref, g_ref, b_ref, w_ref, bias_ref, *rest,
                      activation, emit_norm):
    if emit_norm:
        y_ref, xn_ref, xn_scr = rest
    else:
        y_ref, xn_scr = rest

    @pl.when(pl.program_id(1) == 0)
    def _():
        x = x_ref[...].astype(jnp.float32)
        mean = jnp.mean(x, axis=-1, keepdims=True)
        var = jnp.mean(jnp.square(x - mean), axis=-1, keepdims=True)
        xn = (x - mean) * lax.rsqrt(var + _LN_EPS)
        xn = xn * g_ref[...].astype(jnp.float32) + b_ref[...].astype(jnp.float32)
        xn_scr[...] = xn.astype(xn_scr.dtype)
        if emit_norm:
            xn_ref[...] = xn.astype(xn_ref.dtype)

    y = jnp.dot(xn_scr[...], w_ref[...], preferred_element_type=jnp.float32)
    y = y + bias_ref[...].astype(jnp.float32)
    if activation == "relu":
        y = jnp.maximum(y, 0.0)
    y_ref[...] = y.astype(y_ref.dtype)


def ln_matmul(x2d, gamma, beta, w, b, *, activation="none", emit_norm=False,
              out_dtype=F32, norm_dtype=F32, tm_pref=256, tn_pref=512):
    M, K = x2d.shape
    N = w.shape[1]
    tm = _pick_tile(M, tm_pref, (16, 8))
    tn = _pick_tile(N, tn_pref, (128,))
    grid = (M // tm, N // tn)

    in_specs = [
        pl.BlockSpec((tm, K), lambda i, j: (i, 0)),
        pl.BlockSpec((1, K), lambda i, j: (0, 0)),
        pl.BlockSpec((1, K), lambda i, j: (0, 0)),
        pl.BlockSpec((K, tn), lambda i, j: (0, j)),
        pl.BlockSpec((1, tn), lambda i, j: (0, j)),
    ]
    args = (x2d, gamma.reshape(1, K).astype(F32), beta.reshape(1, K).astype(F32),
            w.astype(BF16), b.reshape(1, N).astype(F32))
    kern = functools.partial(_ln_matmul_kernel, activation=activation,
                             emit_norm=emit_norm)
    if emit_norm:
        out_shape = (jax.ShapeDtypeStruct((M, N), out_dtype),
                     jax.ShapeDtypeStruct((M, K), norm_dtype))
        out_specs = (pl.BlockSpec((tm, tn), lambda i, j: (i, j)),
                     pl.BlockSpec((tm, K), lambda i, j: (i, 0)))
    else:
        out_shape = jax.ShapeDtypeStruct((M, N), out_dtype)
        out_specs = pl.BlockSpec((tm, tn), lambda i, j: (i, j))
    return pl.pallas_call(
        kern,
        grid=grid,
        in_specs=in_specs,
        out_specs=out_specs,
        out_shape=out_shape,
        scratch_shapes=[pltpu.VMEM((tm, K), BF16)],
        compiler_params=_compiler_params(("parallel", "arbitrary")),
    )(*args)


# ----------------------------------------------------------------------------
# Fused self-attention: softmax(QK^T + bias) V -> single K=D out-proj ->
# +residual -> LayerNorm-2.  Grid = (batch, query tile); causal mask built
# in-kernel from iota; 1/sqrt(dh) already folded into the q projection.
# ----------------------------------------------------------------------------
def _self_attn_kernel(qkv_ref, mask_ref, resid_ref, wo_ref, bo_ref,
                      g_ref, b_ref, query_ref, qnorm_ref, *, heads, q_tile):
    T = qkv_ref.shape[1]
    D = qkv_ref.shape[2] // 3
    dh = D // heads
    tq = q_tile
    row0 = pl.multiple_of(pl.program_id(1) * tq, tq)

    q_rows = qkv_ref[0, pl.ds(row0, tq), :]        # [tq, 3D] bf16 (q columns used)
    kv_all = qkv_ref[0, :, D:]                     # [T, 2D]  bf16 (k | v)

    # additive mask bias: padding mask OR in-kernel causal (triu) mask
    pad = mask_ref[0].astype(jnp.float32)          # [tq, T], 1 = masked
    rows = row0 + lax.broadcasted_iota(jnp.int32, (tq, T), 0)
    cols = lax.broadcasted_iota(jnp.int32, (tq, T), 1)
    causal = (cols > rows).astype(jnp.float32)
    bias = jnp.maximum(pad, causal) * _NEG_INF     # [tq, T]

    ctx_parts = []
    for h in range(heads):                         # static unroll over heads
        q_h = q_rows[:, h * dh:(h + 1) * dh]
        k_h = kv_all[:, h * dh:(h + 1) * dh]
        v_h = kv_all[:, D + h * dh:D + (h + 1) * dh]

        s = jnp.dot(q_h, k_h.T, preferred_element_type=jnp.float32) + bias
        e = jnp.exp(s - jnp.max(s, axis=-1, keepdims=True))
        attn = e * pl.reciprocal(jnp.sum(e, axis=-1, keepdims=True), approx=True)
        ctx_parts.append(jnp.dot(attn.astype(BF16), v_h,
                                 preferred_element_type=jnp.float32).astype(BF16))

    # single K=D output projection (full MXU feed) instead of H K=dh matmuls
    ctx = jnp.concatenate(ctx_parts, axis=-1)      # [tq, D] bf16
    sa = jnp.dot(ctx, wo_ref[...], preferred_element_type=jnp.float32)

    query = sa + bo_ref[...].astype(jnp.float32) + resid_ref[0].astype(jnp.float32)
    query_ref[0] = query.astype(query_ref.dtype)

    mean = jnp.mean(query, axis=-1, keepdims=True)
    var = jnp.mean(jnp.square(query - mean), axis=-1, keepdims=True)
    qn = (query - mean) * lax.rsqrt(var + _LN_EPS)
    qnorm_ref[0] = (qn * g_ref[...].astype(jnp.float32)
                    + b_ref[...].astype(jnp.float32)).astype(qnorm_ref.dtype)


def self_attention(qkv, tgt_mask, resid, wo, bo, ln_g, ln_b, heads):
    B, T, D3 = qkv.shape
    D = D3 // 3
    tq = _pick_tile(T, 256, (32,))                 # int8 mask sublane granularity
    kern = functools.partial(_self_attn_kernel, heads=heads, q_tile=tq)
    return pl.pallas_call(
        kern,
        grid=(B, T // tq),
        in_specs=[
            pl.BlockSpec((1, T, D3), lambda b, qi: (b, 0, 0)),
            pl.BlockSpec((1, tq, T), lambda b, qi: (b, qi, 0)),
            pl.BlockSpec((1, tq, D), lambda b, qi: (b, qi, 0)),
            pl.BlockSpec((D, D), lambda b, qi: (0, 0)),
            pl.BlockSpec((1, D), lambda b, qi: (0, 0)),
            pl.BlockSpec((1, D), lambda b, qi: (0, 0)),
            pl.BlockSpec((1, D), lambda b, qi: (0, 0)),
        ],
        out_specs=(
            pl.BlockSpec((1, tq, D), lambda b, qi: (b, qi, 0)),
            pl.BlockSpec((1, tq, D), lambda b, qi: (b, qi, 0)),
        ),
        out_shape=(
            jax.ShapeDtypeStruct((B, T, D), F32),    # query (residual carrier)
            jax.ShapeDtypeStruct((B, T, D), BF16),   # query_norm (matmul LHS)
        ),
        compiler_params=_compiler_params(("parallel", "parallel")),
    )(qkv, tgt_mask, resid, wo.astype(BF16), bo.reshape(1, D),
      ln_g.reshape(1, D), ln_b.reshape(1, D))


# ----------------------------------------------------------------------------
# Fused dual-mask cross-attention: one score matmul per head, two masked
# softmaxes (user/agent) with additive biases, exp-reuse for the two "score"
# softmaxes (add_mask = mask | src_tgt_mask), single K=D out-proj per path,
# sigmoid gate (VPU reduce), blend, residual and gated tog_score.
# Grid = (batch, query tile).
# ----------------------------------------------------------------------------
def _ctx_attn_kernel(q_ref, kv_ref, mu_ref, ma_ref, stm_ref, resid_ref,
                     wo_ref, bo_ref, gwu_ref, gwa_ref,
                     ffn_in_ref, tog_ref, pa_scr, *, heads):
    tq = q_ref.shape[1]
    D = q_ref.shape[2]
    dh = D // heads

    q = q_ref[0]                                   # [tq, D] bf16 (scale folded into wq)
    kv = kv_ref[0]                                 # [S, 2D] bf16 (k | v)

    # additive mask biases, computed once (not per head, no compare+select)
    bias_u = mu_ref[0].astype(jnp.float32) * _NEG_INF
    bias_a = ma_ref[0].astype(jnp.float32) * _NEG_INF
    keep = 1.0 - stm_ref[0].astype(jnp.float32)    # 1 where src_tgt_mask not set

    ctx_u_parts, ctx_a_parts = [], []
    for h in range(heads):                         # static unroll over heads
        q_h = q[:, h * dh:(h + 1) * dh]
        k_h = kv[:, h * dh:(h + 1) * dh]
        v_h = kv[:, D + h * dh:D + (h + 1) * dh]

        s = jnp.dot(q_h, k_h.T, preferred_element_type=jnp.float32)   # [tq, S]

        su = s + bias_u
        eu = jnp.exp(su - jnp.max(su, axis=-1, keepdims=True))
        attn_u = eu * pl.reciprocal(jnp.sum(eu, axis=-1, keepdims=True), approx=True)

        sa = s + bias_a
        ea = jnp.exp(sa - jnp.max(sa, axis=-1, keepdims=True))
        attn_a = ea * pl.reciprocal(jnp.sum(ea, axis=-1, keepdims=True), approx=True)

        # exp reuse: softmax over add_mask == user exps with src_tgt-masked entries
        # zeroed and renormalized (the row-max constant cancels in the ratio).
        # Exact division here: tog_score is an external output.
        eu_ = eu * keep
        ea_ = ea * keep
        # TODO(synk): a fully-masked add_mask row yields 0 here (reference gives a
        #             uniform softmax); guarded with a denominator floor.
        tog_ref[0, h] = (eu_ / jnp.maximum(jnp.sum(eu_, axis=-1, keepdims=True),
                                           1e-30)).astype(tog_ref.dtype)
        pa_scr[h] = (ea_ / jnp.maximum(jnp.sum(ea_, axis=-1, keepdims=True),
                                       1e-30)).astype(pa_scr.dtype)

        ctx_u_parts.append(jnp.dot(attn_u.astype(BF16), v_h,
                                   preferred_element_type=jnp.float32).astype(BF16))
        ctx_a_parts.append(jnp.dot(attn_a.astype(BF16), v_h,
                                   preferred_element_type=jnp.float32).astype(BF16))

    # single K=D output projection per path (full MXU feed)
    bo = bo_ref[...].astype(jnp.float32)
    wo = wo_ref[...]
    mid_user = jnp.dot(jnp.concatenate(ctx_u_parts, axis=-1), wo,
                       preferred_element_type=jnp.float32) + bo
    mid_agent = jnp.dot(jnp.concatenate(ctx_a_parts, axis=-1), wo,
                        preferred_element_type=jnp.float32) + bo

    # gate = sigmoid(cat(mid_user, mid_agent) @ gate_w): VPU multiply + lane reduce
    gate_logit = (jnp.sum(mid_user * gwu_ref[...].astype(jnp.float32),
                          axis=-1, keepdims=True)
                  + jnp.sum(mid_agent * gwa_ref[...].astype(jnp.float32),
                            axis=-1, keepdims=True))                     # [tq, 1]
    gate = 1.0 / (1.0 + jnp.exp(-gate_logit))

    mid = mid_user * gate + mid_agent * (1.0 - gate)
    ffn_in_ref[0] = (mid + resid_ref[0].astype(jnp.float32)).astype(ffn_in_ref.dtype)

    for h in range(heads):                         # gated blend of the stored softmaxes
        tog_ref[0, h] = tog_ref[0, h] * gate + pa_scr[h] * (1.0 - gate)


def context_attention(q, kv, mask_user, mask_agent, src_tgt_mask, resid,
                      wo, bo, gw_u, gw_a, heads):
    B, T, D = q.shape
    S = kv.shape[1]
    tq = _pick_tile(T, 256, (32,))
    kern = functools.partial(_ctx_attn_kernel, heads=heads)
    mspec = pl.BlockSpec((1, tq, S), lambda b, qi: (b, qi, 0))
    return pl.pallas_call(
        kern,
        grid=(B, T // tq),
        in_specs=[
            pl.BlockSpec((1, tq, D), lambda b, qi: (b, qi, 0)),
            pl.BlockSpec((1, S, 2 * D), lambda b, qi: (b, 0, 0)),
            mspec, mspec, mspec,
            pl.BlockSpec((1, tq, D), lambda b, qi: (b, qi, 0)),
            pl.BlockSpec((D, D), lambda b, qi: (0, 0)),
            pl.BlockSpec((1, D), lambda b, qi: (0, 0)),
            pl.BlockSpec((1, D), lambda b, qi: (0, 0)),
            pl.BlockSpec((1, D), lambda b, qi: (0, 0)),
        ],
        out_specs=(
            pl.BlockSpec((1, tq, D), lambda b, qi: (b, qi, 0)),
            pl.BlockSpec((1, heads, tq, S), lambda b, qi: (b, 0, qi, 0)),
        ),
        out_shape=(
            jax.ShapeDtypeStruct((B, T, D), F32),
            jax.ShapeDtypeStruct((B, heads, T, S), F32),
        ),
        scratch_shapes=[pltpu.VMEM((heads, tq, S), jnp.float32)],
        compiler_params=_compiler_params(("parallel", "parallel")),
    )(q, kv, mask_user, mask_agent, src_tgt_mask, resid,
      wo.astype(BF16), bo.reshape(1, D),
      gw_u.reshape(1, D).astype(F32), gw_a.reshape(1, D).astype(F32))


# ----------------------------------------------------------------------------
# Decoder layer forward (eval mode: dropout == identity, previous_input=None)
# ----------------------------------------------------------------------------
def decoder_layer_forward(params, inputs, memory_bank, src_pad_mask,
                          tgt_pad_mask, role_mask, src_tgt_mask, heads):
    B, T, D = inputs.shape
    S = memory_bank.shape[1]
    dh = D // heads
    scale = 1.0 / math.sqrt(dh)

    # ---- LN1 fused with the self-attention QKV projection (q scale folded in) ----
    sp = params["self_attn"]
    w_qkv = jnp.concatenate([sp["wq"] * scale, sp["wk"], sp["wv"]], axis=1)   # [D, 3D]
    b_qkv = jnp.concatenate([sp["bq"] * scale, sp["bk"], sp["bv"]], axis=0)   # [3D]
    qkv_flat, input_norm_flat = ln_matmul(
        inputs.reshape(B * T, D), params["ln1_g"], params["ln1_b"],
        w_qkv, b_qkv, emit_norm=True, out_dtype=BF16, norm_dtype=F32)
    qkv = qkv_flat.reshape(B, T, 3 * D)
    all_input = input_norm_flat.reshape(B, T, D)       # == input_norm

    # ---- fused self-attention (causal mask in-kernel) + out-proj + resid + LN2 ----
    tgt_mask_i8 = (tgt_pad_mask > 0).astype(jnp.int8)
    query, query_norm = self_attention(
        qkv, tgt_mask_i8, inputs, sp["wo"], sp["bo"],
        params["ln2_g"], params["ln2_b"], heads)

    # ---- cross-attention masks: int8, deduplicated (add_mask rebuilt in-kernel) ----
    spm = src_pad_mask.astype(bool)
    role_ne1 = jnp.broadcast_to((role_mask != 1)[:, None, :], spm.shape)
    role_ne2 = jnp.broadcast_to((role_mask != 2)[:, None, :], spm.shape)
    mask_user = (spm | role_ne1).astype(jnp.int8)
    mask_agent = (spm | role_ne2).astype(jnp.int8)
    stm_i8 = src_tgt_mask.astype(bool).astype(jnp.int8)

    # ---- shared K/V projection and the (scale-folded) Q projection ----------
    cp = params["ctx_attn"]
    w_kv = jnp.concatenate([cp["wk"], cp["wv"]], axis=1)             # [D, 2D]
    b_kv = jnp.concatenate([cp["bk"], cp["bv"]], axis=0)
    kv = matmul(memory_bank.reshape(B * S, D), w_kv, b_kv,
                out_dtype=BF16).reshape(B, S, 2 * D)
    q_ctx = matmul(query_norm.reshape(B * T, D), cp["wq"] * scale,
                   cp["bq"] * scale, out_dtype=BF16).reshape(B, T, D)

    gate_w = params["gate_w"]                                        # [2D, 1], no bias
    gw_u = gate_w[:D, 0]
    gw_a = gate_w[D:, 0]

    # ---- fused dual-mask cross-attention + gate + blend + residual ----------
    ffn_in, tog_score = context_attention(
        q_ctx, kv, mask_user, mask_agent, stm_i8,
        query, cp["wo"], cp["bo"], gw_u, gw_a, heads)

    # ---- position-wise FFN: LN fused into w1 (bf16 hidden), resid fused into w2 ----
    fp = params["ffn"]
    ffn_in_flat = ffn_in.reshape(B * T, D)
    h1 = ln_matmul(ffn_in_flat, fp["ln_g"], fp["ln_b"],
                   fp["w1"], fp["b1"], activation="relu", out_dtype=BF16)
    output = matmul(h1, fp["w2"], fp["b2"],
                    residual=ffn_in_flat).reshape(B, T, D)

    return output, all_input, tog_score


# ----------------------------------------------------------------------------
# Deterministic parameter initialization
# ----------------------------------------------------------------------------
def init_params(key, d_model, d_ff):
    def w(k, shape):
        return 0.02 * jax.random.normal(k, shape, jnp.float32)

    keys = jax.random.split(key, 12)

    def attn_params(k):
        k1, k2, k3, k4 = jax.random.split(k, 4)
        z = jnp.zeros((d_model,), jnp.float32)
        return dict(
            wq=w(k1, (d_model, d_model)), bq=z,
            wk=w(k2, (d_model, d_model)), bk=z,
            wv=w(k3, (d_model, d_model)), bv=z,
            wo=w(k4, (d_model, d_model)), bo=z,
        )

    return dict(
        self_attn=attn_params(keys[0]),
        ctx_attn=attn_params(keys[1]),
        ffn=dict(
            ln_g=jnp.ones((d_model,), jnp.float32),
            ln_b=jnp.zeros((d_model,), jnp.float32),
            w1=w(keys[2], (d_model, d_ff)), b1=jnp.zeros((d_ff,), jnp.float32),
            w2=w(keys[3], (d_ff, d_model)), b2=jnp.zeros((d_model,), jnp.float32),
        ),
        ln1_g=jnp.ones((d_model,), jnp.float32),
        ln1_b=jnp.zeros((d_model,), jnp.float32),
        ln2_g=jnp.ones((d_model,), jnp.float32),
        ln2_b=jnp.zeros((d_model,), jnp.float32),
        gate_w=w(keys[4], (2 * d_model, 1)),
    )


# ----------------------------------------------------------------------------
if __name__ == "__main__":
    B, T, S, D, H, DFF = 2, 4, 8, 32, 4, 64

    root = jax.random.PRNGKey(0)
    k_in, k_mem, k_p = jax.random.split(root, 3)

    inputs = jax.random.normal(k_in, (B, T, D), jnp.float32)
    memory_bank = jax.random.normal(k_mem, (B, S, D), jnp.float32)

    # masks: 1 = masked / padded
    src_pad_mask = jnp.zeros((B, T, S), jnp.int32).at[:, :, S - 1].set(1)
    tgt_pad_mask = jnp.zeros((B, T, T), jnp.int32)
    role_mask = jnp.tile(jnp.array([1, 1, 2, 2, 1, 2, 1, 2], jnp.int32), (B, 1))
    src_tgt_mask = jnp.zeros((B, T, S), jnp.int32).at[:, :, 0].set(1)

    params = init_params(k_p, D, DFF)

    fwd = jax.jit(functools.partial(decoder_layer_forward, heads=H))
    output, all_input, tog_score = fwd(params, inputs, memory_bank, src_pad_mask,
                                       tgt_pad_mask, role_mask, src_tgt_mask)
    jax.block_until_ready((output, all_input, tog_score))

    assert output.shape == (B, T, D)
    assert all_input.shape == (B, T, D)
    assert tog_score.shape == (B, H, T, S)
    assert bool(jnp.all(jnp.isfinite(output)))
    assert bool(jnp.all(jnp.isfinite(tog_score)))
    print("KERNEL_OK")
</pallas_src>

<mosaic_0001>
module attributes {stable_mosaic.version = 11 : i64} {
  func.func @_matmul_kernel(%arg0: i32, %arg1: i32, %arg2: i32, %arg3: memref<8x32xbf16, #tpu.memory_space<vmem>>, %arg4: memref<32x32xbf16, #tpu.memory_space<vmem>>, %arg5: memref<1x32xf32, #tpu.memory_space<vmem>>, %arg6: memref<8x32xbf16, #tpu.memory_space<vmem>>, %arg7: memref<8x32xf32, #tpu.memory_space<vmem>>) attributes {dimension_semantics = [#tpu.dimension_semantics<parallel>, #tpu.dimension_semantics<parallel>, #tpu.dimension_semantics<arbitrary>], iteration_bounds = array<i64: 1, 1, 1>, scalar_prefetch = 0 : i64, scratch_operands = 1 : i64, tpu.core_type = #tpu.core_type<tc>, window_params = [{transform_indices = @transform_0, window_bounds = array<i64: 8, 32>}, {transform_indices = @transform_1, window_bounds = array<i64: 32, 32>}, {transform_indices = @transform_2, window_bounds = array<i64: 1, 32>}, {transform_indices = @transform_3, window_bounds = array<i64: 8, 32>}]} {
    %c0_i32 = arith.constant 0 : i32
    %0 = arith.cmpi eq, %arg2, %c0_i32 : i32
    %1 = arith.extui %0 : i1 to i32
    %c0_i32_0 = arith.constant 0 : i32
    %2 = arith.cmpi ne, %1, %c0_i32_0 : i32
    scf.if %2 {
      %cst_10 = arith.constant 0.000000e+00 : f32
      %12 = vector.broadcast %cst_10 : f32 to vector<8x32xf32>
      %c0_11 = arith.constant 0 : index
      %c0_12 = arith.constant 0 : index
      %13 = vector.load %arg7[%c0_11, %c0_12] : memref<8x32xf32, #tpu.memory_space<vmem>>, vector<8x32xf32>
      tpu.vector_store %arg7[%c0_11, %c0_12], %12 {strides = array<i32>} : memref<8x32xf32, #tpu.memory_space<vmem>>, vector<8x32xf32>,
    } else {
    }
    %c0 = arith.constant 0 : index
    %c0_1 = arith.constant 0 : index
    %3 = vector.load %arg7[%c0, %c0_1] : memref<8x32xf32, #tpu.memory_space<vmem>>, vector<8x32xf32>
    %c0_2 = arith.constant 0 : index
    %c0_3 = arith.constant 0 : index
    %4 = vector.load %arg3[%c0_2, %c0_3] : memref<8x32xbf16, #tpu.memory_space<vmem>>, vector<8x32xbf16>
    %c0_4 = arith.constant 0 : index
    %c0_5 = arith.constant 0 : index
    %5 = vector.load %arg4[%c0_4, %c0_5] : memref<32x32xbf16, #tpu.memory_space<vmem>>, vector<32x32xbf16>
    %cst = arith.constant dense<0.000000e+00> : vector<8x32xf32>
    %6 = tpu.matmul %4, %5, %cst {dimension_numbers = #tpu.dot_dimension_numbers<[1], [0], [0], [1], [0, 0, 1, 1], [], []>} : vector<8x32xbf16>, vector<32x32xbf16>, vector<8x32xf32> -> vector<8x32xf32>
    %7 = arith.addf %3, %6 : vector<8x32xf32>
    %c0_6 = arith.constant 0 : index
    %c0_7 = arith.constant 0 : index
    %8 = vector.load %arg7[%c0_6, %c0_7] : memref<8x32xf32, #tpu.memory_space<vmem>>, vector<8x32xf32>
    tpu.vector_store %arg7[%c0_6, %c0_7], %7 {strides = array<i32>} : memref<8x32xf32, #tpu.memory_space<vmem>>, vector<8x32xf32>,
    %c0_i32_8 = arith.constant 0 : i32
    %9 = arith.cmpi eq, %arg2, %c0_i32_8 : i32
    %10 = arith.extui %9 : i1 to i32
    %c0_i32_9 = arith.constant 0 : i32
    %11 = arith.cmpi ne, %10, %c0_i32_9 : i32
    scf.if %11 {
      %c0_10 = arith.constant 0 : index
      %c0_11 = arith.constant 0 : index
      %12 = vector.load %arg7[%c0_10, %c0_11] : memref<8x32xf32, #tpu.memory_space<vmem>>, vector<8x32xf32>
      %c0_12 = arith.constant 0 : index
      %c0_13 = arith.constant 0 : index
      %13 = vector.load %arg5[%c0_12, %c0_13] : memref<1x32xf32, #tpu.memory_space<vmem>>, vector<1x32xf32>
      %14 = vector.broadcast %13 : vector<1x32xf32> to vector<8x32xf32>
      %15 = arith.addf %12, %14 : vector<8x32xf32>
      %16 = arith.truncf %15 : vector<8x32xf32> to vector<8x32xbf16>
      %c0_14 = arith.constant 0 : index
      %c0_15 = arith.constant 0 : index
      %17 = vector.load %arg6[%c0_14, %c0_15] : memref<8x32xbf16, #tpu.memory_space<vmem>>, vector<8x32xbf16>
      tpu.vector_store %arg6[%c0_14, %c0_15], %16 {strides = array<i32>} : memref<8x32xbf16, #tpu.memory_space<vmem>>, vector<8x32xbf16>,
    } else {
    }
    return
  }
  func.func @transform_0(%arg0: i32, %arg1: i32, %arg2: i32) -> (i32, i32) {
    %c0_i32 = arith.constant 0 : i32
    return %arg0, %arg2 : i32, i32
  }
  func.func @transform_1(%arg0: i32, %arg1: i32, %arg2: i32) -> (i32, i32) {
    %c0_i32 = arith.constant 0 : i32
    return %arg2, %arg1 : i32, i32
  }
  func.func @transform_2(%arg0: i32, %arg1: i32, %arg2: i32) -> (i32, i32) {
    %c0_i32 = arith.constant 0 : i32
    %c0_i32_0 = arith.constant 0 : i32
    return %c0_i32, %arg1 : i32, i32
  }
  func.func @transform_3(%arg0: i32, %arg1: i32, %arg2: i32) -> (i32, i32) {
    %c0_i32 = arith.constant 0 : i32
    return %arg0, %arg1 : i32, i32
  }
}

module attributes {stable_mosaic.version = 11 : i64} {
  func.func @_ln_matmul_kernel(%arg0: i32, %arg1: i32, %arg2: memref<8x32xf32, #tpu.memory_space<vmem>>, %arg3: memref<1x32xf32, #tpu.memory_space<vmem>>, %arg4: memref<1x32xf32, #tpu.memory_space<vmem>>, %arg5: memref<32x96xbf16, #tpu.memory_space<vmem>>, %arg6: memref<1x96xf32, #tpu.memory_space<vmem>>, %arg7: memref<8x96xbf16, #tpu.memory_space<vmem>>, %arg8: memref<8x32xf32, #tpu.memory_space<vmem>>, %arg9: memref<8x32xbf16, #tpu.memory_space<vmem>>) attributes {dimension_semantics = [#tpu.dimension_semantics<parallel>, #tpu.dimension_semantics<arbitrary>], iteration_bounds = array<i64: 1, 1>, scalar_prefetch = 0 : i64, scratch_operands = 1 : i64, tpu.core_type = #tpu.core_type<tc>, window_params = [{transform_indices = @transform_0, window_bounds = array<i64: 8, 32>}, {pipeline_mode = #tpu.pipeline_mode<synchronous>, transform_indices = @transform_1, window_bounds = array<i64: 1, 32>}, {pipeline_mode = #tpu.pipeline_mode<synchronous>, transform_indices = @transform_2, window_bounds = array<i64: 1, 32>}, {transform_indices = @transform_3, window_bounds = array<i64: 32, 96>}, {transform_indices = @transform_4, window_bounds = array<i64: 1, 96>}, {transform_indices = @transform_5, window_bounds = array<i64: 8, 96>}, {transform_indices = @transform_6, window_bounds = array<i64: 8, 32>}]} {
    %c0_i32 = arith.constant 0 : i32
    %0 = arith.cmpi eq, %arg1, %c0_i32 : i32
    %1 = arith.extui %0 : i1 to i32
    %c0_i32_0 = arith.constant 0 : i32
    %2 = arith.cmpi ne, %1, %c0_i32_0 : i32
    scf.if %2 {
      %c0_8 = arith.constant 0 : index
      %c0_9 = arith.constant 0 : index
      %11 = vector.load %arg2[%c0_8, %c0_9] : memref<8x32xf32, #tpu.memory_space<vmem>>, vector<8x32xf32>
      %cst_10 = arith.constant dense<0.000000e+00> : vector<8xf32>
      %12 = vector.multi_reduction <add>, %11, %cst_10 [1] : vector<8x32xf32> to vector<8xf32>
      %13 = vector.shape_cast %12 : vector<8xf32> to vector<8x1xf32>
      %cst_11 = arith.constant 3.200000e+01 : f32
      %14 = vector.broadcast %cst_11 : f32 to vector<8x1xf32>
      %15 = arith.divf %13, %14 : vector<8x1xf32>
      %16 = vector.broadcast %15 : vector<8x1xf32> to vector<8x32xf32>
      %17 = arith.subf %11, %16 : vector<8x32xf32>
      %18 = arith.mulf %17, %17 : vector<8x32xf32>
      %cst_12 = arith.constant dense<0.000000e+00> : vector<8xf32>
      %19 = vector.multi_reduction <add>, %18, %cst_12 [1] : vector<8x32xf32> to vector<8xf32>
      %20 = vector.shape_cast %19 : vector<8xf32> to vector<8x1xf32>
      %cst_13 = arith.constant 3.200000e+01 : f32
      %21 = vector.broadcast %cst_13 : f32 to vector<8x1xf32>
      %22 = arith.divf %20, %21 : vector<8x1xf32>
      %23 = vector.broadcast %15 : vector<8x1xf32> to vector<8x32xf32>
      %24 = arith.subf %11, %23 : vector<8x32xf32>
      %cst_14 = arith.constant 9.99999997E-7 : f32
      %25 = vector.broadcast %cst_14 : f32 to vector<8x1xf32>
      %26 = arith.addf %22, %25 : vector<8x1xf32>
      %27 = math.rsqrt %26 : vector<8x1xf32>
      %28 = vector.broadcast %27 : vector<8x1xf32> to vector<8x32xf32>
      %29 = arith.mulf %24, %28 : vector<8x32xf32>
      %c0_15 = arith.constant 0 : index
      %c0_16 = arith.constant 0 : index
      %30 = vector.load %arg3[%c0_15, %c0_16] : memref<1x32xf32, #tpu.memory_space<vmem>>, vector<1x32xf32>
      %31 = vector.broadcast %30 : vector<1x32xf32> to vector<8x32xf32>
      %32 = arith.mulf %29, %31 : vector<8x32xf32>
      %c0_17 = arith.constant 0 : index
      %c0_18 = arith.constant 0 : index
      %33 = vector.load %arg4[%c0_17, %c0_18] : memref<1x32xf32, #tpu.memory_space<vmem>>, vector<1x32xf32>
      %34 = vector.broadcast %33 : vector<1x32xf32> to vector<8x32xf32>
      %35 = arith.addf %32, %34 : vector<8x32xf32>
      %36 = arith.truncf %35 : vector<8x32xf32> to vector<8x32xbf16>
      %c0_19 = arith.constant 0 : index
      %c0_20 = arith.constant 0 : index
      %37 = vector.load %arg9[%c0_19, %c0_20] : memref<8x32xbf16, #tpu.memory_space<vmem>>, vector<8x32xbf16>
      tpu.vector_store %arg9[%c0_19, %c0_20], %36 {strides = array<i32>} : memref<8x32xbf16, #tpu.memory_space<vmem>>, vector<8x32xbf16>,
      %c0_21 = arith.constant 0 : index
      %c0_22 = arith.constant 0 : index
      %38 = vector.load %arg8[%c0_21, %c0_22] : memref<8x32xf32, #tpu.memory_space<vmem>>, vector<8x32xf32>
      tpu.vector_store %arg8[%c0_21, %c0_22], %35 {strides = array<i32>} : memref<8x32xf32, #tpu.memory_space<vmem>>, vector<8x32xf32>,
    } else {
    }
    %c0 = arith.constant 0 : index
    %c0_1 = arith.constant 0 : index
    %3 = vector.load %arg9[%c0, %c0_1] : memref<8x32xbf16, #tpu.memory_space<vmem>>, vector<8x32xbf16>
    %c0_2 = arith.constant 0 : index
    %c0_3 = arith.constant 0 : index
    %4 = vector.load %arg5[%c0_2, %c0_3] : memref<32x96xbf16, #tpu.memory_space<vmem>>, vector<32x96xbf16>
    %cst = arith.constant dense<0.000000e+00> : vector<8x96xf32>
    %5 = tpu.matmul %3, %4, %cst {dimension_numbers = #tpu.dot_dimension_numbers<[1], [0], [0], [1], [0, 0, 1, 1], [], []>} : vector<8x32xbf16>, vector<32x96xbf16>, vector<8x96xf32> -> vector<8x96xf32>
    %c0_4 = arith.constant 0 : index
    %c0_5 = arith.constant 0 : index
    %6 = vector.load %arg6[%c0_4, %c0_5] : memref<1x96xf32, #tpu.memory_space<vmem>>, vector<1x96xf32>
    %7 = vector.broadcast %6 : vector<1x96xf32> to vector<8x96xf32>
    %8 = arith.addf %5, %7 : vector<8x96xf32>
    %9 = arith.truncf %8 : vector<8x96xf32> to vector<8x96xbf16>
    %c0_6 = arith.constant 0 : index
    %c0_7 = arith.constant 0 : index
    %10 = vector.load %arg7[%c0_6, %c0_7] : memref<8x96xbf16, #tpu.memory_space<vmem>>, vector<8x96xbf16>
    tpu.vector_store %arg7[%c0_6, %c0_7], %9 {strides = array<i32>} : memref<8x96xbf16, #tpu.memory_space<vmem>>, vector<8x96xbf16>,
    return
  }
  func.func @transform_0(%arg0: i32, %arg1: i32) -> (i32, i32) {
    %c0_i32 = arith.constant 0 : i32
    %c0_i32_0 = arith.constant 0 : i32
    return %arg0, %c0_i32 : i32, i32
  }
  func.func @transform_1(%arg0: i32, %arg1: i32) -> (i32, i32) {
    %c0_i32 = arith.constant 0 : i32
    %c0_i32_0 = arith.constant 0 : i32
    %c0_i32_1 = arith.constant 0 : i32
    return %c0_i32, %c0_i32_0 : i32, i32
  }
  func.func @transform_2(%arg0: i32, %arg1: i32) -> (i32, i32) {
    %c0_i32 = arith.constant 0 : i32
    %c0_i32_0 = arith.constant 0 : i32
    %c0_i32_1 = arith.constant 0 : i32
    return %c0_i32, %c0_i32_0 : i32, i32
  }
  func.func @transform_3(%arg0: i32, %arg1: i32) -> (i32, i32) {
    %c0_i32 = arith.constant 0 : i32
    %c0_i32_0 = arith.constant 0 : i32
    return %c0_i32, %arg1 : i32, i32
  }
  func.func @transform_4(%arg0: i32, %arg1: i32) -> (i32, i32) {
    %c0_i32 = arith.constant 0 : i32
    %c0_i32_0 = arith.constant 0 : i32
    return %c0_i32, %arg1 : i32, i32
  }
  func.func @transform_5(%arg0: i32, %arg1: i32) -> (i32, i32) {
    %c0_i32 = arith.constant 0 : i32
    return %arg0, %arg1 : i32, i32
  }
  func.func @transform_6(%arg0: i32, %arg1: i32) -> (i32, i32) {
    %c0_i32 = arith.constant 0 : i32
    %c0_i32_0 = arith.constant 0 : i32
    return %arg0, %c0_i32 : i32, i32
  }
}

module attributes {stable_mosaic.version = 11 : i64} {
  func.func @_self_attn_kernel(%arg0: i32, %arg1: i32, %arg2: memref<1x4x96xbf16, #tpu.memory_space<vmem>>, %arg3: memref<1x4x4xi8, #tpu.memory_space<vmem>>, %arg4: memref<1x4x32xf32, #tpu.memory_space<vmem>>, %arg5: memref<32x32xbf16, #tpu.memory_space<vmem>>, %arg6: memref<1x32xf32, #tpu.memory_space<vmem>>, %arg7: memref<1x32xf32, #tpu.memory_space<vmem>>, %arg8: memref<1x32xf32, #tpu.memory_space<vmem>>, %arg9: memref<1x4x32xf32, #tpu.memory_space<vmem>>, %arg10: memref<1x4x32xbf16, #tpu.memory_space<vmem>>) attributes {dimension_semantics = [#tpu.dimension_semantics<parallel>, #tpu.dimension_semantics<parallel>], iteration_bounds = array<i64: 2, 1>, scalar_prefetch = 0 : i64, scratch_operands = 0 : i64, tpu.core_type = #tpu.core_type<tc>, window_params = [{transform_indices = @transform_0, window_bounds = array<i64: 1, 4, 96>}, {transform_indices = @transform_1, window_bounds = array<i64: 1, 4, 4>}, {transform_indices = @transform_2, window_bounds = array<i64: 1, 4, 32>}, {pipeline_mode = #tpu.pipeline_mode<synchronous>, transform_indices = @transform_3, window_bounds = array<i64: 32, 32>}, {pipeline_mode = #tpu.pipeline_mode<synchronous>, transform_indices = @transform_4, window_bounds = array<i64: 1, 32>}, {pipeline_mode = #tpu.pipeline_mode<synchronous>, transform_indices = @transform_5, window_bounds = array<i64: 1, 32>}, {pipeline_mode = #tpu.pipeline_mode<synchronous>, transform_indices = @transform_6, window_bounds = array<i64: 1, 32>}, {transform_indices = @transform_7, window_bounds = array<i64: 1, 4, 32>}, {transform_indices = @transform_8, window_bounds = array<i64: 1, 4, 32>}]} {
    %c4_i32 = arith.constant 4 : i32
    %0 = arith.muli %arg1, %c4_i32 : i32
    %1 = tpu.assume_multiple %0, 4 : i32
    %c0 = arith.constant 0 : index
    %2 = arith.index_cast %1 : i32 to index
    %c0_0 = arith.constant 0 : index
    %3 = vector.load %arg2[%c0, %2, %c0_0] : memref<1x4x96xbf16, #tpu.memory_space<vmem>>, vector<1x4x96xbf16>
    %4 = vector.shape_cast %3 : vector<1x4x96xbf16> to vector<4x96xbf16>
    %c0_1 = arith.constant 0 : index
    %c0_2 = arith.constant 0 : index
    %c32 = arith.constant 32 : index
    %5 = vector.load %arg2[%c0_1, %c0_2, %c32] : memref<1x4x96xbf16, #tpu.memory_space<vmem>>, vector<1x4x64xbf16>
    %6 = vector.shape_cast %5 : vector<1x4x64xbf16> to vector<4x64xbf16>
    %c0_3 = arith.constant 0 : index
    %c0_4 = arith.constant 0 : index
    %c0_5 = arith.constant 0 : index
    %7 = vector.load %arg3[%c0_3, %c0_4, %c0_5] : memref<1x4x4xi8, #tpu.memory_space<vmem>>, vector<1x4x4xi8>
    %8 = vector.shape_cast %7 : vector<1x4x4xi8> to vector<4x4xi8>
    %9 = arith.sitofp %8 : vector<4x4xi8> to vector<4x4xf32>
    %10 = tpu.iota {dimensions = array<i32: 0>} : vector<4x4xi32>
    %11 = vector.broadcast %1 : i32 to vector<4x4xi32>
    %12 = arith.addi %11, %10 : vector<4x4xi32>
    %13 = tpu.iota {dimensions = array<i32: 1>} : vector<4x4xi32>
    %14 = arith.cmpi sgt, %13, %12 : vector<4x4xi32>
    %15 = arith.extui %14 : vector<4x4xi1> to vector<4x4xi32>
    %16 = arith.sitofp %15 : vector<4x4xi32> to vector<4x4xf32>
    %17 = arith.maximumf %9, %16 : vector<4x4xf32>
    %cst = arith.constant -9.99999984E+17 : f32
    %18 = vector.broadcast %cst : f32 to vector<4x4xf32>
    %19 = arith.mulf %17, %18 : vector<4x4xf32>
    %20 = vector.extract_strided_slice %4 {offsets = [0, 0], sizes = [4, 8], strides = [1, 1]} : vector<4x96xbf16> to vector<4x8xbf16>
    %21 = vector.extract_strided_slice %6 {offsets = [0, 0], sizes = [4, 8], strides = [1, 1]} : vector<4x64xbf16> to vector<4x8xbf16>
    %22 = vector.extract_strided_slice %6 {offsets = [0, 32], sizes = [4, 8], strides = [1, 1]} : vector<4x64xbf16> to vector<4x8xbf16>
    %23 = tpu.transpose %21, [1, 0] : vector<4x8xbf16> -> vector<8x4xbf16>
    %cst_6 = arith.constant dense<0.000000e+00> : vector<4x4xf32>
    %24 = tpu.matmul %20, %23, %cst_6 {dimension_numbers = #tpu.dot_dimension_numbers<[1], [0], [0], [1], [0, 0, 1, 1], [], []>} : vector<4x8xbf16>, vector<8x4xbf16>, vector<4x4xf32> -> vector<4x4xf32>
    %25 = arith.addf %24, %19 : vector<4x4xf32>
    %cst_7 = arith.constant dense<0xFF800000> : vector<4xf32>
    %26 = vector.multi_reduction <maximumf>, %25, %cst_7 [1] : vector<4x4xf32> to vector<4xf32>
    %27 = vector.shape_cast %26 : vector<4xf32> to vector<4x1xf32>
    %28 = vector.broadcast %27 : vector<4x1xf32> to vector<4x4xf32>
    %29 = arith.subf %25, %28 : vector<4x4xf32>
    %30 = math.exp %29 : vector<4x4xf32>
    %cst_8 = arith.constant dense<0.000000e+00> : vector<4xf32>
    %31 = vector.multi_reduction <add>, %30, %cst_8 [1] : vector<4x4xf32> to vector<4xf32>
    %32 = vector.shape_cast %31 : vector<4xf32> to vector<4x1xf32>
    %33 = tpu.reciprocal %32 {approx = true} : vector<4x1xf32> -> vector<4x1xf32>
    %34 = vector.broadcast %33 : vector<4x1xf32> to vector<4x4xf32>
    %35 = arith.mulf %30, %34 : vector<4x4xf32>
    %36 = arith.truncf %35 : vector<4x4xf32> to vector<4x4xbf16>
    %cst_9 = arith.constant dense<0.000000e+00> : vector<4x8xf32>
    %37 = tpu.matmul %36, %22, %cst_9 {dimension_numbers = #tpu.dot_dimension_numbers<[1], [0], [0], [1], [0, 0, 1, 1], [], []>} : vector<4x4xbf16>, vector<4x8xbf16>, vector<4x8xf32> -> vector<4x8xf32>
    %38 = arith.truncf %37 : vector<4x8xf32> to vector<4x8xbf16>
    %39 = vector.extract_strided_slice %4 {offsets = [0, 8], sizes = [4, 8], strides = [1, 1]} : vector<4x96xbf16> to vector<4x8xbf16>
    %40 = vector.extract_strided_slice %6 {offsets = [0, 8], sizes = [4, 8], strides = [1, 1]} : vector<4x64xbf16> to vector<4x8xbf16>
    %41 = vector.extract_strided_slice %6 {offsets = [0, 40], sizes = [4, 8], strides = [1, 1]} : vector<4x64xbf16> to vector<4x8xbf16>
    %42 = tpu.transpose %40, [1, 0] : vector<4x8xbf16> -> vector<8x4xbf16>
    %cst_10 = arith.constant dense<0.000000e+00> : vector<4x4xf32>
    %43 = tpu.matmul %39, %42, %cst_10 {dimension_numbers = #tpu.dot_dimension_numbers<[1], [0], [0], [1], [0, 0, 1, 1], [], []>} : vector<4x8xbf16>, vector<8x4xbf16>, vector<4x4xf32> -> vector<4x4xf32>
    %44 = arith.addf %43, %19 : vector<4x4xf32>
    %cst_11 = arith.constant dense<0xFF800000> : vector<4xf32>
    %45 = vector.multi_reduction <maximumf>, %44, %cst_11 [1] : vector<4x4xf32> to vector<4xf32>
    %46 = vector.shape_cast %45 : vector<4xf32> to vector<4x1xf32>
    %47 = vector.broadcast %46 : vector<4x1xf32> to vector<4x4xf32>
    %48 = arith.subf %44, %47 : vector<4x4xf32>
    %49 = math.exp %48 : vector<4x4xf32>
    %cst_12 = arith.constant dense<0.000000e+00> : vector<4xf32>
    %50 = vector.multi_reduction <add>, %49, %cst_12 [1] : vector<4x4xf32> to vector<4xf32>
    %51 = vector.shape_cast %50 : vector<4xf32> to vector<4x1xf32>
    %52 = tpu.reciprocal %51 {approx = true} : vector<4x1xf32> -> vector<4x1xf32>
    %53 = vector.broadcast %52 : vector<4x1xf32> to vector<4x4xf32>
    %54 = arith.mulf %49, %53 : vector<4x4xf32>
    %55 = arith.truncf %54 : vector<4x4xf32> to vector<4x4xbf16>
    %cst_13 = arith.constant dense<0.000000e+00> : vector<4x8xf32>
    %56 = tpu.matmul %55, %41, %cst_13 {dimension_numbers = #tpu.dot_dimension_numbers<[1], [0], [0], [1], [0, 0, 1, 1], [], []>} : vector<4x4xbf16>, vector<4x8xbf16>, vector<4x8xf32> -> vector<4x8xf32>
    %57 = arith.truncf %56 : vector<4x8xf32> to vector<4x8xbf16>
    %58 = vector.extract_strided_slice %4 {offsets = [0, 16], sizes = [4, 8], strides = [1, 1]} : vector<4x96xbf16> to vector<4x8xbf16>
    %59 = vector.extract_strided_slice %6 {offsets = [0, 16], sizes = [4, 8], strides = [1, 1]} : vector<4x64xbf16> to vector<4x8xbf16>
    %60 = vector.extract_strided_slice %6 {offsets = [0, 48], sizes = [4, 8], strides = [1, 1]} : vector<4x64xbf16> to vector<4x8xbf16>
    %61 = tpu.transpose %59, [1, 0] : vector<4x8xbf16> -> vector<8x4xbf16>
    %cst_14 = arith.constant dense<0.000000e+00> : vector<4x4xf32>
    %62 = tpu.matmul %58, %61, %cst_14 {dimension_numbers = #tpu.dot_dimension_numbers<[1], [0], [0], [1], [0, 0, 1, 1], [], []>} : vector<4x8xbf16>, vector<8x4xbf16>, vector<4x4xf32> -> vector<4x4xf32>
    %63 = arith.addf %62, %19 : vector<4x4xf32>
    %cst_15 = arith.constant dense<0xFF800000> : vector<4xf32>
    %64 = vector.multi_reduction <maximumf>, %63, %cst_15 [1] : vector<4x4xf32> to vector<4xf32>
    %65 = vector.shape_cast %64 : vector<4xf32> to vector<4x1xf32>
    %66 = vector.broadcast %65 : vector<4x1xf32> to vector<4x4xf32>
    %67 = arith.subf %63, %66 : vector<4x4xf32>
    %68 = math.exp %67 : vector<4x4xf32>
    %cst_16 = arith.constant dense<0.000000e+00> : vector<4xf32>
    %69 = vector.multi_reduction <add>, %68, %cst_16 [1] : vector<4x4xf32> to vector<4xf32>
    %70 = vector.shape_cast %69 : vector<4xf32> to vector<4x1xf32>
    %71 = tpu.reciprocal %70 {approx = true} : vector<4x1xf32> -> vector<4x1xf32>
    %72 = vector.broadcast %71 : vector<4x1xf32> to vector<4x4xf32>
    %73 = arith.mulf %68, %72 : vector<4x4xf32>
    %74 = arith.truncf %73 : vector<4x4xf32> to vector<4x4xbf16>
    %cst_17 = arith.constant dense<0.000000e+00> : vector<4x8xf32>
    %75 = tpu.matmul %74, %60, %cst_17 {dimension_numbers = #tpu.dot_dimension_numbers<[1], [0], [0], [1], [0, 0, 1, 1], [], []>} : vector<4x4xbf16>, vector<4x8xbf16>, vector<4x8xf32> -> vector<4x8xf32>
    %76 = arith.truncf %75 : vector<4x8xf32> to vector<4x8xbf16>
    %77 = vector.extract_strided_slice %4 {offsets = [0, 24], sizes = [4, 8], strides = [1, 1]} : vector<4x96xbf16> to vector<4x8xbf16>
    %78 = vector.extract_strided_slice %6 {offsets = [0, 24], sizes = [4, 8], strides = [1, 1]} : vector<4x64xbf16> to vector<4x8xbf16>
    %79 = vector.extract_strided_slice %6 {offsets = [0, 56], sizes = [4, 8], strides = [1, 1]} : vector<4x64xbf16> to vector<4x8xbf16>
    %80 = tpu.transpose %78, [1, 0] : vector<4x8xbf16> -> vector<8x4xbf16>
    %cst_18 = arith.constant dense<0.000000e+00> : vector<4x4xf32>
    %81 = tpu.matmul %77, %80, %cst_18 {dimension_numbers = #tpu.dot_dimension_numbers<[1], [0], [0], [1], [0, 0, 1, 1], [], []>} : vector<4x8xbf16>, vector<8x4xbf16>, vector<4x4xf32> -> vector<4x4xf32>
    %82 = arith.addf %81, %19 : vector<4x4xf32>
    %cst_19 = arith.constant dense<0xFF800000> : vector<4xf32>
    %83 = vector.multi_reduction <maximumf>, %82, %cst_19 [1] : vector<4x4xf32> to vector<4xf32>
    %84 = vector.shape_cast %83 : vector<4xf32> to vector<4x1xf32>
    %85 = vector.broadcast %84 : vector<4x1xf32> to vector<4x4xf32>
    %86 = arith.subf %82, %85 : vector<4x4xf32>
    %87 = math.exp %86 : vector<4x4xf32>
    %cst_20 = arith.constant dense<0.000000e+00> : vector<4xf32>
    %88 = vector.multi_reduction <add>, %87, %cst_20 [1] : vector<4x4xf32> to vector<4xf32>
    %89 = vector.shape_cast %88 : vector<4xf32> to vector<4x1xf32>
    %90 = tpu.reciprocal %89 {approx = true} : vector<4x1xf32> -> vector<4x1xf32>
    %91 = vector.broadcast %90 : vector<4x1xf32> to vector<4x4xf32>
    %92 = arith.mulf %87, %91 : vector<4x4xf32>
    %93 = arith.truncf %92 : vector<4x4xf32> to vector<4x4xbf16>
    %cst_21 = arith.constant dense<0.000000e+00> : vector<4x8xf32>
    %94 = tpu.matmul %93, %79, %cst_21 {dimension_numbers = #tpu.dot_dimension_numbers<[1], [0], [0], [1], [0, 0, 1, 1], [], []>} : vector<4x4xbf16>, vector<4x8xbf16>, vector<4x8xf32> -> vector<4x8xf32>
    %95 = arith.truncf %94 : vector<4x8xf32> to vector<4x8xbf16>
    %96 = tpu.concatenate %38, %57, %76, %95 in 1 : vector<4x8xbf16>, vector<4x8xbf16>, vector<4x8xbf16>, vector<4x8xbf16> -> vector<4x32xbf16>
    %c0_22 = arith.constant 0 : index
    %c0_23 = arith.constant 0 : index
    %97 = vector.load %arg5[%c0_22, %c0_23] : memref<32x32xbf16, #tpu.memory_space<vmem>>, vector<32x32xbf16>
    %cst_24 = arith.constant dense<0.000000e+00> : vector<4x32xf32>
    %98 = tpu.matmul %96, %97, %cst_24 {dimension_numbers = #tpu.dot_dimension_numbers<[1], [0], [0], [1], [0, 0, 1, 1], [], []>} : vector<4x32xbf16>, vector<32x32xbf16>, vector<4x32xf32> -> vector<4x32xf32>
    %c0_25 = arith.constant 0 : index
    %c0_26 = arith.constant 0 : index
    %99 = vector.load %arg6[%c0_25, %c0_26] : memref<1x32xf32, #tpu.memory_space<vmem>>, vector<1x32xf32>
    %100 = vector.broadcast %99 : vector<1x32xf32> to vector<4x32xf32>
    %101 = arith.addf %98, %100 : vector<4x32xf32>
    %c0_27 = arith.constant 0 : index
    %c0_28 = arith.constant 0 : index
    %c0_29 = arith.constant 0 : index
    %102 = vector.load %arg4[%c0_27, %c0_28, %c0_29] : memref<1x4x32xf32, #tpu.memory_space<vmem>>, vector<1x4x32xf32>
    %103 = vector.shape_cast %102 : vector<1x4x32xf32> to vector<4x32xf32>
    %104 = arith.addf %101, %103 : vector<4x32xf32>
    %c0_30 = arith.constant 0 : index
    %c0_31 = arith.constant 0 : index
    %c0_32 = arith.constant 0 : index
    %105 = vector.load %arg9[%c0_30, %c0_31, %c0_32] : memref<1x4x32xf32, #tpu.memory_space<vmem>>, vector<1x4x32xf32>
    %106 = vector.shape_cast %105 : vector<1x4x32xf32> to vector<4x32xf32>
    %107 = vector.shape_cast %104 : vector<4x32xf32> to vector<1x4x32xf32>
    tpu.vector_store %arg9[%c0_30, %c0_31, %c0_32], %107 {strides = array<i32>} : memref<1x4x32xf32, #tpu.memory_space<vmem>>, vector<1x4x32xf32>,
    %cst_33 = arith.constant dense<0.000000e+00> : vector<4xf32>
    %108 = vector.multi_reduction <add>, %104, %cst_33 [1] : vector<4x32xf32> to vector<4xf32>
    %109 = vector.shape_cast %108 : vector<4xf32> to vector<4x1xf32>
    %cst_34 = arith.constant 3.200000e+01 : f32
    %110 = vector.broadcast %cst_34 : f32 to vector<4x1xf32>
    %111 = arith.divf %109, %110 : vector<4x1xf32>
    %112 = vector.broadcast %111 : vector<4x1xf32> to vector<4x32xf32>
    %113 = arith.subf %104, %112 : vector<4x32xf32>
    %114 = arith.mulf %113, %113 : vector<4x32xf32>
    %cst_35 = arith.constant dense<0.000000e+00> : vector<4xf32>
    %115 = vector.multi_reduction <add>, %114, %cst_35 [1] : vector<4x32xf32> to vector<4xf32>
    %116 = vector.shape_cast %115 : vector<4xf32> to vector<4x1xf32>
    %cst_36 = arith.constant 3.200000e+01 : f32
    %117 = vector.broadcast %cst_36 : f32 to vector<4x1xf32>
    %118 = arith.divf %116, %117 : vector<4x1xf32>
    %119 = vector.broadcast %111 : vector<4x1xf32> to vector<4x32xf32>
    %120 = arith.subf %104, %119 : vector<4x32xf32>
    %cst_37 = arith.constant 9.99999997E-7 : f32
    %121 = vector.broadcast %cst_37 : f32 to vector<4x1xf32>
    %122 = arith.addf %118, %121 : vector<4x1xf32>
    %123 = math.rsqrt %122 : vector<4x1xf32>
    %124 = vector.broadcast %123 : vector<4x1xf32> to vector<4x32xf32>
    %125 = arith.mulf %120, %124 : vector<4x32xf32>
    %c0_38 = arith.constant 0 : index
    %c0_39 = arith.constant 0 : index
    %126 = vector.load %arg7[%c0_38, %c0_39] : memref<1x32xf32, #tpu.memory_space<vmem>>, vector<1x32xf32>
    %127 = vector.broadcast %126 : vector<1x32xf32> to vector<4x32xf32>
    %128 = arith.mulf %125, %127 : vector<4x32xf32>
    %c0_40 = arith.constant 0 : index
    %c0_41 = arith.constant 0 : index
    %129 = vector.load %arg8[%c0_40, %c0_41] : memref<1x32xf32, #tpu.memory_space<vmem>>, vector<1x32xf32>
    %130 = vector.broadcast %129 : vector<1x32xf32> to vector<4x32xf32>
    %131 = arith.addf %128, %130 : vector<4x32xf32>
    %132 = arith.truncf %131 : vector<4x32xf32> to vector<4x32xbf16>
    %c0_42 = arith.constant 0 : index
    %c0_43 = arith.constant 0 : index
    %c0_44 = arith.constant 0 : index
    %133 = vector.load %arg10[%c0_42, %c0_43, %c0_44] : memref<1x4x32xbf16, #tpu.memory_space<vmem>>, vector<1x4x32xbf16>
    %134 = vector.shape_cast %133 : vector<1x4x32xbf16> to vector<4x32xbf16>
    %135 = vector.shape_cast %132 : vector<4x32xbf16> to vector<1x4x32xbf16>
    tpu.vector_store %arg10[%c0_42, %c0_43, %c0_44], %135 {strides = array<i32>} : memref<1x4x32xbf16, #tpu.memory_space<vmem>>, vector<1x4x32xbf16>,
    return
  }
  func.func @transform_0(%arg0: i32, %arg1: i32) -> (i32, i32, i32) {
    %c0_i32 = arith.constant 0 : i32
    %c0_i32_0 = arith.constant 0 : i32
    %c0_i32_1 = arith.constant 0 : i32
    return %arg0, %c0_i32, %c0_i32_0 : i32, i32, i32
  }
  func.func @transform_1(%arg0: i32, %arg1: i32) -> (i32, i32, i32) {
    %c0_i32 = arith.constant 0 : i32
    %c0_i32_0 = arith.constant 0 : i32
    return %arg0, %arg1, %c0_i32 : i32, i32, i32
  }
  func.func @transform_2(%arg0: i32, %arg1: i32) -> (i32, i32, i32) {
    %c0_i32 = arith.constant 0 : i32
    %c0_i32_0 = arith.constant 0 : i32
    return %arg0, %arg1, %c0_i32 : i32, i32, i32
  }
  func.func @transform_3(%arg0: i32, %arg1: i32) -> (i32, i32) {
    %c0_i32 = arith.constant 0 : i32
    %c0_i32_0 = arith.constant 0 : i32
    %c0_i32_1 = arith.constant 0 : i32
    return %c0_i32, %c0_i32_0 : i32, i32
  }
  func.func @transform_4(%arg0: i32, %arg1: i32) -> (i32, i32) {
    %c0_i32 = arith.constant 0 : i32
    %c0_i32_0 = arith.constant 0 : i32
    %c0_i32_1 = arith.constant 0 : i32
    return %c0_i32, %c0_i32_0 : i32, i32
  }
  func.func @transform_5(%arg0: i32, %arg1: i32) -> (i32, i32) {
    %c0_i32 = arith.constant 0 : i32
    %c0_i32_0 = arith.constant 0 : i32
    %c0_i32_1 = arith.constant 0 : i32
    return %c0_i32, %c0_i32_0 : i32, i32
  }
  func.func @transform_6(%arg0: i32, %arg1: i32) -> (i32, i32) {
    %c0_i32 = arith.constant 0 : i32
    %c0_i32_0 = arith.constant 0 : i32
    %c0_i32_1 = arith.constant 0 : i32
    return %c0_i32, %c0_i32_0 : i32, i32
  }
  func.func @transform_7(%arg0: i32, %arg1: i32) -> (i32, i32, i32) {
    %c0_i32 = arith.constant 0 : i32
    %c0_i32_0 = arith.constant 0 : i32
    return %arg0, %arg1, %c0_i32 : i32, i32, i32
  }
  func.func @transform_8(%arg0: i32, %arg1: i32) -> (i32, i32, i32) {
    %c0_i32 = arith.constant 0 : i32
    %c0_i32_0 = arith.constant 0 : i32
    return %arg0, %arg1, %c0_i32 : i32, i32, i32
  }
}

module attributes {stable_mosaic.version = 11 : i64} {
  func.func @_matmul_kernel(%arg0: i32, %arg1: i32, %arg2: i32, %arg3: memref<16x32xf32, #tpu.memory_space<vmem>>, %arg4: memref<32x64xbf16, #tpu.memory_space<vmem>>, %arg5: memref<1x64xf32, #tpu.memory_space<vmem>>, %arg6: memref<16x64xbf16, #tpu.memory_space<vmem>>, %arg7: memref<16x64xf32, #tpu.memory_space<vmem>>) attributes {dimension_semantics = [#tpu.dimension_semantics<parallel>, #tpu.dimension_semantics<parallel>, #tpu.dimension_semantics<arbitrary>], iteration_bounds = array<i64: 1, 1, 1>, scalar_prefetch = 0 : i64, scratch_operands = 1 : i64, tpu.core_type = #tpu.core_type<tc>, window_params = [{transform_indices = @transform_0, window_bounds = array<i64: 16, 32>}, {transform_indices = @transform_1, window_bounds = array<i64: 32, 64>}, {transform_indices = @transform_2, window_bounds = array<i64: 1, 64>}, {transform_indices = @transform_3, window_bounds = array<i64: 16, 64>}]} {
    %c0_i32 = arith.constant 0 : i32
    %0 = arith.cmpi eq, %arg2, %c0_i32 : i32
    %1 = arith.extui %0 : i1 to i32
    %c0_i32_0 = arith.constant 0 : i32
    %2 = arith.cmpi ne, %1, %c0_i32_0 : i32
    scf.if %2 {
      %cst_10 = arith.constant 0.000000e+00 : f32
      %13 = vector.broadcast %cst_10 : f32 to vector<16x64xf32>
      %c0_11 = arith.constant 0 : index
      %c0_12 = arith.constant 0 : index
      %14 = vector.load %arg7[%c0_11, %c0_12] : memref<16x64xf32, #tpu.memory_space<vmem>>, vector<16x64xf32>
      tpu.vector_store %arg7[%c0_11, %c0_12], %13 {strides = array<i32>} : memref<16x64xf32, #tpu.memory_space<vmem>>, vector<16x64xf32>,
    } else {
    }
    %c0 = arith.constant 0 : index
    %c0_1 = arith.constant 0 : index
    %3 = vector.load %arg7[%c0, %c0_1] : memref<16x64xf32, #tpu.memory_space<vmem>>, vector<16x64xf32>
    %c0_2 = arith.constant 0 : index
    %c0_3 = arith.constant 0 : index
    %4 = vector.load %arg3[%c0_2, %c0_3] : memref<16x32xf32, #tpu.memory_space<vmem>>, vector<16x32xf32>
    %5 = arith.truncf %4 : vector<16x32xf32> to vector<16x32xbf16>
    %c0_4 = arith.constant 0 : index
    %c0_5 = arith.constant 0 : index
    %6 = vector.load %arg4[%c0_4, %c0_5] : memref<32x64xbf16, #tpu.memory_space<vmem>>, vector<32x64xbf16>
    %cst = arith.constant dense<0.000000e+00> : vector<16x64xf32>
    %7 = tpu.matmul %5, %6, %cst {dimension_numbers = #tpu.dot_dimension_numbers<[1], [0], [0], [1], [0, 0, 1, 1], [], []>} : vector<16x32xbf16>, vector<32x64xbf16>, vector<16x64xf32> -> vector<16x64xf32>
    %8 = arith.addf %3, %7 : vector<16x64xf32>
    %c0_6 = arith.constant 0 : index
    %c0_7 = arith.constant 0 : index
    %9 = vector.load %arg7[%c0_6, %c0_7] : memref<16x64xf32, #tpu.memory_space<vmem>>, vector<16x64xf32>
    tpu.vector_store %arg7[%c0_6, %c0_7], %8 {strides = array<i32>} : memref<16x64xf32, #tpu.memory_space<vmem>>, vector<16x64xf32>,
    %c0_i32_8 = arith.constant 0 : i32
    %10 = arith.cmpi eq, %arg2, %c0_i32_8 : i32
    %11 = arith.extui %10 : i1 to i32
    %c0_i32_9 = arith.constant 0 : i32
    %12 = arith.cmpi ne, %11, %c0_i32_9 : i32
    scf.if %12 {
      %c0_10 = arith.constant 0 : index
      %c0_11 = arith.constant 0 : index
      %13 = vector.load %arg7[%c0_10, %c0_11] : memref<16x64xf32, #tpu.memory_space<vmem>>, vector<16x64xf32>
      %c0_12 = arith.constant 0 : index
      %c0_13 = arith.constant 0 : index
      %14 = vector.load %arg5[%c0_12, %c0_13] : memref<1x64xf32, #tpu.memory_space<vmem>>, vector<1x64xf32>
      %15 = vector.broadcast %14 : vector<1x64xf32> to vector<16x64xf32>
      %16 = arith.addf %13, %15 : vector<16x64xf32>
      %17 = arith.truncf %16 : vector<16x64xf32> to vector<16x64xbf16>
      %c0_14 = arith.constant 0 : index
      %c0_15 = arith.constant 0 : index
      %18 = vector.load %arg6[%c0_14, %c0_15] : memref<16x64xbf16, #tpu.memory_space<vmem>>, vector<16x64xbf16>
      tpu.vector_store %arg6[%c0_14, %c0_15], %17 {strides = array<i32>} : memref<16x64xbf16, #tpu.memory_space<vmem>>, vector<16x64xbf16>,
    } else {
    }
    return
  }
  func.func @transform_0(%arg0: i32, %arg1: i32, %arg2: i32) -> (i32, i32) {
    %c0_i32 = arith.constant 0 : i32
    return %arg0, %arg2 : i32, i32
  }
  func.func @transform_1(%arg0: i32, %arg1: i32, %arg2: i32) -> (i32, i32) {
    %c0_i32 = arith.constant 0 : i32
    return %arg2, %arg1 : i32, i32
  }
  func.func @transform_2(%arg0: i32, %arg1: i32, %arg2: i32) -> (i32, i32) {
    %c0_i32 = arith.constant 0 : i32
    %c0_i32_0 = arith.constant 0 : i32
    return %c0_i32, %arg1 : i32, i32
  }
  func.func @transform_3(%arg0: i32, %arg1: i32, %arg2: i32) -> (i32, i32) {
    %c0_i32 = arith.constant 0 : i32
    return %arg0, %arg1 : i32, i32
  }
}

module attributes {stable_mosaic.version = 11 : i64} {
  func.func @_ln_matmul_kernel(%arg0: i32, %arg1: i32, %arg2: memref<8x32xf32, #tpu.memory_space<vmem>>, %arg3: memref<1x32xf32, #tpu.memory_space<vmem>>, %arg4: memref<1x32xf32, #tpu.memory_space<vmem>>, %arg5: memref<32x64xbf16, #tpu.memory_space<vmem>>, %arg6: memref<1x64xf32, #tpu.memory_space<vmem>>, %arg7: memref<8x64xbf16, #tpu.memory_space<vmem>>, %arg8: memref<8x32xbf16, #tpu.memory_space<vmem>>) attributes {dimension_semantics = [#tpu.dimension_semantics<parallel>, #tpu.dimension_semantics<arbitrary>], iteration_bounds = array<i64: 1, 1>, scalar_prefetch = 0 : i64, scratch_operands = 1 : i64, tpu.core_type = #tpu.core_type<tc>, window_params = [{transform_indices = @transform_0, window_bounds = array<i64: 8, 32>}, {pipeline_mode = #tpu.pipeline_mode<synchronous>, transform_indices = @transform_1, window_bounds = array<i64: 1, 32>}, {pipeline_mode = #tpu.pipeline_mode<synchronous>, transform_indices = @transform_2, window_bounds = array<i64: 1, 32>}, {transform_indices = @transform_3, window_bounds = array<i64: 32, 64>}, {transform_indices = @transform_4, window_bounds = array<i64: 1, 64>}, {transform_indices = @transform_5, window_bounds = array<i64: 8, 64>}]} {
    %c0_i32 = arith.constant 0 : i32
    %0 = arith.cmpi eq, %arg1, %c0_i32 : i32
    %1 = arith.extui %0 : i1 to i32
    %c0_i32_0 = arith.constant 0 : i32
    %2 = arith.cmpi ne, %1, %c0_i32_0 : i32
    scf.if %2 {
      %c0_9 = arith.constant 0 : index
      %c0_10 = arith.constant 0 : index
      %13 = vector.load %arg2[%c0_9, %c0_10] : memref<8x32xf32, #tpu.memory_space<vmem>>, vector<8x32xf32>
      %cst_11 = arith.constant dense<0.000000e+00> : vector<8xf32>
      %14 = vector.multi_reduction <add>, %13, %cst_11 [1] : vector<8x32xf32> to vector<8xf32>
      %15 = vector.shape_cast %14 : vector<8xf32> to vector<8x1xf32>
      %cst_12 = arith.constant 3.200000e+01 : f32
      %16 = vector.broadcast %cst_12 : f32 to vector<8x1xf32>
      %17 = arith.divf %15, %16 : vector<8x1xf32>
      %18 = vector.broadcast %17 : vector<8x1xf32> to vector<8x32xf32>
      %19 = arith.subf %13, %18 : vector<8x32xf32>
      %20 = arith.mulf %19, %19 : vector<8x32xf32>
      %cst_13 = arith.constant dense<0.000000e+00> : vector<8xf32>
      %21 = vector.multi_reduction <add>, %20, %cst_13 [1] : vector<8x32xf32> to vector<8xf32>
      %22 = vector.shape_cast %21 : vector<8xf32> to vector<8x1xf32>
      %cst_14 = arith.constant 3.200000e+01 : f32
      %23 = vector.broadcast %cst_14 : f32 to vector<8x1xf32>
      %24 = arith.divf %22, %23 : vector<8x1xf32>
      %25 = vector.broadcast %17 : vector<8x1xf32> to vector<8x32xf32>
      %26 = arith.subf %13, %25 : vector<8x32xf32>
      %cst_15 = arith.constant 9.99999997E-7 : f32
      %27 = vector.broadcast %cst_15 : f32 to vector<8x1xf32>
      %28 = arith.addf %24, %27 : vector<8x1xf32>
      %29 = math.rsqrt %28 : vector<8x1xf32>
      %30 = vector.broadcast %29 : vector<8x1xf32> to vector<8x32xf32>
      %31 = arith.mulf %26, %30 : vector<8x32xf32>
      %c0_16 = arith.constant 0 : index
      %c0_17 = arith.constant 0 : index
      %32 = vector.load %arg3[%c0_16, %c0_17] : memref<1x32xf32, #tpu.memory_space<vmem>>, vector<1x32xf32>
      %33 = vector.broadcast %32 : vector<1x32xf32> to vector<8x32xf32>
      %34 = arith.mulf %31, %33 : vector<8x32xf32>
      %c0_18 = arith.constant 0 : index
      %c0_19 = arith.constant 0 : index
      %35 = vector.load %arg4[%c0_18, %c0_19] : memref<1x32xf32, #tpu.memory_space<vmem>>, vector<1x32xf32>
      %36 = vector.broadcast %35 : vector<1x32xf32> to vector<8x32xf32>
      %37 = arith.addf %34, %36 : vector<8x32xf32>
      %38 = arith.truncf %37 : vector<8x32xf32> to vector<8x32xbf16>
      %c0_20 = arith.constant 0 : index
      %c0_21 = arith.constant 0 : index
      %39 = vector.load %arg8[%c0_20, %c0_21] : memref<8x32xbf16, #tpu.memory_space<vmem>>, vector<8x32xbf16>
      tpu.vector_store %arg8[%c0_20, %c0_21], %38 {strides = array<i32>} : memref<8x32xbf16, #tpu.memory_space<vmem>>, vector<8x32xbf16>,
    } else {
    }
    %c0 = arith.constant 0 : index
    %c0_1 = arith.constant 0 : index
    %3 = vector.load %arg8[%c0, %c0_1] : memref<8x32xbf16, #tpu.memory_space<vmem>>, vector<8x32xbf16>
    %c0_2 = arith.constant 0 : index
    %c0_3 = arith.constant 0 : index
    %4 = vector.load %arg5[%c0_2, %c0_3] : memref<32x64xbf16, #tpu.memory_space<vmem>>, vector<32x64xbf16>
    %cst = arith.constant dense<0.000000e+00> : vector<8x64xf32>
    %5 = tpu.matmul %3, %4, %cst {dimension_numbers = #tpu.dot_dimension_numbers<[1], [0], [0], [1], [0, 0, 1, 1], [], []>} : vector<8x32xbf16>, vector<32x64xbf16>, vector<8x64xf32> -> vector<8x64xf32>
    %c0_4 = arith.constant 0 : index
    %c0_5 = arith.constant 0 : index
    %6 = vector.load %arg6[%c0_4, %c0_5] : memref<1x64xf32, #tpu.memory_space<vmem>>, vector<1x64xf32>
    %7 = vector.broadcast %6 : vector<1x64xf32> to vector<8x64xf32>
    %8 = arith.addf %5, %7 : vector<8x64xf32>
    %cst_6 = arith.constant 0.000000e+00 : f32
    %9 = vector.broadcast %cst_6 : f32 to vector<8x64xf32>
    %10 = arith.maximumf %8, %9 : vector<8x64xf32>
    %11 = arith.truncf %10 : vector<8x64xf32> to vector<8x64xbf16>
    %c0_7 = arith.constant 0 : index
    %c0_8 = arith.constant 0 : index
    %12 = vector.load %arg7[%c0_7, %c0_8] : memref<8x64xbf16, #tpu.memory_space<vmem>>, vector<8x64xbf16>
    tpu.vector_store %arg7[%c0_7, %c0_8], %11 {strides = array<i32>} : memref<8x64xbf16, #tpu.memory_space<vmem>>, vector<8x64xbf16>,
    return
  }
  func.func @transform_0(%arg0: i32, %arg1: i32) -> (i32, i32) {
    %c0_i32 = arith.constant 0 : i32
    %c0_i32_0 = arith.constant 0 : i32
    return %arg0, %c0_i32 : i32, i32
  }
  func.func @transform_1(%arg0: i32, %arg1: i32) -> (i32, i32) {
    %c0_i32 = arith.constant 0 : i32
    %c0_i32_0 = arith.constant 0 : i32
    %c0_i32_1 = arith.constant 0 : i32
    return %c0_i32, %c0_i32_0 : i32, i32
  }
  func.func @transform_2(%arg0: i32, %arg1: i32) -> (i32, i32) {
    %c0_i32 = arith.constant 0 : i32
    %c0_i32_0 = arith.constant 0 : i32
    %c0_i32_1 = arith.constant 0 : i32
    return %c0_i32, %c0_i32_0 : i32, i32
  }
  func.func @transform_3(%arg0: i32, %arg1: i32) -> (i32, i32) {
    %c0_i32 = arith.constant 0 : i32
    %c0_i32_0 = arith.constant 0 : i32
    return %c0_i32, %arg1 : i32, i32
  }
  func.func @transform_4(%arg0: i32, %arg1: i32) -> (i32, i32) {
    %c0_i32 = arith.constant 0 : i32
    %c0_i32_0 = arith.constant 0 : i32
    return %c0_i32, %arg1 : i32, i32
  }
  func.func @transform_5(%arg0: i32, %arg1: i32) -> (i32, i32) {
    %c0_i32 = arith.constant 0 : i32
    return %arg0, %arg1 : i32, i32
  }
}

module attributes {stable_mosaic.version = 11 : i64} {
  func.func @_matmul_kernel(%arg0: i32, %arg1: i32, %arg2: i32, %arg3: memref<8x64xbf16, #tpu.memory_space<vmem>>, %arg4: memref<64x32xbf16, #tpu.memory_space<vmem>>, %arg5: memref<1x32xf32, #tpu.memory_space<vmem>>, %arg6: memref<8x32xf32, #tpu.memory_space<vmem>>, %arg7: memref<8x32xf32, #tpu.memory_space<vmem>>, %arg8: memref<8x32xf32, #tpu.memory_space<vmem>>) attributes {dimension_semantics = [#tpu.dimension_semantics<parallel>, #tpu.dimension_semantics<parallel>, #tpu.dimension_semantics<arbitrary>], iteration_bounds = array<i64: 1, 1, 1>, scalar_prefetch = 0 : i64, scratch_operands = 1 : i64, tpu.core_type = #tpu.core_type<tc>, window_params = [{transform_indices = @transform_0, window_bounds = array<i64: 8, 64>}, {transform_indices = @transform_1, window_bounds = array<i64: 64, 32>}, {transform_indices = @transform_2, window_bounds = array<i64: 1, 32>}, {transform_indices = @transform_3, window_bounds = array<i64: 8, 32>}, {transform_indices = @transform_4, window_bounds = array<i64: 8, 32>}]} {
    %c0_i32 = arith.constant 0 : i32
    %0 = arith.cmpi eq, %arg2, %c0_i32 : i32
    %1 = arith.extui %0 : i1 to i32
    %c0_i32_0 = arith.constant 0 : i32
    %2 = arith.cmpi ne, %1, %c0_i32_0 : i32
    scf.if %2 {
      %cst_10 = arith.constant 0.000000e+00 : f32
      %12 = vector.broadcast %cst_10 : f32 to vector<8x32xf32>
      %c0_11 = arith.constant 0 : index
      %c0_12 = arith.constant 0 : index
      %13 = vector.load %arg8[%c0_11, %c0_12] : memref<8x32xf32, #tpu.memory_space<vmem>>, vector<8x32xf32>
      tpu.vector_store %arg8[%c0_11, %c0_12], %12 {strides = array<i32>} : memref<8x32xf32, #tpu.memory_space<vmem>>, vector<8x32xf32>,
    } else {
    }
    %c0 = arith.constant 0 : index
    %c0_1 = arith.constant 0 : index
    %3 = vector.load %arg8[%c0, %c0_1] : memref<8x32xf32, #tpu.memory_space<vmem>>, vector<8x32xf32>
    %c0_2 = arith.constant 0 : index
    %c0_3 = arith.constant 0 : index
    %4 = vector.load %arg3[%c0_2, %c0_3] : memref<8x64xbf16, #tpu.memory_space<vmem>>, vector<8x64xbf16>
    %c0_4 = arith.constant 0 : index
    %c0_5 = arith.constant 0 : index
    %5 = vector.load %arg4[%c0_4, %c0_5] : memref<64x32xbf16, #tpu.memory_space<vmem>>, vector<64x32xbf16>
    %cst = arith.constant dense<0.000000e+00> : vector<8x32xf32>
    %6 = tpu.matmul %4, %5, %cst {dimension_numbers = #tpu.dot_dimension_numbers<[1], [0], [0], [1], [0, 0, 1, 1], [], []>} : vector<8x64xbf16>, vector<64x32xbf16>, vector<8x32xf32> -> vector<8x32xf32>
    %7 = arith.addf %3, %6 : vector<8x32xf32>
    %c0_6 = arith.constant 0 : index
    %c0_7 = arith.constant 0 : index
    %8 = vector.load %arg8[%c0_6, %c0_7] : memref<8x32xf32, #tpu.memory_space<vmem>>, vector<8x32xf32>
    tpu.vector_store %arg8[%c0_6, %c0_7], %7 {strides = array<i32>} : memref<8x32xf32, #tpu.memory_space<vmem>>, vector<8x32xf32>,
    %c0_i32_8 = arith.constant 0 : i32
    %9 = arith.cmpi eq, %arg2, %c0_i32_8 : i32
    %10 = arith.extui %9 : i1 to i32
    %c0_i32_9 = arith.constant 0 : i32
    %11 = arith.cmpi ne, %10, %c0_i32_9 : i32
    scf.if %11 {
      %c0_10 = arith.constant 0 : index
      %c0_11 = arith.constant 0 : index
      %12 = vector.load %arg8[%c0_10, %c0_11] : memref<8x32xf32, #tpu.memory_space<vmem>>, vector<8x32xf32>
      %c0_12 = arith.constant 0 : index
      %c0_13 = arith.constant 0 : index
      %13 = vector.load %arg5[%c0_12, %c0_13] : memref<1x32xf32, #tpu.memory_space<vmem>>, vector<1x32xf32>
      %14 = vector.broadcast %13 : vector<1x32xf32> to vector<8x32xf32>
      %15 = arith.addf %12, %14 : vector<8x32xf32>
      %c0_14 = arith.constant 0 : index
      %c0_15 = arith.constant 0 : index
      %16 = vector.load %arg6[%c0_14, %c0_15] : memref<8x32xf32, #tpu.memory_space<vmem>>, vector<8x32xf32>
      %17 = arith.addf %15, %16 : vector<8x32xf32>
      %c0_16 = arith.constant 0 : index
      %c0_17 = arith.constant 0 : index
      %18 = vector.load %arg7[%c0_16, %c0_17] : memref<8x32xf32, #tpu.memory_space<vmem>>, vector<8x32xf32>
      tpu.vector_store %arg7[%c0_16, %c0_17], %17 {strides = array<i32>} : memref<8x32xf32, #tpu.memory_space<vmem>>, vector<8x32xf32>,
    } else {
    }
    return
  }
  func.func @transform_0(%arg0: i32, %arg1: i32, %arg2: i32) -> (i32, i32) {
    %c0_i32 = arith.constant 0 : i32
    return %arg0, %arg2 : i32, i32
  }
  func.func @transform_1(%arg0: i32, %arg1: i32, %arg2: i32) -> (i32, i32) {
    %c0_i32 = arith.constant 0 : i32
    return %arg2, %arg1 : i32, i32
  }
  func.func @transform_2(%arg0: i32, %arg1: i32, %arg2: i32) -> (i32, i32) {
    %c0_i32 = arith.constant 0 : i32
    %c0_i32_0 = arith.constant 0 : i32
    return %c0_i32, %arg1 : i32, i32
  }
  func.func @transform_3(%arg0: i32, %arg1: i32, %arg2: i32) -> (i32, i32) {
    %c0_i32 = arith.constant 0 : i32
    return %arg0, %arg1 : i32, i32
  }
  func.func @transform_4(%arg0: i32, %arg1: i32, %arg2: i32) -> (i32, i32) {
    %c0_i32 = arith.constant 0 : i32
    return %arg0, %arg1 : i32, i32
  }
}

module attributes {stable_mosaic.version = 11 : i64} {
  func.func @_ctx_attn_kernel(%arg0: i32, %arg1: i32, %arg2: memref<1x4x32xbf16, #tpu.memory_space<vmem>>, %arg3: memref<1x8x64xbf16, #tpu.memory_space<vmem>>, %arg4: memref<1x4x8xi8, #tpu.memory_space<vmem>>, %arg5: memref<1x4x8xi8, #tpu.memory_space<vmem>>, %arg6: memref<1x4x8xi8, #tpu.memory_space<vmem>>, %arg7: memref<1x4x32xf32, #tpu.memory_space<vmem>>, %arg8: memref<32x32xbf16, #tpu.memory_space<vmem>>, %arg9: memref<1x32xf32, #tpu.memory_space<vmem>>, %arg10: memref<1x32xf32, #tpu.memory_space<vmem>>, %arg11: memref<1x32xf32, #tpu.memory_space<vmem>>, %arg12: memref<1x4x32xf32, #tpu.memory_space<vmem>>, %arg13: memref<1x4x4x8xf32, #tpu.memory_space<vmem>>, %arg14: memref<4x4x8xf32, #tpu.memory_space<vmem>>) attributes {dimension_semantics = [#tpu.dimension_semantics<parallel>, #tpu.dimension_semantics<parallel>], iteration_bounds = array<i64: 2, 1>, scalar_prefetch = 0 : i64, scratch_operands = 1 : i64, tpu.core_type = #tpu.core_type<tc>, window_params = [{transform_indices = @transform_0, window_bounds = array<i64: 1, 4, 32>}, {transform_indices = @transform_1, window_bounds = array<i64: 1, 8, 64>}, {transform_indices = @transform_2, window_bounds = array<i64: 1, 4, 8>}, {transform_indices = @transform_3, window_bounds = array<i64: 1, 4, 8>}, {transform_indices = @transform_4, window_bounds = array<i64: 1, 4, 8>}, {transform_indices = @transform_5, window_bounds = array<i64: 1, 4, 32>}, {pipeline_mode = #tpu.pipeline_mode<synchronous>, transform_indices = @transform_6, window_bounds = array<i64: 32, 32>}, {pipeline_mode = #tpu.pipeline_mode<synchronous>, transform_indices = @transform_7, window_bounds = array<i64: 1, 32>}, {pipeline_mode = #tpu.pipeline_mode<synchronous>, transform_indices = @transform_8, window_bounds = array<i64: 1, 32>}, {pipeline_mode = #tpu.pipeline_mode<synchronous>, transform_indices = @transform_9, window_bounds = array<i64: 1, 32>}, {transform_indices = @transform_10, window_bounds = array<i64: 1, 4, 32>}, {transform_indices = @transform_11, window_bounds = array<i64: 1, 4, 4, 8>}]} {
    %c0 = arith.constant 0 : index
    %c0_0 = arith.constant 0 : index
    %c0_1 = arith.constant 0 : index
    %0 = vector.load %arg2[%c0, %c0_0, %c0_1] : memref<1x4x32xbf16, #tpu.memory_space<vmem>>, vector<1x4x32xbf16>
    %1 = vector.shape_cast %0 : vector<1x4x32xbf16> to vector<4x32xbf16>
    %c0_2 = arith.constant 0 : index
    %c0_3 = arith.constant 0 : index
    %c0_4 = arith.constant 0 : index
    %2 = vector.load %arg3[%c0_2, %c0_3, %c0_4] : memref<1x8x64xbf16, #tpu.memory_space<vmem>>, vector<1x8x64xbf16>
    %3 = vector.shape_cast %2 : vector<1x8x64xbf16> to vector<8x64xbf16>
    %c0_5 = arith.constant 0 : index
    %c0_6 = arith.constant 0 : index
    %c0_7 = arith.constant 0 : index
    %4 = vector.load %arg4[%c0_5, %c0_6, %c0_7] : memref<1x4x8xi8, #tpu.memory_space<vmem>>, vector<1x4x8xi8>
    %5 = vector.shape_cast %4 : vector<1x4x8xi8> to vector<4x8xi8>
    %6 = arith.sitofp %5 : vector<4x8xi8> to vector<4x8xf32>
    %cst = arith.constant -9.99999984E+17 : f32
    %7 = vector.broadcast %cst : f32 to vector<4x8xf32>
    %8 = arith.mulf %6, %7 : vector<4x8xf32>
    %c0_8 = arith.constant 0 : index
    %c0_9 = arith.constant 0 : index
    %c0_10 = arith.constant 0 : index
    %9 = vector.load %arg5[%c0_8, %c0_9, %c0_10] : memref<1x4x8xi8, #tpu.memory_space<vmem>>, vector<1x4x8xi8>
    %10 = vector.shape_cast %9 : vector<1x4x8xi8> to vector<4x8xi8>
    %11 = arith.sitofp %10 : vector<4x8xi8> to vector<4x8xf32>
    %cst_11 = arith.constant -9.99999984E+17 : f32
    %12 = vector.broadcast %cst_11 : f32 to vector<4x8xf32>
    %13 = arith.mulf %11, %12 : vector<4x8xf32>
    %c0_12 = arith.constant 0 : index
    %c0_13 = arith.constant 0 : index
    %c0_14 = arith.constant 0 : index
    %14 = vector.load %arg6[%c0_12, %c0_13, %c0_14] : memref<1x4x8xi8, #tpu.memory_space<vmem>>, vector<1x4x8xi8>
    %15 = vector.shape_cast %14 : vector<1x4x8xi8> to vector<4x8xi8>
    %16 = arith.sitofp %15 : vector<4x8xi8> to vector<4x8xf32>
    %cst_15 = arith.constant 1.000000e+00 : f32
    %17 = vector.broadcast %cst_15 : f32 to vector<4x8xf32>
    %18 = arith.subf %17, %16 : vector<4x8xf32>
    %19 = vector.extract_strided_slice %1 {offsets = [0, 0], sizes = [4, 8], strides = [1, 1]} : vector<4x32xbf16> to vector<4x8xbf16>
    %20 = vector.extract_strided_slice %3 {offsets = [0, 0], sizes = [8, 8], strides = [1, 1]} : vector<8x64xbf16> to vector<8x8xbf16>
    %21 = vector.extract_strided_slice %3 {offsets = [0, 32], sizes = [8, 8], strides = [1, 1]} : vector<8x64xbf16> to vector<8x8xbf16>
    %22 = tpu.transpose %20, [1, 0] : vector<8x8xbf16> -> vector<8x8xbf16>
    %cst_16 = arith.constant dense<0.000000e+00> : vector<4x8xf32>
    %23 = tpu.matmul %19, %22, %cst_16 {dimension_numbers = #tpu.dot_dimension_numbers<[1], [0], [0], [1], [0, 0, 1, 1], [], []>} : vector<4x8xbf16>, vector<8x8xbf16>, vector<4x8xf32> -> vector<4x8xf32>
    %24 = arith.addf %23, %8 : vector<4x8xf32>
    %cst_17 = arith.constant dense<0xFF800000> : vector<4xf32>
    %25 = vector.multi_reduction <maximumf>, %24, %cst_17 [1] : vector<4x8xf32> to vector<4xf32>
    %26 = vector.shape_cast %25 : vector<4xf32> to vector<4x1xf32>
    %27 = vector.broadcast %26 : vector<4x1xf32> to vector<4x8xf32>
    %28 = arith.subf %24, %27 : vector<4x8xf32>
    %29 = math.exp %28 : vector<4x8xf32>
    %cst_18 = arith.constant dense<0.000000e+00> : vector<4xf32>
    %30 = vector.multi_reduction <add>, %29, %cst_18 [1] : vector<4x8xf32> to vector<4xf32>
    %31 = vector.shape_cast %30 : vector<4xf32> to vector<4x1xf32>
    %32 = tpu.reciprocal %31 {approx = true} : vector<4x1xf32> -> vector<4x1xf32>
    %33 = vector.broadcast %32 : vector<4x1xf32> to vector<4x8xf32>
    %34 = arith.mulf %29, %33 : vector<4x8xf32>
    %35 = arith.addf %23, %13 : vector<4x8xf32>
    %cst_19 = arith.constant dense<0xFF800000> : vector<4xf32>
    %36 = vector.multi_reduction <maximumf>, %35, %cst_19 [1] : vector<4x8xf32> to vector<4xf32>
    %37 = vector.shape_cast %36 : vector<4xf32> to vector<4x1xf32>
    %38 = vector.broadcast %37 : vector<4x1xf32> to vector<4x8xf32>
    %39 = arith.subf %35, %38 : vector<4x8xf32>
    %40 = math.exp %39 : vector<4x8xf32>
    %cst_20 = arith.constant dense<0.000000e+00> : vector<4xf32>
    %41 = vector.multi_reduction <add>, %40, %cst_20 [1] : vector<4x8xf32> to vector<4xf32>
    %42 = vector.shape_cast %41 : vector<4xf32> to vector<4x1xf32>
    %43 = tpu.reciprocal %42 {approx = true} : vector<4x1xf32> -> vector<4x1xf32>
    %44 = vector.broadcast %43 : vector<4x1xf32> to vector<4x8xf32>
    %45 = arith.mulf %40, %44 : vector<4x8xf32>
    %46 = arith.mulf %29, %18 : vector<4x8xf32>
    %47 = arith.mulf %40, %18 : vector<4x8xf32>
    %cst_21 = arith.constant dense<0.000000e+00> : vector<4xf32>
    %48 = vector.multi_reduction <add>, %46, %cst_21 [1] : vector<4x8xf32> to vector<4xf32>
    %49 = vector.shape_cast %48 : vector<4xf32> to vector<4x1xf32>
    %cst_22 = arith.constant 1.000000e-30 : f32
    %50 = vector.broadcast %cst_22 : f32 to vector<4x1xf32>
    %51 = arith.maximumf %49, %50 : vector<4x1xf32>
    %52 = vector.broadcast %51 : vector<4x1xf32> to vector<4x8xf32>
    %53 = arith.divf %46, %52 : vector<4x8xf32>
    %c0_23 = arith.constant 0 : index
    %c0_24 = arith.constant 0 : index
    %c0_25 = arith.constant 0 : index
    %c0_26 = arith.constant 0 : index
    %54 = vector.load %arg13[%c0_23, %c0_24, %c0_25, %c0_26] : memref<1x4x4x8xf32, #tpu.memory_space<vmem>>, vector<1x1x4x8xf32>
    %55 = vector.shape_cast %54 : vector<1x1x4x8xf32> to vector<4x8xf32>
    %56 = vector.shape_cast %53 : vector<4x8xf32> to vector<1x1x4x8xf32>
    tpu.vector_store %arg13[%c0_23, %c0_24, %c0_25, %c0_26], %56 {strides = array<i32>} : memref<1x4x4x8xf32, #tpu.memory_space<vmem>>, vector<1x1x4x8xf32>,
    %cst_27 = arith.constant dense<0.000000e+00> : vector<4xf32>
    %57 = vector.multi_reduction <add>, %47, %cst_27 [1] : vector<4x8xf32> to vector<4xf32>
    %58 = vector.shape_cast %57 : vector<4xf32> to vector<4x1xf32>
    %cst_28 = arith.constant 1.000000e-30 : f32
    %59 = vector.broadcast %cst_28 : f32 to vector<4x1xf32>
    %60 = arith.maximumf %58, %59 : vector<4x1xf32>
    %61 = vector.broadcast %60 : vector<4x1xf32> to vector<4x8xf32>
    %62 = arith.divf %47, %61 : vector<4x8xf32>
    %c0_29 = arith.constant 0 : index
    %c0_30 = arith.constant 0 : index
    %c0_31 = arith.constant 0 : index
    %63 = vector.load %arg14[%c0_29, %c0_30, %c0_31] : memref<4x4x8xf32, #tpu.memory_space<vmem>>, vector<1x4x8xf32>
    %64 = vector.shape_cast %63 : vector<1x4x8xf32> to vector<4x8xf32>
    %65 = vector.shape_cast %62 : vector<4x8xf32> to vector<1x4x8xf32>
    tpu.vector_store %arg14[%c0_29, %c0_30, %c0_31], %65 {strides = array<i32>} : memref<4x4x8xf32, #tpu.memory_space<vmem>>, vector<1x4x8xf32>,
    %66 = arith.truncf %34 : vector<4x8xf32> to vector<4x8xbf16>
    %cst_32 = arith.constant dense<0.000000e+00> : vector<4x8xf32>
    %67 = tpu.matmul %66, %21, %cst_32 {dimension_numbers = #tpu.dot_dimension_numbers<[1], [0], [0], [1], [0, 0, 1, 1], [], []>} : vector<4x8xbf16>, vector<8x8xbf16>, vector<4x8xf32> -> vector<4x8xf32>
    %68 = arith.truncf %67 : vector<4x8xf32> to vector<4x8xbf16>
    %69 = arith.truncf %45 : vector<4x8xf32> to vector<4x8xbf16>
    %cst_33 = arith.constant dense<0.000000e+00> : vector<4x8xf32>
    %70 = tpu.matmul %69, %21, %cst_33 {dimension_numbers = #tpu.dot_dimension_numbers<[1], [0], [0], [1], [0, 0, 1, 1], [], []>} : vector<4x8xbf16>, vector<8x8xbf16>, vector<4x8xf32> -> vector<4x8xf32>
    %71 = arith.truncf %70 : vector<4x8xf32> to vector<4x8xbf16>
    %72 = vector.extract_strided_slice %1 {offsets = [0, 8], sizes = [4, 8], strides = [1, 1]} : vector<4x32xbf16> to vector<4x8xbf16>
    %73 = vector.extract_strided_slice %3 {offsets = [0, 8], sizes = [8, 8], strides = [1, 1]} : vector<8x64xbf16> to vector<8x8xbf16>
    %74 = vector.extract_strided_slice %3 {offsets = [0, 40], sizes = [8, 8], strides = [1, 1]} : vector<8x64xbf16> to vector<8x8xbf16>
    %75 = tpu.transpose %73, [1, 0] : vector<8x8xbf16> -> vector<8x8xbf16>
    %cst_34 = arith.constant dense<0.000000e+00> : vector<4x8xf32>
    %76 = tpu.matmul %72, %75, %cst_34 {dimension_numbers = #tpu.dot_dimension_numbers<[1], [0], [0], [1], [0, 0, 1, 1], [], []>} : vector<4x8xbf16>, vector<8x8xbf16>, vector<4x8xf32> -> vector<4x8xf32>
    %77 = arith.addf %76, %8 : vector<4x8xf32>
    %cst_35 = arith.constant dense<0xFF800000> : vector<4xf32>
    %78 = vector.multi_reduction <maximumf>, %77, %cst_35 [1] : vector<4x8xf32> to vector<4xf32>
    %79 = vector.shape_cast %78 : vector<4xf32> to vector<4x1xf32>
    %80 = vector.broadcast %79 : vector<4x1xf32> to vector<4x8xf32>
    %81 = arith.subf %77, %80 : vector<4x8xf32>
    %82 = math.exp %81 : vector<4x8xf32>
    %cst_36 = arith.constant dense<0.000000e+00> : vector<4xf32>
    %83 = vector.multi_reduction <add>, %82, %cst_36 [1] : vector<4x8xf32> to vector<4xf32>
    %84 = vector.shape_cast %83 : vector<4xf32> to vector<4x1xf32>
    %85 = tpu.reciprocal %84 {approx = true} : vector<4x1xf32> -> vector<4x1xf32>
    %86 = vector.broadcast %85 : vector<4x1xf32> to vector<4x8xf32>
    %87 = arith.mulf %82, %86 : vector<4x8xf32>
    %88 = arith.addf %76, %13 : vector<4x8xf32>
    %cst_37 = arith.constant dense<0xFF800000> : vector<4xf32>
    %89 = vector.multi_reduction <maximumf>, %88, %cst_37 [1] : vector<4x8xf32> to vector<4xf32>
    %90 = vector.shape_cast %89 : vector<4xf32> to vector<4x1xf32>
    %91 = vector.broadcast %90 : vector<4x1xf32> to vector<4x8xf32>
    %92 = arith.subf %88, %91 : vector<4x8xf32>
    %93 = math.exp %92 : vector<4x8xf32>
    %cst_38 = arith.constant dense<0.000000e+00> : vector<4xf32>
    %94 = vector.multi_reduction <add>, %93, %cst_38 [1] : vector<4x8xf32> to vector<4xf32>
    %95 = vector.shape_cast %94 : vector<4xf32> to vector<4x1xf32>
    %96 = tpu.reciprocal %95 {approx = true} : vector<4x1xf32> -> vector<4x1xf32>
    %97 = vector.broadcast %96 : vector<4x1xf32> to vector<4x8xf32>
    %98 = arith.mulf %93, %97 : vector<4x8xf32>
    %99 = arith.mulf %82, %18 : vector<4x8xf32>
    %100 = arith.mulf %93, %18 : vector<4x8xf32>
    %cst_39 = arith.constant dense<0.000000e+00> : vector<4xf32>
    %101 = vector.multi_reduction <add>, %99, %cst_39 [1] : vector<4x8xf32> to vector<4xf32>
    %102 = vector.shape_cast %101 : vector<4xf32> to vector<4x1xf32>
    %cst_40 = arith.constant 1.000000e-30 : f32
    %103 = vector.broadcast %cst_40 : f32 to vector<4x1xf32>
    %104 = arith.maximumf %102, %103 : vector<4x1xf32>
    %105 = vector.broadcast %104 : vector<4x1xf32> to vector<4x8xf32>
    %106 = arith.divf %99, %105 : vector<4x8xf32>
    %c0_41 = arith.constant 0 : index
    %c1 = arith.constant 1 : index
    %c0_42 = arith.constant 0 : index
    %c0_43 = arith.constant 0 : index
    %107 = vector.load %arg13[%c0_41, %c1, %c0_42, %c0_43] : memref<1x4x4x8xf32, #tpu.memory_space<vmem>>, vector<1x1x4x8xf32>
    %108 = vector.shape_cast %107 : vector<1x1x4x8xf32> to vector<4x8xf32>
    %109 = vector.shape_cast %106 : vector<4x8xf32> to vector<1x1x4x8xf32>
    tpu.vector_store %arg13[%c0_41, %c1, %c0_42, %c0_43], %109 {strides = array<i32>} : memref<1x4x4x8xf32, #tpu.memory_space<vmem>>, vector<1x1x4x8xf32>,
    %cst_44 = arith.constant dense<0.000000e+00> : vector<4xf32>
    %110 = vector.multi_reduction <add>, %100, %cst_44 [1] : vector<4x8xf32> to vector<4xf32>
    %111 = vector.shape_cast %110 : vector<4xf32> to vector<4x1xf32>
    %cst_45 = arith.constant 1.000000e-30 : f32
    %112 = vector.broadcast %cst_45 : f32 to vector<4x1xf32>
    %113 = arith.maximumf %111, %112 : vector<4x1xf32>
    %114 = vector.broadcast %113 : vector<4x1xf32> to vector<4x8xf32>
    %115 = arith.divf %100, %114 : vector<4x8xf32>
    %c1_46 = arith.constant 1 : index
    %c0_47 = arith.constant 0 : index
    %c0_48 = arith.constant 0 : index
    %116 = vector.load %arg14[%c1_46, %c0_47, %c0_48] : memref<4x4x8xf32, #tpu.memory_space<vmem>>, vector<1x4x8xf32>
    %117 = vector.shape_cast %116 : vector<1x4x8xf32> to vector<4x8xf32>
    %118 = vector.shape_cast %115 : vector<4x8xf32> to vector<1x4x8xf32>
    tpu.vector_store %arg14[%c1_46, %c0_47, %c0_48], %118 {strides = array<i32>} : memref<4x4x8xf32, #tpu.memory_space<vmem>>, vector<1x4x8xf32>,
    %119 = arith.truncf %87 : vector<4x8xf32> to vector<4x8xbf16>
    %cst_49 = arith.constant dense<0.000000e+00> : vector<4x8xf32>
    %120 = tpu.matmul %119, %74, %cst_49 {dimension_numbers = #tpu.dot_dimension_numbers<[1], [0], [0], [1], [0, 0, 1, 1], [], []>} : vector<4x8xbf16>, vector<8x8xbf16>, vector<4x8xf32> -> vector<4x8xf32>
    %121 = arith.truncf %120 : vector<4x8xf32> to vector<4x8xbf16>
    %122 = arith.truncf %98 : vector<4x8xf32> to vector<4x8xbf16>
    %cst_50 = arith.constant dense<0.000000e+00> : vector<4x8xf32>
    %123 = tpu.matmul %122, %74, %cst_50 {dimension_numbers = #tpu.dot_dimension_numbers<[1], [0], [0], [1], [0, 0, 1, 1], [], []>} : vector<4x8xbf16>, vector<8x8xbf16>, vector<4x8xf32> -> vector<4x8xf32>
    %124 = arith.truncf %123 : vector<4x8xf32> to vector<4x8xbf16>
    %125 = vector.extract_strided_slice %1 {offsets = [0, 16], sizes = [4, 8], strides = [1, 1]} : vector<4x32xbf16> to vector<4x8xbf16>
    %126 = vector.extract_strided_slice %3 {offsets = [0, 16], sizes = [8, 8], strides = [1, 1]} : vector<8x64xbf16> to vector<8x8xbf16>
    %127 = vector.extract_strided_slice %3 {offsets = [0, 48], sizes = [8, 8], strides = [1, 1]} : vector<8x64xbf16> to vector<8x8xbf16>
    %128 = tpu.transpose %126, [1, 0] : vector<8x8xbf16> -> vector<8x8xbf16>
    %cst_51 = arith.constant dense<0.000000e+00> : vector<4x8xf32>
    %129 = tpu.matmul %125, %128, %cst_51 {dimension_numbers = #tpu.dot_dimension_numbers<[1], [0], [0], [1], [0, 0, 1, 1], [], []>} : vector<4x8xbf16>, vector<8x8xbf16>, vector<4x8xf32> -> vector<4x8xf32>
    %130 = arith.addf %129, %8 : vector<4x8xf32>
    %cst_52 = arith.constant dense<0xFF800000> : vector<4xf32>
    %131 = vector.multi_reduction <maximumf>, %130, %cst_52 [1] : vector<4x8xf32> to vector<4xf32>
    %132 = vector.shape_cast %131 : vector<4xf32> to vector<4x1xf32>
    %133 = vector.broadcast %132 : vector<4x1xf32> to vector<4x8xf32>
    %134 = arith.subf %130, %133 : vector<4x8xf32>
    %135 = math.exp %134 : vector<4x8xf32>
    %cst_53 = arith.constant dense<0.000000e+00> : vector<4xf32>
    %136 = vector.multi_reduction <add>, %135, %cst_53 [1] : vector<4x8xf32> to vector<4xf32>
    %137 = vector.shape_cast %136 : vector<4xf32> to vector<4x1xf32>
    %138 = tpu.reciprocal %137 {approx = true} : vector<4x1xf32> -> vector<4x1xf32>
    %139 = vector.broadcast %138 : vector<4x1xf32> to vector<4x8xf32>
    %140 = arith.mulf %135, %139 : vector<4x8xf32>
    %141 = arith.addf %129, %13 : vector<4x8xf32>
    %cst_54 = arith.constant dense<0xFF800000> : vector<4xf32>
    %142 = vector.multi_reduction <maximumf>, %141, %cst_54 [1] : vector<4x8xf32> to vector<4xf32>
    %143 = vector.shape_cast %142 : vector<4xf32> to vector<4x1xf32>
    %144 = vector.broadcast %143 : vector<4x1xf32> to vector<4x8xf32>
    %145 = arith.subf %141, %144 : vector<4x8xf32>
    %146 = math.exp %145 : vector<4x8xf32>
    %cst_55 = arith.constant dense<0.000000e+00> : vector<4xf32>
    %147 = vector.multi_reduction <add>, %146, %cst_55 [1] : vector<4x8xf32> to vector<4xf32>
    %148 = vector.shape_cast %147 : vector<4xf32> to vector<4x1xf32>
    %149 = tpu.reciprocal %148 {approx = true} : vector<4x1xf32> -> vector<4x1xf32>
    %150 = vector.broadcast %149 : vector<4x1xf32> to vector<4x8xf32>
    %151 = arith.mulf %146, %150 : vector<4x8xf32>
    %152 = arith.mulf %135, %18 : vector<4x8xf32>
    %153 = arith.mulf %146, %18 : vector<4x8xf32>
    %cst_56 = arith.constant dense<0.000000e+00> : vector<4xf32>
    %154 = vector.multi_reduction <add>, %152, %cst_56 [1] : vector<4x8xf32> to vector<4xf32>
    %155 = vector.shape_cast %154 : vector<4xf32> to vector<4x1xf32>
    %cst_57 = arith.constant 1.000000e-30 : f32
    %156 = vector.broadcast %cst_57 : f32 to vector<4x1xf32>
    %157 = arith.maximumf %155, %156 : vector<4x1xf32>
    %158 = vector.broadcast %157 : vector<4x1xf32> to vector<4x8xf32>
    %159 = arith.divf %152, %158 : vector<4x8xf32>
    %c0_58 = arith.constant 0 : index
    %c2 = arith.constant 2 : index
    %c0_59 = arith.constant 0 : index
    %c0_60 = arith.constant 0 : index
    %160 = vector.load %arg13[%c0_58, %c2, %c0_59, %c0_60] : memref<1x4x4x8xf32, #tpu.memory_space<vmem>>, vector<1x1x4x8xf32>
    %161 = vector.shape_cast %160 : vector<1x1x4x8xf32> to vector<4x8xf32>
    %162 = vector.shape_cast %159 : vector<4x8xf32> to vector<1x1x4x8xf32>
    tpu.vector_store %arg13[%c0_58, %c2, %c0_59, %c0_60], %162 {strides = array<i32>} : memref<1x4x4x8xf32, #tpu.memory_space<vmem>>, vector<1x1x4x8xf32>,
    %cst_61 = arith.constant dense<0.000000e+00> : vector<4xf32>
    %163 = vector.multi_reduction <add>, %153, %cst_61 [1] : vector<4x8xf32> to vector<4xf32>
    %164 = vector.shape_cast %163 : vector<4xf32> to vector<4x1xf32>
    %cst_62 = arith.constant 1.000000e-30 : f32
    %165 = vector.broadcast %cst_62 : f32 to vector<4x1xf32>
    %166 = arith.maximumf %164, %165 : vector<4x1xf32>
    %167 = vector.broadcast %166 : vector<4x1xf32> to vector<4x8xf32>
    %168 = arith.divf %153, %167 : vector<4x8xf32>
    %c2_63 = arith.constant 2 : index
    %c0_64 = arith.constant 0 : index
    %c0_65 = arith.constant 0 : index
    %169 = vector.load %arg14[%c2_63, %c0_64, %c0_65] : memref<4x4x8xf32, #tpu.memory_space<vmem>>, vector<1x4x8xf32>
    %170 = vector.shape_cast %169 : vector<1x4x8xf32> to vector<4x8xf32>
    %171 = vector.shape_cast %168 : vector<4x8xf32> to vector<1x4x8xf32>
    tpu.vector_store %arg14[%c2_63, %c0_64, %c0_65], %171 {strides = array<i32>} : memref<4x4x8xf32, #tpu.memory_space<vmem>>, vector<1x4x8xf32>,
    %172 = arith.truncf %140 : vector<4x8xf32> to vector<4x8xbf16>
    %cst_66 = arith.constant dense<0.000000e+00> : vector<4x8xf32>
    %173 = tpu.matmul %172, %127, %cst_66 {dimension_numbers = #tpu.dot_dimension_numbers<[1], [0], [0], [1], [0, 0, 1, 1], [], []>} : vector<4x8xbf16>, vector<8x8xbf16>, vector<4x8xf32> -> vector<4x8xf32>
    %174 = arith.truncf %173 : vector<4x8xf32> to vector<4x8xbf16>
    %175 = arith.truncf %151 : vector<4x8xf32> to vector<4x8xbf16>
    %cst_67 = arith.constant dense<0.000000e+00> : vector<4x8xf32>
    %176 = tpu.matmul %175, %127, %cst_67 {dimension_numbers = #tpu.dot_dimension_numbers<[1], [0], [0], [1], [0, 0, 1, 1], [], []>} : vector<4x8xbf16>, vector<8x8xbf16>, vector<4x8xf32> -> vector<4x8xf32>
    %177 = arith.truncf %176 : vector<4x8xf32> to vector<4x8xbf16>
    %178 = vector.extract_strided_slice %1 {offsets = [0, 24], sizes = [4, 8], strides = [1, 1]} : vector<4x32xbf16> to vector<4x8xbf16>
    %179 = vector.extract_strided_slice %3 {offsets = [0, 24], sizes = [8, 8], strides = [1, 1]} : vector<8x64xbf16> to vector<8x8xbf16>
    %180 = vector.extract_strided_slice %3 {offsets = [0, 56], sizes = [8, 8], strides = [1, 1]} : vector<8x64xbf16> to vector<8x8xbf16>
    %181 = tpu.transpose %179, [1, 0] : vector<8x8xbf16> -> vector<8x8xbf16>
    %cst_68 = arith.constant dense<0.000000e+00> : vector<4x8xf32>
    %182 = tpu.matmul %178, %181, %cst_68 {dimension_numbers = #tpu.dot_dimension_numbers<[1], [0], [0], [1], [0, 0, 1, 1], [], []>} : vector<4x8xbf16>, vector<8x8xbf16>, vector<4x8xf32> -> vector<4x8xf32>
    %183 = arith.addf %182, %8 : vector<4x8xf32>
    %cst_69 = arith.constant dense<0xFF800000> : vector<4xf32>
    %184 = vector.multi_reduction <maximumf>, %183, %cst_69 [1] : vector<4x8xf32> to vector<4xf32>
    %185 = vector.shape_cast %184 : vector<4xf32> to vector<4x1xf32>
    %186 = vector.broadcast %185 : vector<4x1xf32> to vector<4x8xf32>
    %187 = arith.subf %183, %186 : vector<4x8xf32>
    %188 = math.exp %187 : vector<4x8xf32>
    %cst_70 = arith.constant dense<0.000000e+00> : vector<4xf32>
    %189 = vector.multi_reduction <add>, %188, %cst_70 [1] : vector<4x8xf32> to vector<4xf32>
    %190 = vector.shape_cast %189 : vector<4xf32> to vector<4x1xf32>
    %191 = tpu.reciprocal %190 {approx = true} : vector<4x1xf32> -> vector<4x1xf32>
    %192 = vector.broadcast %191 : vector<4x1xf32> to vector<4x8xf32>
    %193 = arith.mulf %188, %192 : vector<4x8xf32>
    %194 = arith.addf %182, %13 : vector<4x8xf32>
    %cst_71 = arith.constant dense<0xFF800000> : vector<4xf32>
    %195 = vector.multi_reduction <maximumf>, %194, %cst_71 [1] : vector<4x8xf32> to vector<4xf32>
    %196 = vector.shape_cast %195 : vector<4xf32> to vector<4x1xf32>
    %197 = vector.broadcast %196 : vector<4x1xf32> to vector<4x8xf32>
    %198 = arith.subf %194, %197 : vector<4x8xf32>
    %199 = math.exp %198 : vector<4x8xf32>
    %cst_72 = arith.constant dense<0.000000e+00> : vector<4xf32>
    %200 = vector.multi_reduction <add>, %199, %cst_72 [1] : vector<4x8xf32> to vector<4xf32>
    %201 = vector.shape_cast %200 : vector<4xf32> to vector<4x1xf32>
    %202 = tpu.reciprocal %201 {approx = true} : vector<4x1xf32> -> vector<4x1xf32>
    %203 = vector.broadcast %202 : vector<4x1xf32> to vector<4x8xf32>
    %204 = arith.mulf %199, %203 : vector<4x8xf32>
    %205 = arith.mulf %188, %18 : vector<4x8xf32>
    %206 = arith.mulf %199, %18 : vector<4x8xf32>
    %cst_73 = arith.constant dense<0.000000e+00> : vector<4xf32>
    %207 = vector.multi_reduction <add>, %205, %cst_73 [1] : vector<4x8xf32> to vector<4xf32>
    %208 = vector.shape_cast %207 : vector<4xf32> to vector<4x1xf32>
    %cst_74 = arith.constant 1.000000e-30 : f32
    %209 = vector.broadcast %cst_74 : f32 to vector<4x1xf32>
    %210 = arith.maximumf %208, %209 : vector<4x1xf32>
    %211 = vector.broadcast %210 : vector<4x1xf32> to vector<4x8xf32>
    %212 = arith.divf %205, %211 : vector<4x8xf32>
    %c0_75 = arith.constant 0 : index
    %c3 = arith.constant 3 : index
    %c0_76 = arith.constant 0 : index
    %c0_77 = arith.constant 0 : index
    %213 = vector.load %arg13[%c0_75, %c3, %c0_76, %c0_77] : memref<1x4x4x8xf32, #tpu.memory_space<vmem>>, vector<1x1x4x8xf32>
    %214 = vector.shape_cast %213 : vector<1x1x4x8xf32> to vector<4x8xf32>
    %215 = vector.shape_cast %212 : vector<4x8xf32> to vector<1x1x4x8xf32>
    tpu.vector_store %arg13[%c0_75, %c3, %c0_76, %c0_77], %215 {strides = array<i32>} : memref<1x4x4x8xf32, #tpu.memory_space<vmem>>, vector<1x1x4x8xf32>,
    %cst_78 = arith.constant dense<0.000000e+00> : vector<4xf32>
    %216 = vector.multi_reduction <add>, %206, %cst_78 [1] : vector<4x8xf32> to vector<4xf32>
    %217 = vector.shape_cast %216 : vector<4xf32> to vector<4x1xf32>
    %cst_79 = arith.constant 1.000000e-30 : f32
    %218 = vector.broadcast %cst_79 : f32 to vector<4x1xf32>
    %219 = arith.maximumf %217, %218 : vector<4x1xf32>
    %220 = vector.broadcast %219 : vector<4x1xf32> to vector<4x8xf32>
    %221 = arith.divf %206, %220 : vector<4x8xf32>
    %c3_80 = arith.constant 3 : index
    %c0_81 = arith.constant 0 : index
    %c0_82 = arith.constant 0 : index
    %222 = vector.load %arg14[%c3_80, %c0_81, %c0_82] : memref<4x4x8xf32, #tpu.memory_space<vmem>>, vector<1x4x8xf32>
    %223 = vector.shape_cast %222 : vector<1x4x8xf32> to vector<4x8xf32>
    %224 = vector.shape_cast %221 : vector<4x8xf32> to vector<1x4x8xf32>
    tpu.vector_store %arg14[%c3_80, %c0_81, %c0_82], %224 {strides = array<i32>} : memref<4x4x8xf32, #tpu.memory_space<vmem>>, vector<1x4x8xf32>,
    %225 = arith.truncf %193 : vector<4x8xf32> to vector<4x8xbf16>
    %cst_83 = arith.constant dense<0.000000e+00> : vector<4x8xf32>
    %226 = tpu.matmul %225, %180, %cst_83 {dimension_numbers = #tpu.dot_dimension_numbers<[1], [0], [0], [1], [0, 0, 1, 1], [], []>} : vector<4x8xbf16>, vector<8x8xbf16>, vector<4x8xf32> -> vector<4x8xf32>
    %227 = arith.truncf %226 : vector<4x8xf32> to vector<4x8xbf16>
    %228 = arith.truncf %204 : vector<4x8xf32> to vector<4x8xbf16>
    %cst_84 = arith.constant dense<0.000000e+00> : vector<4x8xf32>
    %229 = tpu.matmul %228, %180, %cst_84 {dimension_numbers = #tpu.dot_dimension_numbers<[1], [0], [0], [1], [0, 0, 1, 1], [], []>} : vector<4x8xbf16>, vector<8x8xbf16>, vector<4x8xf32> -> vector<4x8xf32>
    %230 = arith.truncf %229 : vector<4x8xf32> to vector<4x8xbf16>
    %c0_85 = arith.constant 0 : index
    %c0_86 = arith.constant 0 : index
    %231 = vector.load %arg9[%c0_85, %c0_86] : memref<1x32xf32, #tpu.memory_space<vmem>>, vector<1x32xf32>
    %c0_87 = arith.constant 0 : index
    %c0_88 = arith.constant 0 : index
    %232 = vector.load %arg8[%c0_87, %c0_88] : memref<32x32xbf16, #tpu.memory_space<vmem>>, vector<32x32xbf16>
    %233 = tpu.concatenate %68, %121, %174, %227 in 1 : vector<4x8xbf16>, vector<4x8xbf16>, vector<4x8xbf16>, vector<4x8xbf16> -> vector<4x32xbf16>
    %cst_89 = arith.constant dense<0.000000e+00> : vector<4x32xf32>
    %234 = tpu.matmul %233, %232, %cst_89 {dimension_numbers = #tpu.dot_dimension_numbers<[1], [0], [0], [1], [0, 0, 1, 1], [], []>} : vector<4x32xbf16>, vector<32x32xbf16>, vector<4x32xf32> -> vector<4x32xf32>
    %235 = vector.broadcast %231 : vector<1x32xf32> to vector<4x32xf32>
    %236 = arith.addf %234, %235 : vector<4x32xf32>
    %237 = tpu.concatenate %71, %124, %177, %230 in 1 : vector<4x8xbf16>, vector<4x8xbf16>, vector<4x8xbf16>, vector<4x8xbf16> -> vector<4x32xbf16>
    %cst_90 = arith.constant dense<0.000000e+00> : vector<4x32xf32>
    %238 = tpu.matmul %237, %232, %cst_90 {dimension_numbers = #tpu.dot_dimension_numbers<[1], [0], [0], [1], [0, 0, 1, 1], [], []>} : vector<4x32xbf16>, vector<32x32xbf16>, vector<4x32xf32> -> vector<4x32xf32>
    %239 = vector.broadcast %231 : vector<1x32xf32> to vector<4x32xf32>
    %240 = arith.addf %238, %239 : vector<4x32xf32>
    %c0_91 = arith.constant 0 : index
    %c0_92 = arith.constant 0 : index
    %241 = vector.load %arg10[%c0_91, %c0_92] : memref<1x32xf32, #tpu.memory_space<vmem>>, vector<1x32xf32>
    %242 = vector.broadcast %241 : vector<1x32xf32> to vector<4x32xf32>
    %243 = arith.mulf %236, %242 : vector<4x32xf32>
    %cst_93 = arith.constant dense<0.000000e+00> : vector<4xf32>
    %244 = vector.multi_reduction <add>, %243, %cst_93 [1] : vector<4x32xf32> to vector<4xf32>
    %245 = vector.shape_cast %244 : vector<4xf32> to vector<4x1xf32>
    %c0_94 = arith.constant 0 : index
    %c0_95 = arith.constant 0 : index
    %246 = vector.load %arg11[%c0_94, %c0_95] : memref<1x32xf32, #tpu.memory_space<vmem>>, vector<1x32xf32>
    %247 = vector.broadcast %246 : vector<1x32xf32> to vector<4x32xf32>
    %248 = arith.mulf %240, %247 : vector<4x32xf32>
    %cst_96 = arith.constant dense<0.000000e+00> : vector<4xf32>
    %249 = vector.multi_reduction <add>, %248, %cst_96 [1] : vector<4x32xf32> to vector<4xf32>
    %250 = vector.shape_cast %249 : vector<4xf32> to vector<4x1xf32>
    %251 = arith.addf %245, %250 : vector<4x1xf32>
    %cst_97 = arith.constant 0.000000e+00 : f32
    %252 = vector.broadcast %cst_97 : f32 to vector<4x1xf32>
    %253 = arith.subf %252, %251 : vector<4x1xf32>
    %254 = math.exp %253 : vector<4x1xf32>
    %cst_98 = arith.constant 1.000000e+00 : f32
    %255 = vector.broadcast %cst_98 : f32 to vector<4x1xf32>
    %256 = arith.addf %255, %254 : vector<4x1xf32>
    %cst_99 = arith.constant 1.000000e+00 : f32
    %257 = vector.broadcast %cst_99 : f32 to vector<4x1xf32>
    %258 = arith.divf %257, %256 : vector<4x1xf32>
    %259 = vector.broadcast %258 : vector<4x1xf32> to vector<4x32xf32>
    %260 = arith.mulf %236, %259 : vector<4x32xf32>
    %cst_100 = arith.constant 1.000000e+00 : f32
    %261 = vector.broadcast %cst_100 : f32 to vector<4x1xf32>
    %262 = arith.subf %261, %258 : vector<4x1xf32>
    %263 = vector.broadcast %262 : vector<4x1xf32> to vector<4x32xf32>
    %264 = arith.mulf %240, %263 : vector<4x32xf32>
    %265 = arith.addf %260, %264 : vector<4x32xf32>
    %c0_101 = arith.constant 0 : index
    %c0_102 = arith.constant 0 : index
    %c0_103 = arith.constant 0 : index
    %266 = vector.load %arg7[%c0_101, %c0_102, %c0_103] : memref<1x4x32xf32, #tpu.memory_space<vmem>>, vector<1x4x32xf32>
    %267 = vector.shape_cast %266 : vector<1x4x32xf32> to vector<4x32xf32>
    %268 = arith.addf %265, %267 : vector<4x32xf32>
    %c0_104 = arith.constant 0 : index
    %c0_105 = arith.constant 0 : index
    %c0_106 = arith.constant 0 : index
    %269 = vector.load %arg12[%c0_104, %c0_105, %c0_106] : memref<1x4x32xf32, #tpu.memory_space<vmem>>, vector<1x4x32xf32>
    %270 = vector.shape_cast %269 : vector<1x4x32xf32> to vector<4x32xf32>
    %271 = vector.shape_cast %268 : vector<4x32xf32> to vector<1x4x32xf32>
    tpu.vector_store %arg12[%c0_104, %c0_105, %c0_106], %271 {strides = array<i32>} : memref<1x4x32xf32, #tpu.memory_space<vmem>>, vector<1x4x32xf32>,
    %c0_107 = arith.constant 0 : index
    %c0_108 = arith.constant 0 : index
    %c0_109 = arith.constant 0 : index
    %c0_110 = arith.constant 0 : index
    %272 = vector.load %arg13[%c0_107, %c0_108, %c0_109, %c0_110] : memref<1x4x4x8xf32, #tpu.memory_space<vmem>>, vector<1x1x4x8xf32>
    %273 = vector.shape_cast %272 : vector<1x1x4x8xf32> to vector<4x8xf32>
    %274 = vector.broadcast %258 : vector<4x1xf32> to vector<4x8xf32>
    %275 = arith.mulf %273, %274 : vector<4x8xf32>
    %c0_111 = arith.constant 0 : index
    %c0_112 = arith.constant 0 : index
    %c0_113 = arith.constant 0 : index
    %276 = vector.load %arg14[%c0_111, %c0_112, %c0_113] : memref<4x4x8xf32, #tpu.memory_space<vmem>>, vector<1x4x8xf32>
    %277 = vector.shape_cast %276 : vector<1x4x8xf32> to vector<4x8xf32>
    %cst_114 = arith.constant 1.000000e+00 : f32
    %278 = vector.broadcast %cst_114 : f32 to vector<4x1xf32>
    %279 = arith.subf %278, %258 : vector<4x1xf32>
    %280 = vector.broadcast %279 : vector<4x1xf32> to vector<4x8xf32>
    %281 = arith.mulf %277, %280 : vector<4x8xf32>
    %282 = arith.addf %275, %281 : vector<4x8xf32>
    %c0_115 = arith.constant 0 : index
    %c0_116 = arith.constant 0 : index
    %c0_117 = arith.constant 0 : index
    %c0_118 = arith.constant 0 : index
    %283 = vector.load %arg13[%c0_115, %c0_116, %c0_117, %c0_118] : memref<1x4x4x8xf32, #tpu.memory_space<vmem>>, vector<1x1x4x8xf32>
    %284 = vector.shape_cast %283 : vector<1x1x4x8xf32> to vector<4x8xf32>
    %285 = vector.shape_cast %282 : vector<4x8xf32> to vector<1x1x4x8xf32>
    tpu.vector_store %arg13[%c0_115, %c0_116, %c0_117, %c0_118], %285 {strides = array<i32>} : memref<1x4x4x8xf32, #tpu.memory_space<vmem>>, vector<1x1x4x8xf32>,
    %c0_119 = arith.constant 0 : index
    %c1_120 = arith.constant 1 : index
    %c0_121 = arith.constant 0 : index
    %c0_122 = arith.constant 0 : index
    %286 = vector.load %arg13[%c0_119, %c1_120, %c0_121, %c0_122] : memref<1x4x4x8xf32, #tpu.memory_space<vmem>>, vector<1x1x4x8xf32>
    %287 = vector.shape_cast %286 : vector<1x1x4x8xf32> to vector<4x8xf32>
    %288 = vector.broadcast %258 : vector<4x1xf32> to vector<4x8xf32>
    %289 = arith.mulf %287, %288 : vector<4x8xf32>
    %c1_123 = arith.constant 1 : index
    %c0_124 = arith.constant 0 : index
    %c0_125 = arith.constant 0 : index
    %290 = vector.load %arg14[%c1_123, %c0_124, %c0_125] : memref<4x4x8xf32, #tpu.memory_space<vmem>>, vector<1x4x8xf32>
    %291 = vector.shape_cast %290 : vector<1x4x8xf32> to vector<4x8xf32>
    %cst_126 = arith.constant 1.000000e+00 : f32
    %292 = vector.broadcast %cst_126 : f32 to vector<4x1xf32>
    %293 = arith.subf %292, %258 : vector<4x1xf32>
    %294 = vector.broadcast %293 : vector<4x1xf32> to vector<4x8xf32>
    %295 = arith.mulf %291, %294 : vector<4x8xf32>
    %296 = arith.addf %289, %295 : vector<4x8xf32>
    %c0_127 = arith.constant 0 : index
    %c1_128 = arith.constant 1 : index
    %c0_129 = arith.constant 0 : index
    %c0_130 = arith.constant 0 : index
    %297 = vector.load %arg13[%c0_127, %c1_128, %c0_129, %c0_130] : memref<1x4x4x8xf32, #tpu.memory_space<vmem>>, vector<1x1x4x8xf32>
    %298 = vector.shape_cast %297 : vector<1x1x4x8xf32> to vector<4x8xf32>
    %299 = vector.shape_cast %296 : vector<4x8xf32> to vector<1x1x4x8xf32>
    tpu.vector_store %arg13[%c0_127, %c1_128, %c0_129, %c0_130], %299 {strides = array<i32>} : memref<1x4x4x8xf32, #tpu.memory_space<vmem>>, vector<1x1x4x8xf32>,
    %c0_131 = arith.constant 0 : index
    %c2_132 = arith.constant 2 : index
    %c0_133 = arith.constant 0 : index
    %c0_134 = arith.constant 0 : index
    %300 = vector.load %arg13[%c0_131, %c2_132, %c0_133, %c0_134] : memref<1x4x4x8xf32, #tpu.memory_space<vmem>>, vector<1x1x4x8xf32>
    %301 = vector.shape_cast %300 : vector<1x1x4x8xf32> to vector<4x8xf32>
    %302 = vector.broadcast %258 : vector<4x1xf32> to vector<4x8xf32>
    %303 = arith.mulf %301, %302 : vector<4x8xf32>
    %c2_135 = arith.constant 2 : index
    %c0_136 = arith.constant 0 : index
    %c0_137 = arith.constant 0 : index
    %304 = vector.load %arg14[%c2_135, %c0_136, %c0_137] : memref<4x4x8xf32, #tpu.memory_space<vmem>>, vector<1x4x8xf32>
    %305 = vector.shape_cast %304 : vector<1x4x8xf32> to vector<4x8xf32>
    %cst_138 = arith.constant 1.000000e+00 : f32
    %306 = vector.broadcast %cst_138 : f32 to vector<4x1xf32>
    %307 = arith.subf %306, %258 : vector<4x1xf32>
    %308 = vector.broadcast %307 : vector<4x1xf32> to vector<4x8xf32>
    %309 = arith.mulf %305, %308 : vector<4x8xf32>
    %310 = arith.addf %303, %309 : vector<4x8xf32>
    %c0_139 = arith.constant 0 : index
    %c2_140 = arith.constant 2 : index
    %c0_141 = arith.constant 0 : index
    %c0_142 = arith.constant 0 : index
    %311 = vector.load %arg13[%c0_139, %c2_140, %c0_141, %c0_142] : memref<1x4x4x8xf32, #tpu.memory_space<vmem>>, vector<1x1x4x8xf32>
    %312 = vector.shape_cast %311 : vector<1x1x4x8xf32> to vector<4x8xf32>
    %313 = vector.shape_cast %310 : vector<4x8xf32> to vector<1x1x4x8xf32>
    tpu.vector_store %arg13[%c0_139, %c2_140, %c0_141, %c0_142], %313 {strides = array<i32>} : memref<1x4x4x8xf32, #tpu.memory_space<vmem>>, vector<1x1x4x8xf32>,
    %c0_143 = arith.constant 0 : index
    %c3_144 = arith.constant 3 : index
    %c0_145 = arith.constant 0 : index
    %c0_146 = arith.constant 0 : index
    %314 = vector.load %arg13[%c0_143, %c3_144, %c0_145, %c0_146] : memref<1x4x4x8xf32, #tpu.memory_space<vmem>>, vector<1x1x4x8xf32>
    %315 = vector.shape_cast %314 : vector<1x1x4x8xf32> to vector<4x8xf32>
    %316 = vector.broadcast %258 : vector<4x1xf32> to vector<4x8xf32>
    %317 = arith.mulf %315, %316 : vector<4x8xf32>
    %c3_147 = arith.constant 3 : index
    %c0_148 = arith.constant 0 : index
    %c0_149 = arith.constant 0 : index
    %318 = vector.load %arg14[%c3_147, %c0_148, %c0_149] : memref<4x4x8xf32, #tpu.memory_space<vmem>>, vector<1x4x8xf32>
    %319 = vector.shape_cast %318 : vector<1x4x8xf32> to vector<4x8xf32>
    %cst_150 = arith.constant 1.000000e+00 : f32
    %320 = vector.broadcast %cst_150 : f32 to vector<4x1xf32>
    %321 = arith.subf %320, %258 : vector<4x1xf32>
    %322 = vector.broadcast %321 : vector<4x1xf32> to vector<4x8xf32>
    %323 = arith.mulf %319, %322 : vector<4x8xf32>
    %324 = arith.addf %317, %323 : vector<4x8xf32>
    %c0_151 = arith.constant 0 : index
    %c3_152 = arith.constant 3 : index
    %c0_153 = arith.constant 0 : index
    %c0_154 = arith.constant 0 : index
    %325 = vector.load %arg13[%c0_151, %c3_152, %c0_153, %c0_154] : memref<1x4x4x8xf32, #tpu.memory_space<vmem>>, vector<1x1x4x8xf32>
    %326 = vector.shape_cast %325 : vector<1x1x4x8xf32> to vector<4x8xf32>
    %327 = vector.shape_cast %324 : vector<4x8xf32> to vector<1x1x4x8xf32>
    tpu.vector_store %arg13[%c0_151, %c3_152, %c0_153, %c0_154], %327 {strides = array<i32>} : memref<1x4x4x8xf32, #tpu.memory_space<vmem>>, vector<1x1x4x8xf32>,
    return
  }
  func.func @transform_0(%arg0: i32, %arg1: i32) -> (i32, i32, i32) {
    %c0_i32 = arith.constant 0 : i32
    %c0_i32_0 = arith.constant 0 : i32
    return %arg0, %arg1, %c0_i32 : i32, i32, i32
  }
  func.func @transform_1(%arg0: i32, %arg1: i32) -> (i32, i32, i32) {
    %c0_i32 = arith.constant 0 : i32
    %c0_i32_0 = arith.constant 0 : i32
    %c0_i32_1 = arith.constant 0 : i32
    return %arg0, %c0_i32, %c0_i32_0 : i32, i32, i32
  }
  func.func @transform_2(%arg0: i32, %arg1: i32) -> (i32, i32, i32) {
    %c0_i32 = arith.constant 0 : i32
    %c0_i32_0 = arith.constant 0 : i32
    return %arg0, %arg1, %c0_i32 : i32, i32, i32
  }
  func.func @transform_3(%arg0: i32, %arg1: i32) -> (i32, i32, i32) {
    %c0_i32 = arith.constant 0 : i32
    %c0_i32_0 = arith.constant 0 : i32
    return %arg0, %arg1, %c0_i32 : i32, i32, i32
  }
  func.func @transform_4(%arg0: i32, %arg1: i32) -> (i32, i32, i32) {
    %c0_i32 = arith.constant 0 : i32
    %c0_i32_0 = arith.constant 0 : i32
    return %arg0, %arg1, %c0_i32 : i32, i32, i32
  }
  func.func @transform_5(%arg0: i32, %arg1: i32) -> (i32, i32, i32) {
    %c0_i32 = arith.constant 0 : i32
    %c0_i32_0 = arith.constant 0 : i32
    return %arg0, %arg1, %c0_i32 : i32, i32, i32
  }
  func.func @transform_6(%arg0: i32, %arg1: i32) -> (i32, i32) {
    %c0_i32 = arith.constant 0 : i32
    %c0_i32_0 = arith.constant 0 : i32
    %c0_i32_1 = arith.constant 0 : i32
    return %c0_i32, %c0_i32_0 : i32, i32
  }
  func.func @transform_7(%arg0: i32, %arg1: i32) -> (i32, i32) {
    %c0_i32 = arith.constant 0 : i32
    %c0_i32_0 = arith.constant 0 : i32
    %c0_i32_1 = arith.constant 0 : i32
    return %c0_i32, %c0_i32_0 : i32, i32
  }
  func.func @transform_8(%arg0: i32, %arg1: i32) -> (i32, i32) {
    %c0_i32 = arith.constant 0 : i32
    %c0_i32_0 = arith.constant 0 : i32
    %c0_i32_1 = arith.constant 0 : i32
    return %c0_i32, %c0_i32_0 : i32, i32
  }
  func.func @transform_9(%arg0: i32, %arg1: i32) -> (i32, i32) {
    %c0_i32 = arith.constant 0 : i32
    %c0_i32_0 = arith.constant 0 : i32
    %c0_i32_1 = arith.constant 0 : i32
    return %c0_i32, %c0_i32_0 : i32, i32
  }
  func.func @transform_10(%arg0: i32, %arg1: i32) -> (i32, i32, i32) {
    %c0_i32 = arith.constant 0 : i32
    %c0_i32_0 = arith.constant 0 : i32
    return %arg0, %arg1, %c0_i32 : i32, i32, i32
  }
  func.func @transform_11(%arg0: i32, %arg1: i32) -> (i32, i32, i32, i32) {
    %c0_i32 = arith.constant 0 : i32
    %c0_i32_0 = arith.constant 0 : i32
    %c0_i32_1 = arith.constant 0 : i32
    return %arg0, %c0_i32, %arg1, %c0_i32_0 : i32, i32, i32, i32
  }
}

</mosaic_0001>

<llo_original>
// kernel: decoder_layer_forward.9
$region0: #{decoder_layer_forward.9}
  #allocation0 [shape = 'u32[]', space=smem, size = 0x4, offset = 0x4, fixed_abs, tag = 'smem constant byte address 0x4 - core index']
  #allocation1 [shape = 'u32[144,128]{1,0:T(1,128)}', space=vmem, size = 0x12000, scoped, tag = 'internal scratch']
  #allocation2 [shape = 'f32[16,64]{1,0:T(8,128)}', space=vmem, size = 0x2000, scoped, tag = 'scratch operand']
  %s0 = inlined_call_operand.vmem [shape: f32[16,32], index: 0, kind: input, shape index: {}]
  %s1 = inlined_call_operand.vmem [shape: bf16[32,64], index: 1, kind: input, shape index: {}]
  %s2 = inlined_call_operand.vmem [shape: f32[1,64], index: 2, kind: input, shape index: {}]
  %s3 = inlined_call_operand.vmem [shape: bf16[16,64], index: 3, kind: output, shape index: {}]
  %s4 = sld [smem:[#allocation0]]
  $region30: #{decoder_layer_forward.9} parent=0
    _
  %s6 = ssub.s32 1, %s4
  %s7 = scalar_select 0, %s6, %s4
  // Predicated region
  $region2: #{decoder_layer_forward.9} parent=0 // pred_check
    _
  $region3: #{decoder_layer_forward.9} parent=0 // pred_check_branch
    %9 = sbr.rel (0) target = $region5
  $region4: #{decoder_layer_forward.9} parent=0 // pred_region
    _
  $region5: #{decoder_layer_forward.9} parent=0 // pred_fallthru
    _
  // Predicated region
  $region6: #{decoder_layer_forward.9} parent=0 // pred_check
    _
  $region7: #{decoder_layer_forward.9} parent=0 // pred_check_branch
    %11 = sbr.rel (0) target = $region9
  $region8: #{decoder_layer_forward.9} parent=0 // pred_region
    _
  $region9: #{decoder_layer_forward.9} parent=0 // pred_fallthru
    _
  // Predicated region
  $region10: #{decoder_layer_forward.9} parent=0 // pred_check
    _
  $region11: #{decoder_layer_forward.9} parent=0 // pred_check_branch
    %13 = sbr.rel (0) target = $region13
  $region12: #{decoder_layer_forward.9} parent=0 // pred_region
    _
  $region13: #{decoder_layer_forward.9} parent=0 // pred_fallthru
    _
  %p15 = scmp.eq.s32.totalorder 0, 0
  // Predicated region
  $region14: #{decoder_layer_forward.9} parent=0 // pred_check
    %p16 = pneg %p15
  $region15: #{decoder_layer_forward.9} parent=0 // pred_check_branch
    %18 = sbr.rel (%p16) target = $region17
  $region16: #{decoder_layer_forward.9} parent=0 // pred_region
    %vm19 = vcmask 523264
    %20 = vst.msk [vmem:[#allocation2] sm:$0xff] %vm19, 0.0
    %21 = vst.msk [vmem:[#allocation2 + $0x8] sm:$0xff] %vm19, 0.0
  $region17: #{decoder_layer_forward.9} parent=0 // pred_fallthru
    _
  %v22 = vld [vmem:[#allocation2] sm:$0xff]
  %v23 = vld [vmem:[#allocation2 + $0x8] sm:$0xff]
  %v24 = vld [vmem:[%s0] sm:$0xff]
  %v25 = vld [vmem:[%s0 + $0x8] sm:$0xff]
  %v26 = vpack.c.bf16 %v25, %v24
  %v27 = vld [vmem:[%s1] sm:$0xf]
  %v28 = vld [vmem:[%s1 + $0x4] sm:$0xf]
  %v29 = vld [vmem:[%s1 + $0x8] sm:$0xf]
  %v30 = vld [vmem:[%s1 + $0xc] sm:$0xf]
  %v35 = vunpack.c.l.b16 %v27
  %v36 = vunpack.c.l.b16 %v28
  %v37 = vunpack.c.l.b16 %v29
  %v38 = vunpack.c.l.b16 %v30
  %v39 = vpack.c.b16 %v36, %v35
  %v40 = vpack.c.b16 %v38, %v37
  %vm43 = vcmask 261120
  %v45 = vsel %vm43, %v26, 0
  %47 = vmatprep.subr.bf16.mxu0 0
  %48 = vmatpush1.bf16.msra.mxu0 0
  %49 = vmatprep.subr.bf16.mxu0 0
  %50 = vmatpush1.bf16.msra.mxu0 0
  %51 = vmatprep.subr.bf16.mxu0 0
  %52 = vmatpush1.bf16.msra.mxu0 0
  %53 = vmatprep.subr.bf16.mxu0 0
  %54 = vmatpush1.bf16.msra.mxu0 0
  %55 = vmatprep.subr.bf16.mxu0 0
  %56 = vmatpush1.bf16.msra.mxu0 0
  %57 = vmatprep.subr.bf16.mxu0 0
  %58 = vmatpush1.bf16.msra.mxu0 0
  %59 = vmatprep.subr.bf16.mxu0 0
  %60 = vmatpush1.bf16.msra.mxu0 %v40
  %61 = vmatprep.subr.bf16.mxu0 0
  %62 = vmatpush1.bf16.msra.mxu0 %v39
  %63 = vmatprep.subr.bf16.mxu0 0
  %64 = vmatpush2.bf16.msra.mxu0 0
  %65 = vmatprep.subr.bf16.mxu0 0
  %66 = vmatpush2.bf16.msra.mxu0 0
  %67 = vmatprep.subr.bf16.mxu0 0
  %68 = vmatpush2.bf16.msra.mxu0 0
  %69 = vmatprep.subr.bf16.mxu0 0
  %70 = vmatpush2.bf16.msra.mxu0 0
  %71 = vmatprep.subr.bf16.mxu0 0
  %72 = vmatpush2.bf16.msra.mxu0 0
  %73 = vmatprep.subr.bf16.mxu0 0
  %74 = vmatpush2.bf16.msra.mxu0 0
  %75 = vmatprep.subr.bf16.mxu0 0
  %76 = vmatpush2.bf16.msra.mxu0 0
  %77 = vmatprep.subr.bf16.mxu0 0
  %78 = vmatpush2.bf16.msra.mxu0 0
  %79 = vmatprep.mubr.bf16.mxu0 0
  %80 = vmatmul.mubr.bf16.gmra.mxu0 %v45
  %v81 = vpop.f32.mrf.mxu0
  %v82 = vadd.f32 0.0, %v81
  %v83 = vpop.f32.mrf.mxu0
  %v84 = vpop.f32.mrf.mxu0
  %v85 = vadd.f32 0.0, %v84
  %v86 = vpop.f32.mrf.mxu0
  %87 = vdwg.mxu0
  %v88 = vadd.f32 %v22, %v82
  %v89 = vadd.f32 %v23, %v85
  %vm90 = vcmask 523264
  %91 = vst.msk [vmem:[#allocation2] sm:$0xff] %vm90, %v88
  %92 = vst.msk [vmem:[#allocation2 + $0x8] sm:$0xff] %vm90, %v89
  // Predicated region
  $region18: #{decoder_layer_forward.9} parent=0 // pred_check
    %p93 = pneg %p15
  $region19: #{decoder_layer_forward.9} parent=0 // pred_check_branch
    %95 = sbr.rel (%p93) target = $region21
  $region20: #{decoder_layer_forward.9} parent=0 // pred_region
    %v96 = vld [vmem:[#allocation2] sm:$0xff]
    %v97 = vld [vmem:[#allocation2 + $0x8] sm:$0xff]
    %v98 = vld [vmem:[%s2] sm:$0x1]
    %v100 = vlaneseq
    %v101 = vshrl.u32 %v100, 7
    %v102 = vsub.s32 0, %v101
    %v103 = vrot.slane %v98, %v102
    %v105 = vadd.f32 %v96, %v103
    %v106 = vadd.f32 %v97, %v103
    %v107 = vpack.c.bf16 %v106, %v105
    %v109 = vunpack.c.l.b16 %v107
    %v110 = vunpack.c.h.b16 %v107
    %v111 = vpack.c.b16 %v109, %v109
    %v112 = vpack.c.b16 %v110, %v110
    %vm115 = vcmask 519168
    %116 = vst.msk [vmem:[%s3] sm:$0xf] %vm115, %v111
    %117 = vst.msk [vmem:[%s3 + $0x4] sm:$0xf] %vm115, %v112
  $region21: #{decoder_layer_forward.9} parent=0 // pred_fallthru
    _
  // Predicated region
  $region22: #{decoder_layer_forward.9} parent=0 // pred_check
    _
  $region23: #{decoder_layer_forward.9} parent=0 // pred_check_branch
    %119 = sbr.rel (0) target = $region25
  $region24: #{decoder_layer_forward.9} parent=0 // pred_region
    _
  $region25: #{decoder_layer_forward.9} parent=0 // pred_fallthru
    _
  // Predicated region
  $region26: #{decoder_layer_forward.9} parent=0 // pred_check
    _
  $region27: #{decoder_layer_forward.9} parent=0 // pred_check_branch
    %121 = sbr.rel (0) target = $region29
  $region28: #{decoder_layer_forward.9} parent=0 // pred_region
    _
  $region29: #{decoder_layer_forward.9} parent=0 // pred_fallthru
    _

// kernel: decoder_layer_forward.10
$region0: #{decoder_layer_forward.10}
  #allocation0 [shape = 'u32[]', space=smem, size = 0x4, offset = 0x4, fixed_abs, tag = 'smem constant byte address 0x4 - core index']
  #allocation1 [shape = 'u32[144,128]{1,0:T(1,128)}', space=vmem, size = 0x12000, scoped, tag = 'internal scratch']
  #allocation2 [shape = 'f32[8,32]{1,0:T(8,128)}', space=vmem, size = 0x1000, scoped, tag = 'scratch operand']
  %s0 = inlined_call_operand.vmem [shape: bf16[8,32], index: 0, kind: input, shape index: {}]
  %s1 = inlined_call_operand.vmem [shape: bf16[32,32], index: 1, kind: input, shape index: {}]
  %s2 = inlined_call_operand.vmem [shape: f32[1,32], index: 2, kind: input, shape index: {}]
  %s3 = inlined_call_operand.vmem [shape: bf16[8,32], index: 3, kind: output, shape index: {}]
  %s4 = sld [smem:[#allocation0]]
  $region30: #{decoder_layer_forward.10} parent=0
    _
  %s6 = ssub.s32 1, %s4
  %s7 = scalar_select 0, %s6, %s4
  // Predicated region
  $region2: #{decoder_layer_forward.10} parent=0 // pred_check
    _
  $region3: #{decoder_layer_forward.10} parent=0 // pred_check_branch
    %9 = sbr.rel (0) target = $region5
  $region4: #{decoder_layer_forward.10} parent=0 // pred_region
    _
  $region5: #{decoder_layer_forward.10} parent=0 // pred_fallthru
    _
  // Predicated region
  $region6: #{decoder_layer_forward.10} parent=0 // pred_check
    _
  $region7: #{decoder_layer_forward.10} parent=0 // pred_check_branch
    %11 = sbr.rel (0) target = $region9
  $region8: #{decoder_layer_forward.10} parent=0 // pred_region
    _
  $region9: #{decoder_layer_forward.10} parent=0 // pred_fallthru
    _
  // Predicated region
  $region10: #{decoder_layer_forward.10} parent=0 // pred_check
    _
  $region11: #{decoder_layer_forward.10} parent=0 // pred_check_branch
    %13 = sbr.rel (0) target = $region13
  $region12: #{decoder_layer_forward.10} parent=0 // pred_region
    _
  $region13: #{decoder_layer_forward.10} parent=0 // pred_fallthru
    _
  %p15 = scmp.eq.s32.totalorder 0, 0
  // Predicated region
  $region14: #{decoder_layer_forward.10} parent=0 // pred_check
    %p16 = pneg %p15
  $region15: #{decoder_layer_forward.10} parent=0 // pred_check_branch
    %18 = sbr.rel (%p16) target = $region17
  $region16: #{decoder_layer_forward.10} parent=0 // pred_region
    %vm19 = vcmask 261120
    %20 = vst.msk [vmem:[#allocation2] sm:$0xff] %vm19, 0.0
  $region17: #{decoder_layer_forward.10} parent=0 // pred_fallthru
    _
  %v21 = vld [vmem:[#allocation2] sm:$0xff]
  %v22 = vld [vmem:[%s0] sm:$0xf]
  %v23 = vld [vmem:[%s1] sm:$0xf]
  %v24 = vld [vmem:[%s1 + $0x4] sm:$0xf]
  %v25 = vld [vmem:[%s1 + $0x8] sm:$0xf]
  %v26 = vld [vmem:[%s1 + $0xc] sm:$0xf]
  %v31 = vunpack.c.l.b16 %v23
  %v32 = vunpack.c.l.b16 %v24
  %v33 = vunpack.c.l.b16 %v25
  %v34 = vunpack.c.l.b16 %v26
  %v35 = vpack.c.b16 %v32, %v31
  %v36 = vpack.c.b16 %v34, %v33
  %vm39 = vcmask 261120
  %v41 = vsel %vm39, %v22, 0
  %43 = vmatprep.subr.bf16.mxu0 0
  %44 = vmatpush1.bf16.msra.mxu0 0
  %45 = vmatprep.subr.bf16.mxu0 0
  %46 = vmatpush1.bf16.msra.mxu0 0
  %47 = vmatprep.subr.bf16.mxu0 0
  %48 = vmatpush1.bf16.msra.mxu0 0
  %49 = vmatprep.subr.bf16.mxu0 0
  %50 = vmatpush1.bf16.msra.mxu0 0
  %51 = vmatprep.subr.bf16.mxu0 0
  %52 = vmatpush1.bf16.msra.mxu0 0
  %53 = vmatprep.subr.bf16.mxu0 0
  %54 = vmatpush1.bf16.msra.mxu0 0
  %55 = vmatprep.subr.bf16.mxu0 0
  %56 = vmatpush1.bf16.msra.mxu0 %v36
  %57 = vmatprep.subr.bf16.mxu0 0
  %58 = vmatpush1.bf16.msra.mxu0 %v35
  %59 = vmatprep.subr.bf16.mxu0 0
  %60 = vmatpush2.bf16.msra.mxu0 0
  %61 = vmatprep.subr.bf16.mxu0 0
  %62 = vmatpush2.bf16.msra.mxu0 0
  %63 = vmatprep.subr.bf16.mxu0 0
  %64 = vmatpush2.bf16.msra.mxu0 0
  %65 = vmatprep.subr.bf16.mxu0 0
  %66 = vmatpush2.bf16.msra.mxu0 0
  %67 = vmatprep.subr.bf16.mxu0 0
  %68 = vmatpush2.bf16.msra.mxu0 0
  %69 = vmatprep.subr.bf16.mxu0 0
  %70 = vmatpush2.bf16.msra.mxu0 0
  %71 = vmatprep.subr.bf16.mxu0 0
  %72 = vmatpush2.bf16.msra.mxu0 0
  %73 = vmatprep.subr.bf16.mxu0 0
  %74 = vmatpush2.bf16.msra.mxu0 0
  %75 = vmatprep.mubr.bf16.mxu0 0
  %76 = vmatmul.mubr.bf16.gmra.mxu0 %v41
  %v77 = vpop.f32.mrf.mxu0
  %v78 = vadd.f32 0.0, %v77
  %v79 = vpop.f32.mrf.mxu0
  %v80 = vpop.f32.mrf.mxu0
  %v81 = vpop.f32.mrf.mxu0
  %82 = vdwg.mxu0
  %v83 = vadd.f32 %v21, %v78
  %84 = vst.msk [vmem:[#allocation2] sm:$0xff] %vm39, %v83
  // Predicated region
  $region18: #{decoder_layer_forward.10} parent=0 // pred_check
    %p85 = pneg %p15
  $region19: #{decoder_layer_forward.10} parent=0 // pred_check_branch
    %87 = sbr.rel (%p85) target = $region21
  $region20: #{decoder_layer_forward.10} parent=0 // pred_region
    %v88 = vld [vmem:[#allocation2] sm:$0xff]
    %v89 = vld [vmem:[%s2] sm:$0x1]
    %v91 = vlaneseq
    %v92 = vshrl.u32 %v91, 7
    %v93 = vsub.s32 0, %v92
    %v94 = vrot.slane %v89, %v93
    %v96 = vadd.f32 %v88, %v94
    %v97 = vpack.c.bf16 %v96, %v96
    %vm98 = vcmask 257024
    %99 = vst.msk [vmem:[%s3] sm:$0xf] %vm98, %v97
  $region21: #{decoder_layer_forward.10} parent=0 // pred_fallthru
    _
  // Predicated region
  $region22: #{decoder_layer_forward.10} parent=0 // pred_check
    _
  $region23: #{decoder_layer_forward.10} parent=0 // pred_check_branch
    %101 = sbr.rel (0) target = $region25
  $region24: #{decoder_layer_forward.10} parent=0 // pred_region
    _
  $region25: #{decoder_layer_forward.10} parent=0 // pred_fallthru
    _
  // Predicated region
  $region26: #{decoder_layer_forward.10} parent=0 // pred_check
    _
  $region27: #{decoder_layer_forward.10} parent=0 // pred_check_branch
    %103 = sbr.rel (0) target = $region29
  $region28: #{decoder_layer_forward.10} parent=0 // pred_region
    _
  $region29: #{decoder_layer_forward.10} parent=0 // pred_fallthru
    _

// kernel: decoder_layer_forward.7
$region0: #{decoder_layer_forward.7}
  #allocation0 [shape = 'u32[]', space=smem, size = 0x4, offset = 0x4, fixed_abs, tag = 'smem constant byte address 0x4 - core index']
  #allocation1 [shape = 'u32[144,128]{1,0:T(1,128)}', space=vmem, size = 0x12000, scoped, tag = 'internal scratch']
  #allocation2 [shape = 'bf16[8,32]{1,0:T(8,128)(2,1)}', space=vmem, size = 0x800, scoped, tag = 'scratch operand']
  %s0 = inlined_call_operand.vmem [shape: f32[8,32], index: 0, kind: input, shape index: {}]
  %s1 = inlined_call_operand.vmem [shape: f32[1,32], index: 1, kind: input, shape index: {}]
  %s2 = inlined_call_operand.vmem [shape: f32[1,32], index: 2, kind: input, shape index: {}]
  %s3 = inlined_call_operand.vmem [shape: bf16[32,96], index: 3, kind: input, shape index: {}]
  %s4 = inlined_call_operand.vmem [shape: f32[1,96], index: 4, kind: input, shape index: {}]
  %s5 = inlined_call_operand.vmem [shape: bf16[8,96], index: 5, kind: output, shape index: {0}]
  %s6 = inlined_call_operand.hbm [shape: f32[8,32], index: 6, kind: output, shape index: {1}]
  %7 = xla_tuple %s5, %s6
  %s8 = sld [smem:[#allocation0]]
  $region42: #{decoder_layer_forward.7} parent=0
    _
  %s10 = ssub.s32 1, %s8
  %s11 = scalar_select 0, %s10, %s8
  $region1: #{decoder_layer_forward.7} parent=0
    #allocation3 [shape = 'u8[4096]{0}', space=vmem, size = 0x1000, scoped, tag = 'output window, operand 1, single buffered']
    #allocation4 [shape = 's32[1]{0}', space=sflag, size = 0x4, scoped, tag = 'scoped memory for decoder_layer_forward.7']
    %12 = vsyncpa [#allocation4], 0
    // Predicated region
    $region2: #{decoder_layer_forward.7} parent=1 // pred_check
      _
    $region3: #{decoder_layer_forward.7} parent=1 // pred_check_branch
      %14 = sbr.rel (0) target = $region5
    $region4: #{decoder_layer_forward.7} parent=1 // pred_region
      _
    $region5: #{decoder_layer_forward.7} parent=1 // pred_fallthru
      _
    // Predicated region
    $region6: #{decoder_layer_forward.7} parent=1 // pred_check
      _
    $region7: #{decoder_layer_forward.7} parent=1 // pred_check_branch
      %16 = sbr.rel (0) target = $region9
    $region8: #{decoder_layer_forward.7} parent=1 // pred_region
      _
    $region9: #{decoder_layer_forward.7} parent=1 // pred_fallthru
      _
    // Predicated region
    $region10: #{decoder_layer_forward.7} parent=1 // pred_check
      _
    $region11: #{decoder_layer_forward.7} parent=1 // pred_check_branch
      %18 = sbr.rel (0) target = $region13
    $region12: #{decoder_layer_forward.7} parent=1 // pred_region
      _
    $region13: #{decoder_layer_forward.7} parent=1 // pred_fallthru
      _
    // Predicated region
    $region14: #{decoder_layer_forward.7} parent=1 // pred_check
      _
    $region15: #{decoder_layer_forward.7} parent=1 // pred_check_branch
      %20 = sbr.rel (0) target = $region17
    $region16: #{decoder_layer_forward.7} parent=1 // pred_region
      _
    $region17: #{decoder_layer_forward.7} parent=1 // pred_fallthru
      _
    // Predicated region
    $region18: #{decoder_layer_forward.7} parent=1 // pred_check
      _
    $region19: #{decoder_layer_forward.7} parent=1 // pred_check_branch
      %22 = sbr.rel (0) target = $region21
    $region20: #{decoder_layer_forward.7} parent=1 // pred_region
      _
    $region21: #{decoder_layer_forward.7} parent=1 // pred_fallthru
      _
    %p24 = scmp.eq.s32.totalorder 0, 0
    // Predicated region
    $region22: #{decoder_layer_forward.7} parent=1 // pred_check
      %p25 = pneg %p24
    $region23: #{decoder_layer_forward.7} parent=1 // pred_check_branch
      %27 = sbr.rel (%p25) target = $region25
    $region24: #{decoder_layer_forward.7} parent=1 // pred_region
      %v28 = vld [vmem:[%s0] sm:$0xff]
      %vm29 = vcmask 261120
      %v30 = vsel %vm29, %v28, 0.0
      %31 = vadd.xlane.f32.xlu0 %v30
      %v32 = vpop.xlane.xlu0 %31
      %v33 = vrcp.pop 32.0
      %v34 = vmul.f32 %v32, %v33
      %v35 = vsub.f32 %v28, %v34
      %v36 = vmul.f32 %v35, %v35
      %v37 = vsel %vm29, %v36, 0.0
      %38 = vadd.xlane.f32.xlu0 %v37
      %v39 = vpop.xlane.xlu0 %38
      %v40 = vmul.f32 %v39, %v33
      %v41 = vadd.f32 %v40, 1e-06
      %v42 = vrsqrt.pop %v41
      %v43 = vmul.f32 %v35, %v42
      %v44 = vld [vmem:[%s1] sm:$0x1]
      %v46 = vlaneseq
      %v47 = vshrl.u32 %v46, 7
      %v48 = vsub.s32 0, %v47
      %v49 = vrot.slane %v44, %v48
      %v51 = vmul.f32 %v43, %v49
      %v52 = vld [vmem:[%s2] sm:$0x1]
      %v54 = vlaneseq
      %v55 = vshrl.u32 %v54, 7
      %v56 = vsub.s32 0, %v55
      %v57 = vrot.slane %v52, %v56
      %v59 = vadd.f32 %v51, %v57
      %v60 = vpack.c.bf16 %v59, %v59
      %vm61 = vcmask 257024
      %62 = vst.msk [vmem:[#allocation2] sm:$0xf] %vm61, %v60
      %63 = vst.msk [vmem:[#allocation3] sm:$0xff] %vm29, %v59
    $region25: #{decoder_layer_forward.7} parent=1 // pred_fallthru
      _
    %v64 = vld [vmem:[#allocation2] sm:$0xf]
    %v65 = vld [vmem:[%s3] sm:$0xf]
    %v66 = vld [vmem:[%s3 + $0x4] sm:$0xf]
    %v67 = vld [vmem:[%s3 + $0x8] sm:$0xf]
    %v68 = vld [vmem:[%s3 + $0xc] sm:$0xf]
    %v69 = vld [vmem:[%s4] sm:$0x1]
    %v71 = vlaneseq
    %v72 = vshrl.u32 %v71, 7
    %v73 = vsub.s32 0, %v72
    %v74 = vrot.slane %v69, %v73
    %v80 = vunpack.c.l.b16 %v65
    %v81 = vunpack.c.l.b16 %v66
    %v82 = vunpack.c.l.b16 %v67
    %v83 = vunpack.c.l.b16 %v68
    %v84 = vpack.c.b16 %v81, %v80
    %v85 = vpack.c.b16 %v83, %v82
    %vm88 = vcmask 261120
    %v90 = vsel %vm88, %v64, 0
    %92 = vmatprep.subr.bf16.mxu0 0
    %93 = vmatpush1.bf16.msra.mxu0 0
    %94 = vmatprep.subr.bf16.mxu0 0
    %95 = vmatpush1.bf16.msra.mxu0 0
    %96 = vmatprep.subr.bf16.mxu0 0
    %97 = vmatpush1.bf16.msra.mxu0 0
    %98 = vmatprep.subr.bf16.mxu0 0
    %99 = vmatpush1.bf16.msra.mxu0 0
    %100 = vmatprep.subr.bf16.mxu0 0
    %101 = vmatpush1.bf16.msra.mxu0 0
    %102 = vmatprep.subr.bf16.mxu0 0
    %103 = vmatpush1.bf16.msra.mxu0 0
    %104 = vmatprep.subr.bf16.mxu0 0
    %105 = vmatpush1.bf16.msra.mxu0 %v85
    %106 = vmatprep.subr.bf16.mxu0 0
    %107 = vmatpush1.bf16.msra.mxu0 %v84
    %108 = vmatprep.subr.bf16.mxu0 0
    %109 = vmatpush2.bf16.msra.mxu0 0
    %110 = vmatprep.subr.bf16.mxu0 0
    %111 = vmatpush2.bf16.msra.mxu0 0
    %112 = vmatprep.subr.bf16.mxu0 0
    %113 = vmatpush2.bf16.msra.mxu0 0
    %114 = vmatprep.subr.bf16.mxu0 0
    %115 = vmatpush2.bf16.msra.mxu0 0
    %116 = vmatprep.subr.bf16.mxu0 0
    %117 = vmatpush2.bf16.msra.mxu0 0
    %118 = vmatprep.subr.bf16.mxu0 0
    %119 = vmatpush2.bf16.msra.mxu0 0
    %120 = vmatprep.subr.bf16.mxu0 0
    %121 = vmatpush2.bf16.msra.mxu0 0
    %122 = vmatprep.subr.bf16.mxu0 0
    %123 = vmatpush2.bf16.msra.mxu0 0
    %124 = vmatprep.mubr.bf16.mxu0 0
    %125 = vmatmul.mubr.bf16.gmra.mxu0 %v90
    %v126 = vpop.f32.mrf.mxu0
    %v127 = vadd.f32 %v74, %v126
    %v128 = vpop.f32.mrf.mxu0
    %v129 = vpop.f32.mrf.mxu0
    %v130 = vpop.f32.mrf.mxu0
    %131 = vdwg.mxu0
    %v132 = vpack.c.bf16 %v127, %v127
    %vm133 = vcmask 781312
    %134 = vst.msk [vmem:[%s5] sm:$0xf] %vm133, %v132
    // Predicated region
    $region26: #{decoder_layer_forward.7} parent=1 // pred_check
      _
    $region27: #{decoder_layer_forward.7} parent=1 // pred_check_branch
      %136 = sbr.rel (0) target = $region29
    $region28: #{decoder_layer_forward.7} parent=1 // pred_region
      _
    $region29: #{decoder_layer_forward.7} parent=1 // pred_fallthru
      _
    // Predicated region
    $region30: #{decoder_layer_forward.7} parent=1 // pred_check
      _
    $region31: #{decoder_layer_forward.7} parent=1 // pred_check_branch
      %138 = sbr.rel (0) target = $region33
    $region32: #{decoder_layer_forward.7} parent=1 // pred_region
      %s140 = ssub.s32 128, 128
      %141 = vsyncadd [#allocation4], %s140
      %s143 = sshll.u32 [#allocation3], 4
      %s144 = int_to_ptr.vmem [resolvable:$true] %s143
      %146 = dma.vmem_to_hbm [thread:$0]  %s144, 128, %s6, [#allocation4]
    $region33: #{decoder_layer_forward.7} parent=1 // pred_fallthru
      _
    // Predicated region
    $region34: #{decoder_layer_forward.7} parent=1 // pred_check
      _
    $region35: #{decoder_layer_forward.7} parent=1 // pred_check_branch
      %148 = sbr.rel (0) target = $region37
    $region36: #{decoder_layer_forward.7} parent=1 // pred_region
      _
    $region37: #{decoder_layer_forward.7} parent=1 // pred_fallthru
      _
    // Predicated region
    $region38: #{decoder_layer_forward.7} parent=1 // pred_check
      _
    $region39: #{decoder_layer_forward.7} parent=1 // pred_check_branch
      %150 = sbr.rel (0) target = $region41
    $region40: #{decoder_layer_forward.7} parent=1 // pred_region
      %151 = dma.done [#allocation4], 128
    $region41: #{decoder_layer_forward.7} parent=1 // pred_fallthru
      _
    %152 = vsyncpa [#allocation4], 1

// kernel: decoder_layer_forward.8
$region0: #{decoder_layer_forward.8}
  #allocation0 [shape = 'u32[]', space=smem, size = 0x4, offset = 0x4, fixed_abs, tag = 'smem constant byte address 0x4 - core index']
  #allocation1 [shape = 'u32[144,128]{1,0:T(1,128)}', space=vmem, size = 0x12000, scoped, tag = 'internal scratch']
  %s0 = inlined_call_operand.vmem [shape: bf16[2,4,96], index: 0, kind: input, shape index: {}]
  %s1 = inlined_call_operand.vmem [shape: s8[2,4,4], index: 1, kind: input, shape index: {}]
  %s2 = inlined_call_operand.vmem [shape: f32[2,4,32], index: 2, kind: input, shape index: {}]
  %s3 = inlined_call_operand.vmem [shape: bf16[32,32], index: 3, kind: input, shape index: {}]
  %s4 = inlined_call_operand.vmem [shape: f32[1,32], index: 4, kind: input, shape index: {}]
  %s5 = inlined_call_operand.vmem [shape: f32[1,32], index: 5, kind: input, shape index: {}]
  %s6 = inlined_call_operand.vmem [shape: f32[1,32], index: 6, kind: input, shape index: {}]
  %s7 = inlined_call_operand.vmem [shape: f32[2,4,32], index: 7, kind: output, shape index: {0}]
  %s8 = inlined_call_operand.vmem [shape: bf16[2,4,32], index: 8, kind: output, shape index: {1}]
  %9 = xla_tuple %s7, %s8
  %s10 = sld [smem:[#allocation0]]
  $region69: #{decoder_layer_forward.8} parent=0
    _
  %s12 = ssub.s32 1, %s10
  %s13 = scalar_select 0, %s12, %s10
  loop: start=0, step=1, limit=4
  $region2: #{decoder_layer_forward.8} parent=0 // loop_pre_header
    _
  $region3: #{decoder_layer_forward.8} parent=0 // loop_header
    %s15 = sphi 0, %s19
    %p16 = scmp.ge.s32.totalorder %s15, 4
    %s22 = sphi 0, %s34
    %s23 = sphi 0, %s30
    %s24 = sphi 0, %s22
    %s25 = sphi 0, %s23
    %s26 = sphi 0, %s24
    %s27 = sphi 0, %s25
    %s37 = sphi 0, %s39
    %s40 = sphi 0, %s37
    %s41 = sphi 0, %s40
    %s57 = sphi 0, %s41
    %s65 = sphi 0, %s67
    %s68 = sphi 0, %s65
    %s69 = sphi 0, %s68
    %s85 = sphi 0, %s69
    %s93 = sphi 0, %s95
    %s96 = sphi 0, %s93
    %s97 = sphi 0, %s96
    %s113 = sphi 0, %s97
    %s117 = sphi 0, %s117
    %s119 = sphi 0, %s117
    %s120 = sphi 0, %s119
    %s134 = sphi 0, %s120
    %s138 = sphi 0, %s138
    %s140 = sphi 0, %s138
    %s141 = sphi 0, %s140
    %s155 = sphi 0, %s141
    %s159 = sphi 0, %s159
    %s161 = sphi 0, %s159
    %s162 = sphi 0, %s161
    %s176 = sphi 0, %s162
    %s180 = sphi 0, %s180
    %s182 = sphi 0, %s180
    %s183 = sphi 0, %s182
    %s197 = sphi 0, %s183
    %s205 = sphi 0, %s207
    %s208 = sphi 0, %s205
    %s209 = sphi 0, %s208
    %s225 = sphi 0, %s209
    %s233 = sphi 0, %s235
    %s236 = sphi 0, %s233
    %s237 = sphi 0, %s236
    %s253 = sphi 0, %s237
  $region4: #{decoder_layer_forward.8} parent=0 // loop_header_branch
    %18 = sbr.rel (%p16) target = $region8
  $region5: #{decoder_layer_forward.8} parent=0 // loop_body
    %s20 = ssub.s32 %s15, 1
    %s21 = ssub.s32 %s15, 2
    %s28 = sadd.s32 1, %s23
    %p29 = scmp.ge.s32.totalorder %s28, 1
    %s30 = scalar_select %p29, 0, %s28
    %s31 = sadd.s32 1, %s22
    %s32 = scalar_select %p29, %s31, %s22
    %p33 = scmp.ge.s32.totalorder %s32, 2
    %s34 = scalar_select %p33, 0, %s32
    %s35 = ssub.s32 %s22, %s34
    %p36 = scmp.eq.s32.totalorder %s35, 0
    %s38 = sadd.s32 %s37, 1
    %s39 = scalar_select %p36, %s37, %s38
    %p42 = pneg %p36
    %p43 = scmp.eq.s32.totalorder %s15, 1
    %p44 = por %p42, %p43
    %p45 = scmp.ne.s32.totalorder %s37, %s40
    %p46 = scmp.eq.s32.totalorder %s15, 0
    %p47 = por %p45, %p46
    %p48 = scmp.ne.s32.totalorder %s37, %s40
    %p49 = scmp.eq.s32.totalorder %s20, 1
    %p50 = por %p48, %p49
    %p51 = scmp.ne.s32.totalorder %s40, %s41
    %p52 = scmp.eq.s32.totalorder %s20, 0
    %p53 = por %p51, %p52
    %p54 = scmp.ne.s32.totalorder %s40, %s41
    %p55 = scmp.eq.s32.totalorder %s21, 1
    %p56 = por %p54, %p55
    %p58 = scmp.ne.s32.totalorder %s41, %s57
    %p59 = scmp.eq.s32.totalorder %s21, 0
    %p60 = por %p58, %p59
    %s61 = ssub.s32 %s22, %s34
    %s62 = ssub.s32 %s23, %s30
    %s63 = sor.u32 %s61, %s62
    %p64 = scmp.eq.s32.totalorder %s63, 0
    %s66 = sadd.s32 %s65, 1
    %s67 = scalar_select %p64, %s65, %s66
    %p70 = pneg %p64
    %p71 = scmp.eq.s32.totalorder %s15, 1
    %p72 = por %p70, %p71
    %p73 = scmp.ne.s32.totalorder %s65, %s68
    %p74 = scmp.eq.s32.totalorder %s15, 0
    %p75 = por %p73, %p74
    %p76 = scmp.ne.s32.totalorder %s65, %s68
    %p77 = scmp.eq.s32.totalorder %s20, 1
    %p78 = por %p76, %p77
    %p79 = scmp.ne.s32.totalorder %s68, %s69
    %p80 = scmp.eq.s32.totalorder %s20, 0
    %p81 = por %p79, %p80
    %p82 = scmp.ne.s32.totalorder %s68, %s69
    %p83 = scmp.eq.s32.totalorder %s21, 1
    %p84 = por %p82, %p83
    %p86 = scmp.ne.s32.totalorder %s69, %s85
    %p87 = scmp.eq.s32.totalorder %s21, 0
    %p88 = por %p86, %p87
    %s89 = ssub.s32 %s22, %s34
    %s90 = ssub.s32 %s23, %s30
    %s91 = sor.u32 %s89, %s90
    %p92 = scmp.eq.s32.totalorder %s91, 0
    %s94 = sadd.s32 %s93, 1
    %s95 = scalar_select %p92, %s93, %s94
    %p98 = pneg %p92
    %p99 = scmp.eq.s32.totalorder %s15, 1
    %p100 = por %p98, %p99
    %p101 = scmp.ne.s32.totalorder %s93, %s96
    %p102 = scmp.eq.s32.totalorder %s15, 0
    %p103 = por %p101, %p102
    %p104 = scmp.ne.s32.totalorder %s93, %s96
    %p105 = scmp.eq.s32.totalorder %s20, 1
    %p106 = por %p104, %p105
    %p107 = scmp.ne.s32.totalorder %s96, %s97
    %p108 = scmp.eq.s32.totalorder %s20, 0
    %p109 = por %p107, %p108
    %p110 = scmp.ne.s32.totalorder %s96, %s97
    %p111 = scmp.eq.s32.totalorder %s21, 1
    %p112 = por %p110, %p111
    %p114 = scmp.ne.s32.totalorder %s97, %s113
    %p115 = scmp.eq.s32.totalorder %s21, 0
    %p116 = por %p114, %p115
    %s118 = sadd.s32 %s117, 1
    %p121 = scmp.eq.s32.totalorder %s15, 1
    %p122 = scmp.ne.s32.totalorder %s117, %s119
    %p123 = scmp.eq.s32.totalorder %s15, 0
    %p124 = por %p122, %p123
    %p125 = scmp.ne.s32.totalorder %s117, %s119
    %p126 = scmp.eq.s32.totalorder %s20, 1
    %p127 = por %p125, %p126
    %p128 = scmp.ne.s32.totalorder %s119, %s120
    %p129 = scmp.eq.s32.totalorder %s20, 0
    %p130 = por %p128, %p129
    %p131 = scmp.ne.s32.totalorder %s119, %s120
    %p132 = scmp.eq.s32.totalorder %s21, 1
    %p133 = por %p131, %p132
    %p135 = scmp.ne.s32.totalorder %s120, %s134
    %p136 = scmp.eq.s32.totalorder %s21, 0
    %p137 = por %p135, %p136
    %s139 = sadd.s32 %s138, 1
    %p142 = scmp.eq.s32.totalorder %s15, 1
    %p143 = scmp.ne.s32.totalorder %s138, %s140
    %p144 = scmp.eq.s32.totalorder %s15, 0
    %p145 = por %p143, %p144
    %p146 = scmp.ne.s32.totalorder %s138, %s140
    %p147 = scmp.eq.s32.totalorder %s20, 1
    %p148 = por %p146, %p147
    %p149 = scmp.ne.s32.totalorder %s140, %s141
    %p150 = scmp.eq.s32.totalorder %s20, 0
    %p151 = por %p149, %p150
    %p152 = scmp.ne.s32.totalorder %s140, %s141
    %p153 = scmp.eq.s32.totalorder %s21, 1
    %p154 = por %p152, %p153
    %p156 = scmp.ne.s32.totalorder %s141, %s155
    %p157 = scmp.eq.s32.totalorder %s21, 0
    %p158 = por %p156, %p157
    %s160 = sadd.s32 %s159, 1
    %p163 = scmp.eq.s32.totalorder %s15, 1
    %p164 = scmp.ne.s32.totalorder %s159, %s161
    %p165 = scmp.eq.s32.totalorder %s15, 0
    %p166 = por %p164, %p165
    %p167 = scmp.ne.s32.totalorder %s159, %s161
    %p168 = scmp.eq.s32.totalorder %s20, 1
    %p169 = por %p167, %p168
    %p170 = scmp.ne.s32.totalorder %s161, %s162
    %p171 = scmp.eq.s32.totalorder %s20, 0
    %p172 = por %p170, %p171
    %p173 = scmp.ne.s32.totalorder %s161, %s162
    %p174 = scmp.eq.s32.totalorder %s21, 1
    %p175 = por %p173, %p174
    %p177 = scmp.ne.s32.totalorder %s162, %s176
    %p178 = scmp.eq.s32.totalorder %s21, 0
    %p179 = por %p177, %p178
    %s181 = sadd.s32 %s180, 1
    %p184 = scmp.eq.s32.totalorder %s15, 1
    %p185 = scmp.ne.s32.totalorder %s180, %s182
    %p186 = scmp.eq.s32.totalorder %s15, 0
    %p187 = por %p185, %p186
    %p188 = scmp.ne.s32.totalorder %s180, %s182
    %p189 = scmp.eq.s32.totalorder %s20, 1
    %p190 = por %p188, %p189
    %p191 = scmp.ne.s32.totalorder %s182, %s183
    %p192 = scmp.eq.s32.totalorder %s20, 0
    %p193 = por %p191, %p192
    %p194 = scmp.ne.s32.totalorder %s182, %s183
    %p195 = scmp.eq.s32.totalorder %s21, 1
    %p196 = por %p194, %p195
    %p198 = scmp.ne.s32.totalorder %s183, %s197
    %p199 = scmp.eq.s32.totalorder %s21, 0
    %p200 = por %p198, %p199
    %s201 = ssub.s32 %s22, %s34
    %s202 = ssub.s32 %s23, %s30
    %s203 = sor.u32 %s201, %s202
    %p204 = scmp.eq.s32.totalorder %s203, 0
    %s206 = sadd.s32 %s205, 1
    %s207 = scalar_select %p204, %s205, %s206
    %p210 = pneg %p204
    %p211 = scmp.eq.s32.totalorder %s15, 1
    %p212 = por %p210, %p211
    %p213 = scmp.ne.s32.totalorder %s205, %s208
    %p214 = scmp.eq.s32.totalorder %s15, 0
    %p215 = por %p213, %p214
    %p216 = scmp.ne.s32.totalorder %s205, %s208
    %p217 = scmp.eq.s32.totalorder %s20, 1
    %p218 = por %p216, %p217
    %p219 = scmp.ne.s32.totalorder %s208, %s209
    %p220 = scmp.eq.s32.totalorder %s20, 0
    %p221 = por %p219, %p220
    %p222 = scmp.ne.s32.totalorder %s208, %s209
    %p223 = scmp.eq.s32.totalorder %s21, 1
    %p224 = por %p222, %p223
    %p226 = scmp.ne.s32.totalorder %s209, %s225
    %p227 = scmp.eq.s32.totalorder %s21, 0
    %p228 = por %p226, %p227
    %s229 = ssub.s32 %s22, %s34
    %s230 = ssub.s32 %s23, %s30
    %s231 = sor.u32 %s229, %s230
    %p232 = scmp.eq.s32.totalorder %s231, 0
    %s234 = sadd.s32 %s233, 1
    %s235 = scalar_select %p232, %s233, %s234
    %p238 = pneg %p232
    %p239 = scmp.eq.s32.totalorder %s15, 1
    %p240 = por %p238, %p239
    %p241 = scmp.ne.s32.totalorder %s233, %s236
    %p242 = scmp.eq.s32.totalorder %s15, 0
    %p243 = por %p241, %p242
    %p244 = scmp.ne.s32.totalorder %s233, %s236
    %p245 = scmp.eq.s32.totalorder %s20, 1
    %p246 = por %p244, %p245
    %p247 = scmp.ne.s32.totalorder %s236, %s237
    %p248 = scmp.eq.s32.totalorder %s20, 0
    %p249 = por %p247, %p248
    %p250 = scmp.ne.s32.totalorder %s236, %s237
    %p251 = scmp.eq.s32.totalorder %s21, 1
    %p252 = por %p250, %p251
    %p254 = scmp.ne.s32.totalorder %s237, %s253
    %p255 = scmp.eq.s32.totalorder %s21, 0
    %p256 = por %p254, %p255
    %p257 = scmp.le.s32.totalorder 1, %s15
    %p258 = scmp.lt.s32.totalorder %s15, 3
    %p259 = pnand %p257, %p258
    %p260 = pneg %p259
    // Predicated region
    $region9: #{decoder_layer_forward.8} parent=5 // pred_check
      _
    $region10: #{decoder_layer_forward.8} parent=5 // pred_check_branch
      %262 = sbr.rel (%p259) target = $region12
    $region11: #{decoder_layer_forward.8} parent=5 // pred_region
      %s263 = ssub.s32 %s15, 1
      // Predicated region
      $region13: #{decoder_layer_forward.8} parent=11 // pred_check
        %p264 = pneg %p130
      $region14: #{decoder_layer_forward.8} parent=11 // pred_check_branch
        %266 = sbr.rel (%p264) target = $region16
      $region15: #{decoder_layer_forward.8} parent=11 // pred_region
        _
      $region16: #{decoder_layer_forward.8} parent=11 // pred_fallthru
        _
      // Predicated region
      $region17: #{decoder_layer_forward.8} parent=11 // pred_check
        %p267 = pneg %p151
      $region18: #{decoder_layer_forward.8} parent=11 // pred_check_branch
        %269 = sbr.rel (%p267) target = $region20
      $region19: #{decoder_layer_forward.8} parent=11 // pred_region
        _
      $region20: #{decoder_layer_forward.8} parent=11 // pred_fallthru
        _
      // Predicated region
      $region21: #{decoder_layer_forward.8} parent=11 // pred_check
        %p270 = pneg %p172
      $region22: #{decoder_layer_forward.8} parent=11 // pred_check_branch
        %272 = sbr.rel (%p270) target = $region24
      $region23: #{decoder_layer_forward.8} parent=11 // pred_region
        _
      $region24: #{decoder_layer_forward.8} parent=11 // pred_fallthru
        _
      // Predicated region
      $region25: #{decoder_layer_forward.8} parent=11 // pred_check
        %p273 = pneg %p193
      $region26: #{decoder_layer_forward.8} parent=11 // pred_check_branch
        %275 = sbr.rel (%p273) target = $region28
      $region27: #{decoder_layer_forward.8} parent=11 // pred_region
        _
      $region28: #{decoder_layer_forward.8} parent=11 // pred_fallthru
        _
    $region12: #{decoder_layer_forward.8} parent=5 // pred_fallthru
      _
    %p276 = scmp.lt.s32.totalorder %s15, 2
    // Predicated region
    $region29: #{decoder_layer_forward.8} parent=5 // pred_check
      %p277 = pneg %p276
    $region30: #{decoder_layer_forward.8} parent=5 // pred_check_branch
      %279 = sbr.rel (%p277) target = $region32
    $region31: #{decoder_layer_forward.8} parent=5 // pred_region
      // Predicated region
      $region33: #{decoder_layer_forward.8} parent=31 // pred_check
        %p280 = pneg %p47
      $region34: #{decoder_layer_forward.8} parent=31 // pred_check_branch
        %282 = sbr.rel (%p280) target = $region36
      $region35: #{decoder_layer_forward.8} parent=31 // pred_region
        %p283 = scmp.lt.s32.totalorder %s22, 1
        %s284 = scalar_select %p283, %s22, 1
        %s285 = smul.addr %s284, 2
        %s286 = scalar_lea.vmem %s0, %s285
      $region36: #{decoder_layer_forward.8} parent=31 // pred_fallthru
        _
      // Predicated region
      $region37: #{decoder_layer_forward.8} parent=31 // pred_check
        %p287 = pneg %p75
      $region38: #{decoder_layer_forward.8} parent=31 // pred_check_branch
        %289 = sbr.rel (%p287) target = $region40
      $region39: #{decoder_layer_forward.8} parent=31 // pred_region
        %p290 = scmp.lt.s32.totalorder %s22, 1
        %s291 = scalar_select %p290, %s22, 1
        %p292 = scmp.lt.s32.totalorder %s23, 0
        %s293 = scalar_select %p292, %s23, 0
        %s294 = sadd.s32 %s293, %s291
        %s295 = scalar_lea.vmem %s1, %s294
      $region40: #{decoder_layer_forward.8} parent=31 // pred_fallthru
        _
      // Predicated region
      $region41: #{decoder_layer_forward.8} parent=31 // pred_check
        %p296 = pneg %p103
      $region42: #{decoder_layer_forward.8} parent=31 // pred_check_branch
        %298 = sbr.rel (%p296) target = $region44
      $region43: #{decoder_layer_forward.8} parent=31 // pred_region
        %p299 = scmp.lt.s32.totalorder %s22, 1
        %s300 = scalar_select %p299, %s22, 1
        %p301 = scmp.lt.s32.totalorder %s23, 0
        %s302 = scalar_select %p301, %s23, 0
        %s303 = sadd.s32 %s302, %s300
        %s304 = smul.addr %s303, 4
        %s305 = scalar_lea.vmem %s2, %s304
      $region44: #{decoder_layer_forward.8} parent=31 // pred_fallthru
        _
    $region32: #{decoder_layer_forward.8} parent=5 // pred_fallthru
      _
    %p306 = scmp.le.s32.totalorder 1, %s15
    %p307 = scmp.lt.s32.totalorder %s15, 3
    %p308 = pnand %p306, %p307
    %p309 = pneg %p308
    // Predicated region
    $region45: #{decoder_layer_forward.8} parent=5 // pred_check
      _
    $region46: #{decoder_layer_forward.8} parent=5 // pred_check_branch
      %311 = sbr.rel (%p308) target = $region48
    $region47: #{decoder_layer_forward.8} parent=5 // pred_region
      %s312 = ssub.s32 %s15, 1
      %p313 = scmp.lt.s32.totalorder %s24, 1
      %s314 = scalar_select %p313, %s24, 1
      %s315 = smul.addr %s314, 2
      %s316 = scalar_lea.vmem %s0, %s315
      %p317 = pneg %p53
      %p318 = pneg %p50
      %p319 = scmp.lt.s32.totalorder %s24, 1
      %s320 = scalar_select %p319, %s24, 1
      %p321 = scmp.lt.s32.totalorder %s25, 0
      %s322 = scalar_select %p321, %s25, 0
      %s323 = sadd.s32 %s322, %s320
      %s324 = scalar_lea.vmem %s1, %s323
      %p325 = pneg %p81
      %p326 = pneg %p78
      %p327 = scmp.lt.s32.totalorder %s24, 1
      %s328 = scalar_select %p327, %s24, 1
      %p329 = scmp.lt.s32.totalorder %s25, 0
      %s330 = scalar_select %p329, %s25, 0
      %s331 = sadd.s32 %s330, %s328
      %s332 = smul.addr %s331, 4
      %s333 = scalar_lea.vmem %s2, %s332
      %p334 = pneg %p109
      %p335 = pneg %p106
      %p336 = pneg %p130
      %p337 = pneg %p127
      %p338 = pneg %p151
      %p339 = pneg %p148
      %p340 = pneg %p172
      %p341 = pneg %p169
      %p342 = pneg %p193
      %p343 = pneg %p190
      %p344 = pneg %p221
      %p345 = pneg %p218
      %p346 = scmp.lt.s32.totalorder %s24, 1
      %s347 = scalar_select %p346, %s24, 1
      %p348 = scmp.lt.s32.totalorder %s25, 0
      %s349 = scalar_select %p348, %s25, 0
      %s350 = sadd.s32 %s349, %s347
      %s351 = smul.addr %s350, 4
      %s352 = scalar_lea.vmem %s7, %s351
      %p353 = pneg %p249
      %p354 = pneg %p246
      %p355 = scmp.lt.s32.totalorder %s24, 1
      %s356 = scalar_select %p355, %s24, 1
      %p357 = scmp.lt.s32.totalorder %s25, 0
      %s358 = scalar_select %p357, %s25, 0
      %s359 = sadd.s32 %s358, %s356
      %s360 = smul.addr %s359, 2
      %s361 = scalar_lea.vmem %s8, %s360
      %p362 = scmp.lt.s32.totalorder %s24, 1
      %s363 = scalar_select %p362, %s24, 1
      %s364 = smul.addr %s363, 2
      %s365 = scalar_lea.vmem %s0, %s364
      %p366 = scmp.lt.s32.totalorder %s24, 1
      %s367 = scalar_select %p366, %s24, 1
      %p368 = scmp.lt.s32.totalorder %s25, 0
      %s369 = scalar_select %p368, %s25, 0
      %s370 = sadd.s32 %s369, %s367
      %s371 = scalar_lea.vmem %s1, %s370
      %p372 = scmp.lt.s32.totalorder %s24, 1
      %s373 = scalar_select %p372, %s24, 1
      %p374 = scmp.lt.s32.totalorder %s25, 0
      %s375 = scalar_select %p374, %s25, 0
      %s376 = sadd.s32 %s375, %s373
      %s377 = smul.addr %s376, 4
      %s378 = scalar_lea.vmem %s2, %s377
      %p379 = scmp.lt.s32.totalorder %s24, 1
      %s380 = scalar_select %p379, %s24, 1
      %p381 = scmp.lt.s32.totalorder %s25, 0
      %s382 = scalar_select %p381, %s25, 0
      %s383 = sadd.s32 %s382, %s380
      %s384 = smul.addr %s383, 4
      %s385 = scalar_lea.vmem %s7, %s384
      %p386 = scmp.lt.s32.totalorder %s24, 1
      %s387 = scalar_select %p386, %s24, 1
      %p388 = scmp.lt.s32.totalorder %s25, 0
      %s389 = scalar_select %p388, %s25, 0
      %s390 = sadd.s32 %s389, %s387
      %s391 = smul.addr %s390, 2
      %s392 = scalar_lea.vmem %s8, %s391
      %s394 = smul.u32 %s25, 4
      %s395 = sshra.s32 %s394, 2
      %s396 = sand.u32 %s394, 3
      %s397 = smul.addr %s395, 2
      %s398 = scalar_lea.vmem %s365, %s397
      %v399 = vld [vmem:[%s398] sm:$0x3]
      %v400 = vld [vmem:[%s365] sm:$0x3]
      %v401 = vld [vmem:[%s371] sm:$0x1]
      %v402 = vunpack.c.0.s8 %v401
      %v403 = vcvt.s32.f32 %v402
      %v404 = vlaneseq
      %v405 = vshrl.u32 %v404, 7
      %v406 = vstv %s394
      %v407 = vadd.s32 %v406, %v405
      %v408 = vlaneseq
      %v409 = vand.u32 %v408, 127
      %vm410 = vcmp.gt.s32.totalorder %v409, %v407
      %v411 = vsel %vm410, 1, 0
      %v412 = vcvt.s32.f32 %v411
      %v413 = vmax.f32 %v403, %v412
      %v414 = vmul.f32 %v413, -1e+18
      %v417 = vunpack.c.l.s4 1983009808
      %v418 = vunpack.c.0.s8 %v417
      %v419 = vlaneseq
      %v420 = vshrl.u32 %v419, 7
      %v421 = vsub.s32 %v418, %v420
      %v422 = vrot.slane %v400, %v421
      %423 = vrot.lane.b32.xlu0 %v422, 96
      %v424 = vpop.permute.xlu0 %423
      %vm425 = vcmask 64512
      %v427 = vsel %vm425, %v399, 0
      %v430 = vsel %vm425, %v424, 0
      %432 = vmatprep.subr.bf16.mxu0 0
      %433 = vmatpush1.bf16.xpose.msra.mxu0 0
      %434 = vmatprep.subr.bf16.mxu0 0
      %435 = vmatpush1.bf16.xpose.msra.mxu0 0
      %436 = vmatprep.subr.bf16.mxu0 0
      %437 = vmatpush1.bf16.xpose.msra.mxu0 0
      %438 = vmatprep.subr.bf16.mxu0 0
      %439 = vmatpush1.bf16.xpose.msra.mxu0 0
      %440 = vmatprep.subr.bf16.mxu0 0
      %441 = vmatpush1.bf16.xpose.msra.mxu0 0
      %442 = vmatprep.subr.bf16.mxu0 0
      %443 = vmatpush1.bf16.xpose.msra.mxu0 0
      %444 = vmatprep.subr.bf16.mxu0 0
      %445 = vmatpush1.bf16.xpose.msra.mxu0 0
      %446 = vmatprep.subr.bf16.mxu0 0
      %447 = vmatpush1.bf16.xpose.msra.mxu0 %v430
      %448 = vmatprep.subr.bf16.mxu0 0
      %449 = vmatpush2.bf16.xpose.msra.mxu0 0
      %450 = vmatprep.subr.bf16.mxu0 0
      %451 = vmatpush2.bf16.xpose.msra.mxu0 0
      %452 = vmatprep.subr.bf16.mxu0 0
      %453 = vmatpush2.bf16.xpose.msra.mxu0 0
      %454 = vmatprep.subr.bf16.mxu0 0
      %455 = vmatpush2.bf16.xpose.msra.mxu0 0
      %456 = vmatprep.subr.bf16.mxu0 0
      %457 = vmatpush2.bf16.xpose.msra.mxu0 0
      %458 = vmatprep.subr.bf16.mxu0 0
      %459 = vmatpush2.bf16.xpose.msra.mxu0 0
      %460 = vmatprep.subr.bf16.mxu0 0
      %461 = vmatpush2.bf16.xpose.msra.mxu0 0
      %462 = vmatprep.subr.bf16.mxu0 0
      %463 = vmatpush2.bf16.xpose.msra.mxu0 0
      %464 = vmatprep.mubr.bf16.mxu0 0
      %465 = vmatmul.mubr.bf16.gmra.mxu0 %v427
      %v466 = vpop.f32.mrf.mxu0
      %v467 = vadd.f32 %v414, %v466
      %v468 = vpop.f32.mrf.mxu0
      %v469 = vpop.f32.mrf.mxu0
      %v470 = vpop.f32.mrf.mxu0
      %471 = vdwg.mxu0
      %vm472 = vcmask 27648
      %v473 = vsel %vm472, %v467, -inf
      %474 = vmax.xlane.f32.xlu0 %v473
      %v475 = vpop.xlane.xlu0 %474
      %v476 = vsub.f32 %v467, %v475
      %v477 = vmul.f32 %v476, 1.442695
      %v478 = vpow.pop %v477
      %v479 = vsel %vm472, %v478, 0.0
      %480 = vadd.xlane.f32.xlu0 %v479
      %v481 = vpop.xlane.xlu0 %480
      %v482 = vrcp.pop %v481
      %v483 = vmul.f32 %v478, %v482
      %v484 = vpack.c.bf16 %v483, %v483
      %485 = vrot.lane.b32.xlu0 %v422, 64
      %v486 = vpop.permute.xlu0 %485
      %vm487 = vcmask 31744
      %v489 = vsel %vm487, %v484, 0
      %vm491 = vcmask 1041408
      %v493 = vsel %vm491, %v486, 0
      %495 = vmatprep.subr.bf16.mxu0 0
      %496 = vmatpush1.bf16.msra.mxu0 0
      %497 = vmatprep.subr.bf16.mxu0 0
      %498 = vmatpush1.bf16.msra.mxu0 0
      %499 = vmatprep.subr.bf16.mxu0 0
      %500 = vmatpush1.bf16.msra.mxu0 0
      %501 = vmatprep.subr.bf16.mxu0 0
      %502 = vmatpush1.bf16.msra.mxu0 0
      %503 = vmatprep.subr.bf16.mxu0 0
      %504 = vmatpush1.bf16.msra.mxu0 0
      %505 = vmatprep.subr.bf16.mxu0 0
      %506 = vmatpush1.bf16.msra.mxu0 0
      %507 = vmatprep.subr.bf16.mxu0 0
      %508 = vmatpush1.bf16.msra.mxu0 0
      %509 = vmatprep.subr.bf16.mxu0 0
      %510 = vmatpush1.bf16.msra.mxu0 %v493
      %511 = vmatprep.subr.bf16.mxu0 0
      %512 = vmatpush2.bf16.msra.mxu0 0
      %513 = vmatprep.subr.bf16.mxu0 0
      %514 = vmatpush2.bf16.msra.mxu0 0
      %515 = vmatprep.subr.bf16.mxu0 0
      %516 = vmatpush2.bf16.msra.mxu0 0
      %517 = vmatprep.subr.bf16.mxu0 0
      %518 = vmatpush2.bf16.msra.mxu0 0
      %519 = vmatprep.subr.bf16.mxu0 0
      %520 = vmatpush2.bf16.msra.mxu0 0
      %521 = vmatprep.subr.bf16.mxu0 0
      %522 = vmatpush2.bf16.msra.mxu0 0
      %523 = vmatprep.subr.bf16.mxu0 0
      %524 = vmatpush2.bf16.msra.mxu0 0
      %525 = vmatprep.subr.bf16.mxu0 0
      %526 = vmatpush2.bf16.msra.mxu0 0
      %527 = vmatprep.mubr.bf16.mxu0 0
      %528 = vmatmul.mubr.bf16.gmra.mxu0 %v489
      %v529 = vpop.f32.mrf.mxu0
      %v530 = vadd.f32 0.0, %v529
      %v531 = vpop.f32.mrf.mxu0
      %v532 = vpop.f32.mrf.mxu0
      %v533 = vpop.f32.mrf.mxu0
      %534 = vdwg.mxu0
      %v535 = vpack.c.bf16 %v530, %v530
      %v538 = vunpack.c.l.s4 1983009808
      %v539 = vunpack.c.0.s8 %v538
      %v540 = vlaneseq
      %v541 = vshrl.u32 %v540, 7
      %v542 = vsub.s32 %v539, %v541
      %v543 = vrot.slane %v399, %v542
      %544 = vrot.lane.b32.xlu0 %v543, 120
      %v545 = vpop.permute.xlu0 %544
      %546 = vrot.lane.b32.xlu0 %v422, 88
      %v547 = vpop.permute.xlu0 %546
      %v549 = vsel %vm425, %v545, 0
      %v552 = vsel %vm425, %v547, 0
      %554 = vmatprep.subr.bf16.mxu0 0
      %555 = vmatpush1.bf16.xpose.msra.mxu0 0
      %556 = vmatprep.subr.bf16.mxu0 0
      %557 = vmatpush1.bf16.xpose.msra.mxu0 0
      %558 = vmatprep.subr.bf16.mxu0 0
      %559 = vmatpush1.bf16.xpose.msra.mxu0 0
      %560 = vmatprep.subr.bf16.mxu0 0
      %561 = vmatpush1.bf16.xpose.msra.mxu0 0
      %562 = vmatprep.subr.bf16.mxu0 0
      %563 = vmatpush1.bf16.xpose.msra.mxu0 0
      %564 = vmatprep.subr.bf16.mxu0 0
      %565 = vmatpush1.bf16.xpose.msra.mxu0 0
      %566 = vmatprep.subr.bf16.mxu0 0
      %567 = vmatpush1.bf16.xpose.msra.mxu0 0
      %568 = vmatprep.subr.bf16.mxu0 0
      %569 = vmatpush1.bf16.xpose.msra.mxu0 %v552
      %570 = vmatprep.subr.bf16.mxu0 0
      %571 = vmatpush2.bf16.xpose.msra.mxu0 0
      %572 = vmatprep.subr.bf16.mxu0 0
      %573 = vmatpush2.bf16.xpose.msra.mxu0 0
      %574 = vmatprep.subr.bf16.mxu0 0
      %575 = vmatpush2.bf16.xpose.msra.mxu0 0
      %576 = vmatprep.subr.bf16.mxu0 0
      %577 = vmatpush2.bf16.xpose.msra.mxu0 0
      %578 = vmatprep.subr.bf16.mxu0 0
      %579 = vmatpush2.bf16.xpose.msra.mxu0 0
      %580 = vmatprep.subr.bf16.mxu0 0
      %581 = vmatpush2.bf16.xpose.msra.mxu0 0
      %582 = vmatprep.subr.bf16.mxu0 0
      %583 = vmatpush2.bf16.xpose.msra.mxu0 0
      %584 = vmatprep.subr.bf16.mxu0 0
      %585 = vmatpush2.bf16.xpose.msra.mxu0 0
      %586 = vmatprep.mubr.bf16.mxu0 0
      %587 = vmatmul.mubr.bf16.gmra.mxu0 %v549
      %v588 = vpop.f32.mrf.mxu0
      %v589 = vadd.f32 %v414, %v588
      %v590 = vpop.f32.mrf.mxu0
      %v591 = vpop.f32.mrf.mxu0
      %v592 = vpop.f32.mrf.mxu0
      %593 = vdwg.mxu0
      %v594 = vsel %vm472, %v589, -inf
      %595 = vmax.xlane.f32.xlu0 %v594
      %v596 = vpop.xlane.xlu0 %595
      %v597 = vsub.f32 %v589, %v596
      %v598 = vmul.f32 %v597, 1.442695
      %v599 = vpow.pop %v598
      %v600 = vsel %vm472, %v599, 0.0
      %601 = vadd.xlane.f32.xlu0 %v600
      %v602 = vpop.xlane.xlu0 %601
      %v603 = vrcp.pop %v602
      %v604 = vmul.f32 %v599, %v603
      %v605 = vpack.c.bf16 %v604, %v604
      %606 = vrot.lane.b32.xlu0 %v422, 56
      %v607 = vpop.permute.xlu0 %606
      %v609 = vsel %vm487, %v605, 0
      %v612 = vsel %vm491, %v607, 0
      %614 = vmatprep.subr.bf16.mxu0 0
      %615 = vmatpush1.bf16.msra.mxu0 0
      %616 = vmatprep.subr.bf16.mxu0 0
      %617 = vmatpush1.bf16.msra.mxu0 0
      %618 = vmatprep.subr.bf16.mxu0 0
      %619 = vmatpush1.bf16.msra.mxu0 0
      %620 = vmatprep.subr.bf16.mxu0 0
      %621 = vmatpush1.bf16.msra.mxu0 0
      %622 = vmatprep.subr.bf16.mxu0 0
      %623 = vmatpush1.bf16.msra.mxu0 0
      %624 = vmatprep.subr.bf16.mxu0 0
      %625 = vmatpush1.bf16.msra.mxu0 0
      %626 = vmatprep.subr.bf16.mxu0 0
      %627 = vmatpush1.bf16.msra.mxu0 0
      %628 = vmatprep.subr.bf16.mxu0 0
      %629 = vmatpush1.bf16.msra.mxu0 %v612
      %630 = vmatprep.subr.bf16.mxu0 0
      %631 = vmatpush2.bf16.msra.mxu0 0
      %632 = vmatprep.subr.bf16.mxu0 0
      %633 = vmatpush2.bf16.msra.mxu0 0
      %634 = vmatprep.subr.bf16.mxu0 0
      %635 = vmatpush2.bf16.msra.mxu0 0
      %636 = vmatprep.subr.bf16.mxu0 0
      %637 = vmatpush2.bf16.msra.mxu0 0
      %638 = vmatprep.subr.bf16.mxu0 0
      %639 = vmatpush2.bf16.msra.mxu0 0
      %640 = vmatprep.subr.bf16.mxu0 0
      %641 = vmatpush2.bf16.msra.mxu0 0
      %642 = vmatprep.subr.bf16.mxu0 0
      %643 = vmatpush2.bf16.msra.mxu0 0
      %644 = vmatprep.subr.bf16.mxu0 0
      %645 = vmatpush2.bf16.msra.mxu0 0
      %646 = vmatprep.mubr.bf16.mxu0 0
      %647 = vmatmul.mubr.bf16.gmra.mxu0 %v609
      %v648 = vpop.f32.mrf.mxu0
      %v649 = vadd.f32 0.0, %v648
      %v650 = vpop.f32.mrf.mxu0
      %v651 = vpop.f32.mrf.mxu0
      %v652 = vpop.f32.mrf.mxu0
      %653 = vdwg.mxu0
      %v654 = vpack.c.bf16 %v649, %v649
      %655 = vrot.lane.b32.xlu0 %v543, 112
      %v656 = vpop.permute.xlu0 %655
      %657 = vrot.lane.b32.xlu0 %v422, 80
      %v658 = vpop.permute.xlu0 %657
      %v660 = vsel %vm425, %v656, 0
      %v663 = vsel %vm425, %v658, 0
      %665 = vmatprep.subr.bf16.mxu0 0
      %666 = vmatpush1.bf16.xpose.msra.mxu0 0
      %667 = vmatprep.subr.bf16.mxu0 0
      %668 = vmatpush1.bf16.xpose.msra.mxu0 0
      %669 = vmatprep.subr.bf16.mxu0 0
      %670 = vmatpush1.bf16.xpose.msra.mxu0 0
      %671 = vmatprep.subr.bf16.mxu0 0
      %672 = vmatpush1.bf16.xpose.msra.mxu0 0
      %673 = vmatprep.subr.bf16.mxu0 0
      %674 = vmatpush1.bf16.xpose.msra.mxu0 0
      %675 = vmatprep.subr.bf16.mxu0 0
      %676 = vmatpush1.bf16.xpose.msra.mxu0 0
      %677 = vmatprep.subr.bf16.mxu0 0
      %678 = vmatpush1.bf16.xpose.msra.mxu0 0
      %679 = vmatprep.subr.bf16.mxu0 0
      %680 = vmatpush1.bf16.xpose.msra.mxu0 %v663
      %681 = vmatprep.subr.bf16.mxu0 0
      %682 = vmatpush2.bf16.xpose.msra.mxu0 0
      %683 = vmatprep.subr.bf16.mxu0 0
      %684 = vmatpush2.bf16.xpose.msra.mxu0 0
      %685 = vmatprep.subr.bf16.mxu0 0
      %686 = vmatpush2.bf16.xpose.msra.mxu0 0
      %687 = vmatprep.subr.bf16.mxu0 0
      %688 = vmatpush2.bf16.xpose.msra.mxu0 0
      %689 = vmatprep.subr.bf16.mxu0 0
      %690 = vmatpush2.bf16.xpose.msra.mxu0 0
      %691 = vmatprep.subr.bf16.mxu0 0
      %692 = vmatpush2.bf16.xpose.msra.mxu0 0
      %693 = vmatprep.subr.bf16.mxu0 0
      %694 = vmatpush2.bf16.xpose.msra.mxu0 0
      %695 = vmatprep.subr.bf16.mxu0 0
      %696 = vmatpush2.bf16.xpose.msra.mxu0 0
      %697 = vmatprep.mubr.bf16.mxu0 0
      %698 = vmatmul.mubr.bf16.gmra.mxu0 %v660
      %v699 = vpop.f32.mrf.mxu0
      %v700 = vadd.f32 %v414, %v699
      %v701 = vpop.f32.mrf.mxu0
      %v702 = vpop.f32.mrf.mxu0
      %v703 = vpop.f32.mrf.mxu0
      %704 = vdwg.mxu0
      %v705 = vsel %vm472, %v700, -inf
      %706 = vmax.xlane.f32.xlu0 %v705
      %v707 = vpop.xlane.xlu0 %706
      %v708 = vsub.f32 %v700, %v707
      %v709 = vmul.f32 %v708, 1.442695
      %v710 = vpow.pop %v709
      %v711 = vsel %vm472, %v710, 0.0
      %712 = vadd.xlane.f32.xlu0 %v711
      %v713 = vpop.xlane.xlu0 %712
      %v714 = vrcp.pop %v713
      %v715 = vmul.f32 %v710, %v714
      %v716 = vpack.c.bf16 %v715, %v715
      %717 = vrot.lane.b32.xlu0 %v422, 48
      %v718 = vpop.permute.xlu0 %717
      %v720 = vsel %vm487, %v716, 0
      %v723 = vsel %vm491, %v718, 0
      %725 = vmatprep.subr.bf16.mxu0 0
      %726 = vmatpush1.bf16.msra.mxu0 0
      %727 = vmatprep.subr.bf16.mxu0 0
      %728 = vmatpush1.bf16.msra.mxu0 0
      %729 = vmatprep.subr.bf16.mxu0 0
      %730 = vmatpush1.bf16.msra.mxu0 0
      %731 = vmatprep.subr.bf16.mxu0 0
      %732 = vmatpush1.bf16.msra.mxu0 0
      %733 = vmatprep.subr.bf16.mxu0 0
      %734 = vmatpush1.bf16.msra.mxu0 0
      %735 = vmatprep.subr.bf16.mxu0 0
      %736 = vmatpush1.bf16.msra.mxu0 0
      %737 = vmatprep.subr.bf16.mxu0 0
      %738 = vmatpush1.bf16.msra.mxu0 0
      %739 = vmatprep.subr.bf16.mxu0 0
      %740 = vmatpush1.bf16.msra.mxu0 %v723
      %741 = vmatprep.subr.bf16.mxu0 0
      %742 = vmatpush2.bf16.msra.mxu0 0
      %743 = vmatprep.subr.bf16.mxu0 0
      %744 = vmatpush2.bf16.msra.mxu0 0
      %745 = vmatprep.subr.bf16.mxu0 0
      %746 = vmatpush2.bf16.msra.mxu0 0
      %747 = vmatprep.subr.bf16.mxu0 0
      %748 = vmatpush2.bf16.msra.mxu0 0
      %749 = vmatprep.subr.bf16.mxu0 0
      %750 = vmatpush2.bf16.msra.mxu0 0
      %751 = vmatprep.subr.bf16.mxu0 0
      %752 = vmatpush2.bf16.msra.mxu0 0
      %753 = vmatprep.subr.bf16.mxu0 0
      %754 = vmatpush2.bf16.msra.mxu0 0
      %755 = vmatprep.subr.bf16.mxu0 0
      %756 = vmatpush2.bf16.msra.mxu0 0
      %757 = vmatprep.mubr.bf16.mxu0 0
      %758 = vmatmul.mubr.bf16.gmra.mxu0 %v720
      %v759 = vpop.f32.mrf.mxu0
      %v760 = vadd.f32 0.0, %v759
      %v761 = vpop.f32.mrf.mxu0
      %v762 = vpop.f32.mrf.mxu0
      %v763 = vpop.f32.mrf.mxu0
      %764 = vdwg.mxu0
      %v765 = vpack.c.bf16 %v760, %v760
      %766 = vrot.lane.b32.xlu0 %v543, 104
      %v767 = vpop.permute.xlu0 %766
      %768 = vrot.lane.b32.xlu0 %v422, 72
      %v769 = vpop.permute.xlu0 %768
      %v771 = vsel %vm425, %v767, 0
      %v774 = vsel %vm425, %v769, 0
      %776 = vmatprep.subr.bf16.mxu0 0
      %777 = vmatpush1.bf16.xpose.msra.mxu0 0
      %778 = vmatprep.subr.bf16.mxu0 0
      %779 = vmatpush1.bf16.xpose.msra.mxu0 0
      %780 = vmatprep.subr.bf16.mxu0 0
      %781 = vmatpush1.bf16.xpose.msra.mxu0 0
      %782 = vmatprep.subr.bf16.mxu0 0
      %783 = vmatpush1.bf16.xpose.msra.mxu0 0
      %784 = vmatprep.subr.bf16.mxu0 0
      %785 = vmatpush1.bf16.xpose.msra.mxu0 0
      %786 = vmatprep.subr.bf16.mxu0 0
      %787 = vmatpush1.bf16.xpose.msra.mxu0 0
      %788 = vmatprep.subr.bf16.mxu0 0
      %789 = vmatpush1.bf16.xpose.msra.mxu0 0
      %790 = vmatprep.subr.bf16.mxu0 0
      %791 = vmatpush1.bf16.xpose.msra.mxu0 %v774
      %792 = vmatprep.subr.bf16.mxu0 0
      %793 = vmatpush2.bf16.xpose.msra.mxu0 0
      %794 = vmatprep.subr.bf16.mxu0 0
      %795 = vmatpush2.bf16.xpose.msra.mxu0 0
      %796 = vmatprep.subr.bf16.mxu0 0
      %797 = vmatpush2.bf16.xpose.msra.mxu0 0
      %798 = vmatprep.subr.bf16.mxu0 0
      %799 = vmatpush2.bf16.xpose.msra.mxu0 0
      %800 = vmatprep.subr.bf16.mxu0 0
      %801 = vmatpush2.bf16.xpose.msra.mxu0 0
      %802 = vmatprep.subr.bf16.mxu0 0
      %803 = vmatpush2.bf16.xpose.msra.mxu0 0
      %804 = vmatprep.subr.bf16.mxu0 0
      %805 = vmatpush2.bf16.xpose.msra.mxu0 0
      %806 = vmatprep.subr.bf16.mxu0 0
      %807 = vmatpush2.bf16.xpose.msra.mxu0 0
      %808 = vmatprep.mubr.bf16.mxu0 0
      %809 = vmatmul.mubr.bf16.gmra.mxu0 %v771
      %v810 = vpop.f32.mrf.mxu0
      %v811 = vadd.f32 %v414, %v810
      %v812 = vpop.f32.mrf.mxu0
      %v813 = vpop.f32.mrf.mxu0
      %v814 = vpop.f32.mrf.mxu0
      %815 = vdwg.mxu0
      %v816 = vsel %vm472, %v811, -inf
      %817 = vmax.xlane.f32.xlu0 %v816
      %v818 = vpop.xlane.xlu0 %817
      %v819 = vsub.f32 %v811, %v818
      %v820 = vmul.f32 %v819, 1.442695
      %v821 = vpow.pop %v820
      %v822 = vsel %vm472, %v821, 0.0
      %823 = vadd.xlane.f32.xlu0 %v822
      %v824 = vpop.xlane.xlu0 %823
      %v825 = vrcp.pop %v824
      %v826 = vmul.f32 %v821, %v825
      %v827 = vpack.c.bf16 %v826, %v826
      %828 = vrot.lane.b32.xlu0 %v422, 40
      %v829 = vpop.permute.xlu0 %828
      %v831 = vsel %vm487, %v827, 0
      %v834 = vsel %vm491, %v829, 0
      %836 = vmatprep.subr.bf16.mxu0 0
      %837 = vmatpush1.bf16.msra.mxu0 0
      %838 = vmatprep.subr.bf16.mxu0 0
      %839 = vmatpush1.bf16.msra.mxu0 0
      %840 = vmatprep.subr.bf16.mxu0 0
      %841 = vmatpush1.bf16.msra.mxu0 0
      %842 = vmatprep.subr.bf16.mxu0 0
      %843 = vmatpush1.bf16.msra.mxu0 0
      %844 = vmatprep.subr.bf16.mxu0 0
      %845 = vmatpush1.bf16.msra.mxu0 0
      %846 = vmatprep.subr.bf16.mxu0 0
      %847 = vmatpush1.bf16.msra.mxu0 0
      %848 = vmatprep.subr.bf16.mxu0 0
      %849 = vmatpush1.bf16.msra.mxu0 0
      %850 = vmatprep.subr.bf16.mxu0 0
      %851 = vmatpush1.bf16.msra.mxu0 %v834
      %852 = vmatprep.subr.bf16.mxu0 0
      %853 = vmatpush2.bf16.msra.mxu0 0
      %854 = vmatprep.subr.bf16.mxu0 0
      %855 = vmatpush2.bf16.msra.mxu0 0
      %856 = vmatprep.subr.bf16.mxu0 0
      %857 = vmatpush2.bf16.msra.mxu0 0
      %858 = vmatprep.subr.bf16.mxu0 0
      %859 = vmatpush2.bf16.msra.mxu0 0
      %860 = vmatprep.subr.bf16.mxu0 0
      %861 = vmatpush2.bf16.msra.mxu0 0
      %862 = vmatprep.subr.bf16.mxu0 0
      %863 = vmatpush2.bf16.msra.mxu0 0
      %864 = vmatprep.subr.bf16.mxu0 0
      %865 = vmatpush2.bf16.msra.mxu0 0
      %866 = vmatprep.subr.bf16.mxu0 0
      %867 = vmatpush2.bf16.msra.mxu0 0
      %868 = vmatprep.mubr.bf16.mxu0 0
      %869 = vmatmul.mubr.bf16.gmra.mxu0 %v831
      %v870 = vpop.f32.mrf.mxu0
      %v871 = vadd.f32 0.0, %v870
      %v872 = vpop.f32.mrf.mxu0
      %v873 = vpop.f32.mrf.mxu0
      %v874 = vpop.f32.mrf.mxu0
      %875 = vdwg.mxu0
      %v876 = vpack.c.bf16 %v871, %v871
      %878 = vrot.lane.b32.xlu0 %v654, 8
      %v879 = vpop.permute.xlu0 %878
      %881 = vrot.lane.b32.xlu0 %v765, 16
      %v882 = vpop.permute.xlu0 %881
      %884 = vrot.lane.b32.xlu0 %v876, 24
      %v885 = vpop.permute.xlu0 %884
      %v888 = vsel %vm425, %v535, %v879
      %vm889 = vcmask 130048
      %v891 = vsel %vm889, %v888, %v882
      %vm892 = vcmask 195584
      %v894 = vsel %vm892, %v891, %v885
      %v895 = vld [vmem:[%s3] sm:$0xf]
      %v896 = vld [vmem:[%s3 + $0x4] sm:$0xf]
      %v897 = vld [vmem:[%s3 + $0x8] sm:$0xf]
      %v898 = vld [vmem:[%s3 + $0xc] sm:$0xf]
      %v899 = vld [vmem:[%s4] sm:$0x1]
      %v901 = vlaneseq
      %v902 = vshrl.u32 %v901, 7
      %v903 = vsub.s32 0, %v902
      %v904 = vrot.slane %v899, %v903
      %v910 = vunpack.c.l.b16 %v895
      %v911 = vunpack.c.l.b16 %v896
      %v912 = vunpack.c.l.b16 %v897
      %v913 = vunpack.c.l.b16 %v898
      %v914 = vpack.c.b16 %v911, %v910
      %v915 = vpack.c.b16 %v913, %v912
      %vm918 = vcmask 261120
      %v919 = vsel %vm918, %v894, 0
      %921 = vmatprep.subr.bf16.mxu0 0
      %922 = vmatpush1.bf16.msra.mxu0 0
      %923 = vmatprep.subr.bf16.mxu0 0
      %924 = vmatpush1.bf16.msra.mxu0 0
      %925 = vmatprep.subr.bf16.mxu0 0
      %926 = vmatpush1.bf16.msra.mxu0 0
      %927 = vmatprep.subr.bf16.mxu0 0
      %928 = vmatpush1.bf16.msra.mxu0 0
      %929 = vmatprep.subr.bf16.mxu0 0
      %930 = vmatpush1.bf16.msra.mxu0 0
      %931 = vmatprep.subr.bf16.mxu0 0
      %932 = vmatpush1.bf16.msra.mxu0 0
      %933 = vmatprep.subr.bf16.mxu0 0
      %934 = vmatpush1.bf16.msra.mxu0 %v915
      %935 = vmatprep.subr.bf16.mxu0 0
      %936 = vmatpush1.bf16.msra.mxu0 %v914
      %937 = vmatprep.subr.bf16.mxu0 0
      %938 = vmatpush2.bf16.msra.mxu0 0
      %939 = vmatprep.subr.bf16.mxu0 0
      %940 = vmatpush2.bf16.msra.mxu0 0
      %941 = vmatprep.subr.bf16.mxu0 0
      %942 = vmatpush2.bf16.msra.mxu0 0
      %943 = vmatprep.subr.bf16.mxu0 0
      %944 = vmatpush2.bf16.msra.mxu0 0
      %945 = vmatprep.subr.bf16.mxu0 0
      %946 = vmatpush2.bf16.msra.mxu0 0
      %947 = vmatprep.subr.bf16.mxu0 0
      %948 = vmatpush2.bf16.msra.mxu0 0
      %949 = vmatprep.subr.bf16.mxu0 0
      %950 = vmatpush2.bf16.msra.mxu0 0
      %951 = vmatprep.subr.bf16.mxu0 0
      %952 = vmatpush2.bf16.msra.mxu0 0
      %953 = vmatprep.mubr.bf16.mxu0 0
      %954 = vmatmul.mubr.bf16.gmra.mxu0 %v919
      %v955 = vpop.f32.mrf.mxu0
      %v956 = vadd.f32 %v904, %v955
      %v957 = vpop.f32.mrf.mxu0
      %v958 = vpop.f32.mrf.mxu0
      %v959 = vpop.f32.mrf.mxu0
      %960 = vdwg.mxu0
      %v961 = vld [vmem:[%s378] sm:$0xf]
      %v962 = vadd.f32 %v956, %v961
      %vm963 = vcmask 257024
      %964 = vst.msk [vmem:[%s385] sm:$0xf] %vm963, %v962
      %v965 = vsel %vm963, %v962, 0.0
      %966 = vadd.xlane.f32.xlu0 %v965
      %v967 = vpop.xlane.xlu0 %966
      %v968 = vrcp.pop 32.0
      %v969 = vmul.f32 %v967, %v968
      %v970 = vsub.f32 %v962, %v969
      %v971 = vmul.f32 %v970, %v970
      %v972 = vsel %vm963, %v971, 0.0
      %973 = vadd.xlane.f32.xlu0 %v972
      %v974 = vpop.xlane.xlu0 %973
      %v975 = vmul.f32 %v974, %v968
      %v976 = vadd.f32 %v975, 1e-06
      %v977 = vrsqrt.pop %v976
      %v978 = vmul.f32 %v970, %v977
      %v979 = vld [vmem:[%s5] sm:$0x1]
      %v981 = vlaneseq
      %v982 = vshrl.u32 %v981, 7
      %v983 = vsub.s32 0, %v982
      %v984 = vrot.slane %v979, %v983
      %v986 = vmul.f32 %v978, %v984
      %v987 = vld [vmem:[%s6] sm:$0x1]
      %v989 = vlaneseq
      %v990 = vshrl.u32 %v989, 7
      %v991 = vsub.s32 0, %v990
      %v992 = vrot.slane %v987, %v991
      %v994 = vadd.f32 %v986, %v992
      %v995 = vpack.c.bf16 %v994, %v994
      %vm996 = vcmask 254976
      %997 = vst.msk [vmem:[%s392] sm:$0x3] %vm996, %v995
      %p998 = scmp.lt.s32.totalorder %s24, 1
      %s999 = scalar_select %p998, %s24, 1
      %p1000 = scmp.lt.s32.totalorder %s25, 0
      %s1001 = scalar_select %p1000, %s25, 0
      %s1002 = sadd.s32 %s1001, %s999
      %s1003 = smul.addr %s1002, 4
      %s1004 = scalar_lea.vmem %s7, %s1003
      %p1005 = scmp.lt.s32.totalorder %s24, 1
      %s1006 = scalar_select %p1005, %s24, 1
      %p1007 = scmp.lt.s32.totalorder %s25, 0
      %s1008 = scalar_select %p1007, %s25, 0
      %s1009 = sadd.s32 %s1008, %s1006
      %s1010 = smul.addr %s1009, 2
      %s1011 = scalar_lea.vmem %s8, %s1010
      // Predicated region
      $region49: #{decoder_layer_forward.8} parent=47 // pred_check
        %p1012 = pneg %p218
      $region50: #{decoder_layer_forward.8} parent=47 // pred_check_branch
        %1014 = sbr.rel (%p1012) target = $region52
      $region51: #{decoder_layer_forward.8} parent=47 // pred_region
        _
      $region52: #{decoder_layer_forward.8} parent=47 // pred_fallthru
        _
      // Predicated region
      $region53: #{decoder_layer_forward.8} parent=47 // pred_check
        %p1015 = pneg %p246
      $region54: #{decoder_layer_forward.8} parent=47 // pred_check_branch
        %1017 = sbr.rel (%p1015) target = $region56
      $region55: #{decoder_layer_forward.8} parent=47 // pred_region
        _
      $region56: #{decoder_layer_forward.8} parent=47 // pred_fallthru
        _
    $region48: #{decoder_layer_forward.8} parent=5 // pred_fallthru
      _
    %p1018 = scmp.le.s32.totalorder 2, %s15
    // Predicated region
    $region57: #{decoder_layer_forward.8} parent=5 // pred_check
      %p1019 = pneg %p1018
    $region58: #{decoder_layer_forward.8} parent=5 // pred_check_branch
      %1021 = sbr.rel (%p1019) target = $region60
    $region59: #{decoder_layer_forward.8} parent=5 // pred_region
      %s1022 = ssub.s32 %s15, 2
      // Predicated region
      $region61: #{decoder_layer_forward.8} parent=59 // pred_check
        %p1023 = pneg %p224
      $region62: #{decoder_layer_forward.8} parent=59 // pred_check_branch
        %1025 = sbr.rel (%p1023) target = $region64
      $region63: #{decoder_layer_forward.8} parent=59 // pred_region
        %p1026 = scmp.lt.s32.totalorder %s26, 1
        %s1027 = scalar_select %p1026, %s26, 1
        %p1028 = scmp.lt.s32.totalorder %s27, 0
        %s1029 = scalar_select %p1028, %s27, 0
        %s1030 = sadd.s32 %s1029, %s1027
        %s1031 = smul.addr %s1030, 4
        %s1032 = scalar_lea.vmem %s7, %s1031
      $region64: #{decoder_layer_forward.8} parent=59 // pred_fallthru
        _
      // Predicated region
      $region65: #{decoder_layer_forward.8} parent=59 // pred_check
        %p1033 = pneg %p252
      $region66: #{decoder_layer_forward.8} parent=59 // pred_check_branch
        %1035 = sbr.rel (%p1033) target = $region68
      $region67: #{decoder_layer_forward.8} parent=59 // pred_region
        %p1036 = scmp.lt.s32.totalorder %s26, 1
        %s1037 = scalar_select %p1036, %s26, 1
        %p1038 = scmp.lt.s32.totalorder %s27, 0
        %s1039 = scalar_select %p1038, %s27, 0
        %s1040 = sadd.s32 %s1039, %s1037
        %s1041 = smul.addr %s1040, 2
        %s1042 = scalar_lea.vmem %s8, %s1041
      $region68: #{decoder_layer_forward.8} parent=59 // pred_fallthru
        _
    $region60: #{decoder_layer_forward.8} parent=5 // pred_fallthru
      _
  $region6: #{decoder_layer_forward.8} parent=0 // loop_footer
    %s19 = sadd.s32 1, %s15
  $region7: #{decoder_layer_forward.8} parent=0 // loop_footer_branch
    %14 = sbr.rel target = $region3
  $region8: #{decoder_layer_forward.8} parent=0 // loop_exit
    _

// kernel: decoder_layer_forward.12
$region0: #{decoder_layer_forward.12}
  #allocation0 [shape = 'u32[]', space=smem, size = 0x4, offset = 0x4, fixed_abs, tag = 'smem constant byte address 0x4 - core index']
  #allocation1 [shape = 'u32[144,128]{1,0:T(1,128)}', space=vmem, size = 0x12000, scoped, tag = 'internal scratch']
  #allocation2 [shape = 'bf16[8,32]{1,0:T(8,128)(2,1)}', space=vmem, size = 0x800, scoped, tag = 'scratch operand']
  %s0 = inlined_call_operand.vmem [shape: f32[8,32], index: 0, kind: input, shape index: {}]
  %s1 = inlined_call_operand.vmem [shape: f32[1,32], index: 1, kind: input, shape index: {}]
  %s2 = inlined_call_operand.vmem [shape: f32[1,32], index: 2, kind: input, shape index: {}]
  %s3 = inlined_call_operand.vmem [shape: bf16[32,64], index: 3, kind: input, shape index: {}]
  %s4 = inlined_call_operand.vmem [shape: f32[1,64], index: 4, kind: input, shape index: {}]
  %s5 = inlined_call_operand.vmem [shape: bf16[8,64], index: 5, kind: output, shape index: {}]
  %s6 = sld [smem:[#allocation0]]
  $region34: #{decoder_layer_forward.12} parent=0
    _
  %s8 = ssub.s32 1, %s6
  %s9 = scalar_select 0, %s8, %s6
  // Predicated region
  $region2: #{decoder_layer_forward.12} parent=0 // pred_check
    _
  $region3: #{decoder_layer_forward.12} parent=0 // pred_check_branch
    %11 = sbr.rel (0) target = $region5
  $region4: #{decoder_layer_forward.12} parent=0 // pred_region
    _
  $region5: #{decoder_layer_forward.12} parent=0 // pred_fallthru
    _
  // Predicated region
  $region6: #{decoder_layer_forward.12} parent=0 // pred_check
    _
  $region7: #{decoder_layer_forward.12} parent=0 // pred_check_branch
    %13 = sbr.rel (0) target = $region9
  $region8: #{decoder_layer_forward.12} parent=0 // pred_region
    _
  $region9: #{decoder_layer_forward.12} parent=0 // pred_fallthru
    _
  // Predicated region
  $region10: #{decoder_layer_forward.12} parent=0 // pred_check
    _
  $region11: #{decoder_layer_forward.12} parent=0 // pred_check_branch
    %15 = sbr.rel (0) target = $region13
  $region12: #{decoder_layer_forward.12} parent=0 // pred_region
    _
  $region13: #{decoder_layer_forward.12} parent=0 // pred_fallthru
    _
  // Predicated region
  $region14: #{decoder_layer_forward.12} parent=0 // pred_check
    _
  $region15: #{decoder_layer_forward.12} parent=0 // pred_check_branch
    %17 = sbr.rel (0) target = $region17
  $region16: #{decoder_layer_forward.12} parent=0 // pred_region
    _
  $region17: #{decoder_layer_forward.12} parent=0 // pred_fallthru
    _
  // Predicated region
  $region18: #{decoder_layer_forward.12} parent=0 // pred_check
    _
  $region19: #{decoder_layer_forward.12} parent=0 // pred_check_branch
    %19 = sbr.rel (0) target = $region21
  $region20: #{decoder_layer_forward.12} parent=0 // pred_region
    _
  $region21: #{decoder_layer_forward.12} parent=0 // pred_fallthru
    _
  %p21 = scmp.eq.s32.totalorder 0, 0
  // Predicated region
  $region22: #{decoder_layer_forward.12} parent=0 // pred_check
    %p22 = pneg %p21
  $region23: #{decoder_layer_forward.12} parent=0 // pred_check_branch
    %24 = sbr.rel (%p22) target = $region25
  $region24: #{decoder_layer_forward.12} parent=0 // pred_region
    %v25 = vld [vmem:[%s0] sm:$0xff]
    %vm26 = vcmask 261120
    %v27 = vsel %vm26, %v25, 0.0
    %28 = vadd.xlane.f32.xlu0 %v27
    %v29 = vpop.xlane.xlu0 %28
    %v30 = vrcp.pop 32.0
    %v31 = vmul.f32 %v29, %v30
    %v32 = vsub.f32 %v25, %v31
    %v33 = vmul.f32 %v32, %v32
    %v34 = vsel %vm26, %v33, 0.0
    %35 = vadd.xlane.f32.xlu0 %v34
    %v36 = vpop.xlane.xlu0 %35
    %v37 = vmul.f32 %v36, %v30
    %v38 = vadd.f32 %v37, 1e-06
    %v39 = vrsqrt.pop %v38
    %v40 = vmul.f32 %v32, %v39
    %v41 = vld [vmem:[%s1] sm:$0x1]
    %v43 = vlaneseq
    %v44 = vshrl.u32 %v43, 7
    %v45 = vsub.s32 0, %v44
    %v46 = vrot.slane %v41, %v45
    %v48 = vmul.f32 %v40, %v46
    %v49 = vld [vmem:[%s2] sm:$0x1]
    %v51 = vlaneseq
    %v52 = vshrl.u32 %v51, 7
    %v53 = vsub.s32 0, %v52
    %v54 = vrot.slane %v49, %v53
    %v56 = vadd.f32 %v48, %v54
    %v57 = vpack.c.bf16 %v56, %v56
    %vm58 = vcmask 257024
    %59 = vst.msk [vmem:[#allocation2] sm:$0xf] %vm58, %v57
  $region25: #{decoder_layer_forward.12} parent=0 // pred_fallthru
    _
  %v60 = vld [vmem:[#allocation2] sm:$0xf]
  %v61 = vld [vmem:[%s3] sm:$0xf]
  %v62 = vld [vmem:[%s3 + $0x4] sm:$0xf]
  %v63 = vld [vmem:[%s3 + $0x8] sm:$0xf]
  %v64 = vld [vmem:[%s3 + $0xc] sm:$0xf]
  %v65 = vld [vmem:[%s4] sm:$0x1]
  %v67 = vlaneseq
  %v68 = vshrl.u32 %v67, 7
  %v69 = vsub.s32 0, %v68
  %v70 = vrot.slane %v65, %v69
  %v76 = vunpack.c.l.b16 %v61
  %v77 = vunpack.c.l.b16 %v62
  %v78 = vunpack.c.l.b16 %v63
  %v79 = vunpack.c.l.b16 %v64
  %v80 = vpack.c.b16 %v77, %v76
  %v81 = vpack.c.b16 %v79, %v78
  %vm84 = vcmask 261120
  %v86 = vsel %vm84, %v60, 0
  %88 = vmatprep.subr.bf16.mxu0 0
  %89 = vmatpush1.bf16.msra.mxu0 0
  %90 = vmatprep.subr.bf16.mxu0 0
  %91 = vmatpush1.bf16.msra.mxu0 0
  %92 = vmatprep.subr.bf16.mxu0 0
  %93 = vmatpush1.bf16.msra.mxu0 0
  %94 = vmatprep.subr.bf16.mxu0 0
  %95 = vmatpush1.bf16.msra.mxu0 0
  %96 = vmatprep.subr.bf16.mxu0 0
  %97 = vmatpush1.bf16.msra.mxu0 0
  %98 = vmatprep.subr.bf16.mxu0 0
  %99 = vmatpush1.bf16.msra.mxu0 0
  %100 = vmatprep.subr.bf16.mxu0 0
  %101 = vmatpush1.bf16.msra.mxu0 %v81
  %102 = vmatprep.subr.bf16.mxu0 0
  %103 = vmatpush1.bf16.msra.mxu0 %v80
  %104 = vmatprep.subr.bf16.mxu0 0
  %105 = vmatpush2.bf16.msra.mxu0 0
  %106 = vmatprep.subr.bf16.mxu0 0
  %107 = vmatpush2.bf16.msra.mxu0 0
  %108 = vmatprep.subr.bf16.mxu0 0
  %109 = vmatpush2.bf16.msra.mxu0 0
  %110 = vmatprep.subr.bf16.mxu0 0
  %111 = vmatpush2.bf16.msra.mxu0 0
  %112 = vmatprep.subr.bf16.mxu0 0
  %113 = vmatpush2.bf16.msra.mxu0 0
  %114 = vmatprep.subr.bf16.mxu0 0
  %115 = vmatpush2.bf16.msra.mxu0 0
  %116 = vmatprep.subr.bf16.mxu0 0
  %117 = vmatpush2.bf16.msra.mxu0 0
  %118 = vmatprep.subr.bf16.mxu0 0
  %119 = vmatpush2.bf16.msra.mxu0 0
  %120 = vmatprep.mubr.bf16.mxu0 0
  %121 = vmatmul.mubr.bf16.gmra.mxu0 %v86
  %v122 = vpop.f32.mrf.mxu0
  %v123 = vadd.f32 %v70, %v122
  %v124 = vpop.f32.mrf.mxu0
  %v125 = vpop.f32.mrf.mxu0
  %v126 = vpop.f32.mrf.mxu0
  %127 = vdwg.mxu0
  %v128 = vmax.f32 %v123, 0.0
  %v129 = vpack.c.bf16 %v128, %v128
  %vm130 = vcmask 519168
  %131 = vst.msk [vmem:[%s5] sm:$0xf] %vm130, %v129
  // Predicated region
  $region26: #{decoder_layer_forward.12} parent=0 // pred_check
    _
  $region27: #{decoder_layer_forward.12} parent=0 // pred_check_branch
    %133 = sbr.rel (0) target = $region29
  $region28: #{decoder_layer_forward.12} parent=0 // pred_region
    _
  $region29: #{decoder_layer_forward.12} parent=0 // pred_fallthru
    _
  // Predicated region
  $region30: #{decoder_layer_forward.12} parent=0 // pred_check
    _
  $region31: #{decoder_layer_forward.12} parent=0 // pred_check_branch
    %135 = sbr.rel (0) target = $region33
  $region32: #{decoder_layer_forward.12} parent=0 // pred_region
    _
  $region33: #{decoder_layer_forward.12} parent=0 // pred_fallthru
    _

// kernel: decoder_layer_forward.13
$region0: #{decoder_layer_forward.13}
  #allocation0 [shape = 'u32[]', space=smem, size = 0x4, offset = 0x4, fixed_abs, tag = 'smem constant byte address 0x4 - core index']
  #allocation1 [shape = 'u32[144,128]{1,0:T(1,128)}', space=vmem, size = 0x12000, scoped, tag = 'internal scratch']
  #allocation2 [shape = 'f32[8,32]{1,0:T(8,128)}', space=vmem, size = 0x1000, scoped, tag = 'scratch operand']
  %s0 = inlined_call_operand.vmem [shape: bf16[8,64], index: 0, kind: input, shape index: {}]
  %s1 = inlined_call_operand.vmem [shape: bf16[64,32], index: 1, kind: input, shape index: {}]
  %s2 = inlined_call_operand.vmem [shape: f32[1,32], index: 2, kind: input, shape index: {}]
  %s3 = inlined_call_operand.vmem [shape: f32[8,32], index: 3, kind: input, shape index: {}]
  %s4 = inlined_call_operand.hbm [shape: f32[8,32], index: 4, kind: output, shape index: {}]
  %s5 = sld [smem:[#allocation0]]
  $region34: #{decoder_layer_forward.13} parent=0
    _
  %s7 = ssub.s32 1, %s5
  %s8 = scalar_select 0, %s7, %s5
  $region1: #{decoder_layer_forward.13} parent=0
    #allocation3 [shape = 'u8[4096]{0}', space=vmem, size = 0x1000, scoped, tag = 'output window, operand 0, single buffered']
    #allocation4 [shape = 's32[1]{0}', space=sflag, size = 0x4, scoped, tag = 'scoped memory for decoder_layer_forward.13']
    %9 = vsyncpa [#allocation4], 0
    // Predicated region
    $region2: #{decoder_layer_forward.13} parent=1 // pred_check
      _
    $region3: #{decoder_layer_forward.13} parent=1 // pred_check_branch
      %11 = sbr.rel (0) target = $region5
    $region4: #{decoder_layer_forward.13} parent=1 // pred_region
      _
    $region5: #{decoder_layer_forward.13} parent=1 // pred_fallthru
      _
    // Predicated region
    $region6: #{decoder_layer_forward.13} parent=1 // pred_check
      _
    $region7: #{decoder_layer_forward.13} parent=1 // pred_check_branch
      %13 = sbr.rel (0) target = $region9
    $region8: #{decoder_layer_forward.13} parent=1 // pred_region
      _
    $region9: #{decoder_layer_forward.13} parent=1 // pred_fallthru
      _
    // Predicated region
    $region10: #{decoder_layer_forward.13} parent=1 // pred_check
      _
    $region11: #{decoder_layer_forward.13} parent=1 // pred_check_branch
      %15 = sbr.rel (0) target = $region13
    $region12: #{decoder_layer_forward.13} parent=1 // pred_region
      _
    $region13: #{decoder_layer_forward.13} parent=1 // pred_fallthru
      _
    // Predicated region
    $region14: #{decoder_layer_forward.13} parent=1 // pred_check
      _
    $region15: #{decoder_layer_forward.13} parent=1 // pred_check_branch
      %17 = sbr.rel (0) target = $region17
    $region16: #{decoder_layer_forward.13} parent=1 // pred_region
      _
    $region17: #{decoder_layer_forward.13} parent=1 // pred_fallthru
      _
    %p19 = scmp.eq.s32.totalorder 0, 0
    // Predicated region
    $region18: #{decoder_layer_forward.13} parent=1 // pred_check
      %p20 = pneg %p19
    $region19: #{decoder_layer_forward.13} parent=1 // pred_check_branch
      %22 = sbr.rel (%p20) target = $region21
    $region20: #{decoder_layer_forward.13} parent=1 // pred_region
      %vm23 = vcmask 261120
      %24 = vst.msk [vmem:[#allocation2] sm:$0xff] %vm23, 0.0
    $region21: #{decoder_layer_forward.13} parent=1 // pred_fallthru
      _
    %v25 = vld [vmem:[#allocation2] sm:$0xff]
    %v26 = vld [vmem:[%s0] sm:$0xf]
    %v27 = vld [vmem:[%s1] sm:$0xf]
    %v28 = vld [vmem:[%s1 + $0x4] sm:$0xf]
    %v29 = vld [vmem:[%s1 + $0x8] sm:$0xf]
    %v30 = vld [vmem:[%s1 + $0xc] sm:$0xf]
    %v31 = vld [vmem:[%s1 + $0x10] sm:$0xf]
    %v32 = vld [vmem:[%s1 + $0x14] sm:$0xf]
    %v33 = vld [vmem:[%s1 + $0x18] sm:$0xf]
    %v34 = vld [vmem:[%s1 + $0x1c] sm:$0xf]
    %v43 = vunpack.c.l.b16 %v27
    %v44 = vunpack.c.l.b16 %v28
    %v45 = vunpack.c.l.b16 %v29
    %v46 = vunpack.c.l.b16 %v30
    %v47 = vunpack.c.l.b16 %v31
    %v48 = vunpack.c.l.b16 %v32
    %v49 = vunpack.c.l.b16 %v33
    %v50 = vunpack.c.l.b16 %v34
    %v51 = vpack.c.b16 %v44, %v43
    %v52 = vpack.c.b16 %v46, %v45
    %v53 = vpack.c.b16 %v48, %v47
    %v54 = vpack.c.b16 %v50, %v49
    %vm59 = vcmask 523264
    %v61 = vsel %vm59, %v26, 0
    %63 = vmatprep.subr.bf16.mxu0 0
    %64 = vmatpush1.bf16.msra.mxu0 0
    %65 = vmatprep.subr.bf16.mxu0 0
    %66 = vmatpush1.bf16.msra.mxu0 0
    %67 = vmatprep.subr.bf16.mxu0 0
    %68 = vmatpush1.bf16.msra.mxu0 0
    %69 = vmatprep.subr.bf16.mxu0 0
    %70 = vmatpush1.bf16.msra.mxu0 0
    %71 = vmatprep.subr.bf16.mxu0 0
    %72 = vmatpush1.bf16.msra.mxu0 %v54
    %73 = vmatprep.subr.bf16.mxu0 0
    %74 = vmatpush1.bf16.msra.mxu0 %v53
    %75 = vmatprep.subr.bf16.mxu0 0
    %76 = vmatpush1.bf16.msra.mxu0 %v52
    %77 = vmatprep.subr.bf16.mxu0 0
    %78 = vmatpush1.bf16.msra.mxu0 %v51
    %79 = vmatprep.subr.bf16.mxu0 0
    %80 = vmatpush2.bf16.msra.mxu0 0
    %81 = vmatprep.subr.bf16.mxu0 0
    %82 = vmatpush2.bf16.msra.mxu0 0
    %83 = vmatprep.subr.bf16.mxu0 0
    %84 = vmatpush2.bf16.msra.mxu0 0
    %85 = vmatprep.subr.bf16.mxu0 0
    %86 = vmatpush2.bf16.msra.mxu0 0
    %87 = vmatprep.subr.bf16.mxu0 0
    %88 = vmatpush2.bf16.msra.mxu0 0
    %89 = vmatprep.subr.bf16.mxu0 0
    %90 = vmatpush2.bf16.msra.mxu0 0
    %91 = vmatprep.subr.bf16.mxu0 0
    %92 = vmatpush2.bf16.msra.mxu0 0
    %93 = vmatprep.subr.bf16.mxu0 0
    %94 = vmatpush2.bf16.msra.mxu0 0
    %95 = vmatprep.mubr.bf16.mxu0 0
    %96 = vmatmul.mubr.bf16.gmra.mxu0 %v61
    %v97 = vpop.f32.mrf.mxu0
    %v98 = vadd.f32 0.0, %v97
    %v99 = vpop.f32.mrf.mxu0
    %v100 = vpop.f32.mrf.mxu0
    %v101 = vpop.f32.mrf.mxu0
    %102 = vdwg.mxu0
    %v103 = vadd.f32 %v25, %v98
    %vm104 = vcmask 261120
    %105 = vst.msk [vmem:[#allocation2] sm:$0xff] %vm104, %v103
    // Predicated region
    $region22: #{decoder_layer_forward.13} parent=1 // pred_check
      %p106 = pneg %p19
    $region23: #{decoder_layer_forward.13} parent=1 // pred_check_branch
      %108 = sbr.rel (%p106) target = $region25
    $region24: #{decoder_layer_forward.13} parent=1 // pred_region
      %v109 = vld [vmem:[#allocation2] sm:$0xff]
      %v110 = vld [vmem:[%s2] sm:$0x1]
      %v112 = vlaneseq
      %v113 = vshrl.u32 %v112, 7
      %v114 = vsub.s32 0, %v113
      %v115 = vrot.slane %v110, %v114
      %v117 = vadd.f32 %v109, %v115
      %v118 = vld [vmem:[%s3] sm:$0xff]
      %v119 = vadd.f32 %v117, %v118
      %120 = vst.msk [vmem:[#allocation3] sm:$0xff] %vm104, %v119
    $region25: #{decoder_layer_forward.13} parent=1 // pred_fallthru
      _
    // Predicated region
    $region26: #{decoder_layer_forward.13} parent=1 // pred_check
      _
    $region27: #{decoder_layer_forward.13} parent=1 // pred_check_branch
      %122 = sbr.rel (0) target = $region29
    $region28: #{decoder_layer_forward.13} parent=1 // pred_region
      %s124 = ssub.s32 128, 128
      %125 = vsyncadd [#allocation4], %s124
      %s127 = sshll.u32 [#allocation3], 4
      %s128 = int_to_ptr.vmem [resolvable:$true] %s127
      %130 = dma.vmem_to_hbm [thread:$0]  %s128, 128, %s4, [#allocation4]
    $region29: #{decoder_layer_forward.13} parent=1 // pred_fallthru
      _
    // Predicated region
    $region30: #{decoder_layer_forward.13} parent=1 // pred_check
      _
    $region31: #{decoder_layer_forward.13} parent=1 // pred_check_branch
      %132 = sbr.rel (0) target = $region33
    $region32: #{decoder_layer_forward.13} parent=1 // pred_region
      %133 = dma.done [#allocation4], 128
    $region33: #{decoder_layer_forward.13} parent=1 // pred_fallthru
      _
    %134 = vsyncpa [#allocation4], 1

// kernel: decoder_layer_forward.11
$region0: #{decoder_layer_forward.11}
  #allocation0 [shape = 'u32[]', space=smem, size = 0x4, offset = 0x4, fixed_abs, tag = 'smem constant byte address 0x4 - core index']
  #allocation1 [shape = 'u32[144,128]{1,0:T(1,128)}', space=vmem, size = 0x12000, scoped, tag = 'internal scratch']
  #allocation2 [shape = 'f32[4,4,8]{2,1,0:T(4,128)}', space=vmem, size = 0x2000, scoped, tag = 'scratch operand']
  %s0 = inlined_call_operand.vmem [shape: bf16[2,4,32], index: 0, kind: input, shape index: {}]
  %s1 = inlined_call_operand.vmem [shape: bf16[2,8,64], index: 1, kind: input, shape index: {}]
  %s2 = inlined_call_operand.vmem [shape: s8[2,4,8], index: 2, kind: input, shape index: {}]
  %s3 = inlined_call_operand.vmem [shape: s8[2,4,8], index: 3, kind: input, shape index: {}]
  %s4 = inlined_call_operand.vmem [shape: s8[2,4,8], index: 4, kind: input, shape index: {}]
  %s5 = inlined_call_operand.vmem [shape: f32[2,4,32], index: 5, kind: input, shape index: {}]
  %s6 = inlined_call_operand.vmem [shape: bf16[32,32], index: 6, kind: input, shape index: {}]
  %s7 = inlined_call_operand.vmem [shape: f32[1,32], index: 7, kind: input, shape index: {}]
  %s8 = inlined_call_operand.vmem [shape: f32[1,32], index: 8, kind: input, shape index: {}]
  %s9 = inlined_call_operand.vmem [shape: f32[1,32], index: 9, kind: input, shape index: {}]
  %s10 = inlined_call_operand.vmem [shape: f32[2,4,32], index: 10, kind: output, shape index: {0}]
  %s11 = inlined_call_operand.hbm [shape: f32[2,4,4,8], index: 11, kind: output, shape index: {1}]
  %12 = xla_tuple %s10, %s11
  %s13 = sld [smem:[#allocation0]]
  $region81: #{decoder_layer_forward.11} parent=0
    _
  %s15 = ssub.s32 1, %s13
  %s16 = scalar_select 0, %s15, %s13
  $region1: #{decoder_layer_forward.11} parent=0
    #allocation3 [shape = 'u8[16384]{0}', space=vmem, size = 0x4000, scoped, tag = 'output window, operand 1']
    #allocation4 [shape = 's32[2]{0}', space=sflag, size = 0x8, scoped, tag = 'scoped memory for decoder_layer_forward.11']
    %17 = vsyncpa [#allocation4], 0
    %s18 = scalar_lea.sflag [#allocation4], 1
    %19 = vsyncpa %s18, 0
    loop: start=0, step=1, limit=4
    $region2: #{decoder_layer_forward.11} parent=1 // loop_pre_header
      _
    $region3: #{decoder_layer_forward.11} parent=1 // loop_header
      %s21 = sphi 0, %s25
      %p22 = scmp.ge.s32.totalorder %s21, 4
      %s28 = sphi 0, %s40
      %s29 = sphi 0, %s36
      %s30 = sphi 0, %s28
      %s31 = sphi 0, %s29
      %s32 = sphi 0, %s30
      %s33 = sphi 0, %s31
      %s45 = sphi 0, %s47
      %s48 = sphi 0, %s45
      %s49 = sphi 0, %s48
      %s65 = sphi 0, %s49
      %s71 = sphi 0, %s73
      %s74 = sphi 0, %s71
      %s75 = sphi 0, %s74
      %s91 = sphi 0, %s75
      %s99 = sphi 0, %s101
      %s102 = sphi 0, %s99
      %s103 = sphi 0, %s102
      %s119 = sphi 0, %s103
      %s127 = sphi 0, %s129
      %s130 = sphi 0, %s127
      %s131 = sphi 0, %s130
      %s147 = sphi 0, %s131
      %s155 = sphi 0, %s157
      %s158 = sphi 0, %s155
      %s159 = sphi 0, %s158
      %s175 = sphi 0, %s159
      %s183 = sphi 0, %s185
      %s186 = sphi 0, %s183
      %s187 = sphi 0, %s186
      %s203 = sphi 0, %s187
      %s207 = sphi 0, %s207
      %s209 = sphi 0, %s207
      %s210 = sphi 0, %s209
      %s224 = sphi 0, %s210
      %s228 = sphi 0, %s228
      %s230 = sphi 0, %s228
      %s231 = sphi 0, %s230
      %s245 = sphi 0, %s231
      %s249 = sphi 0, %s249
      %s251 = sphi 0, %s249
      %s252 = sphi 0, %s251
      %s266 = sphi 0, %s252
      %s270 = sphi 0, %s270
      %s272 = sphi 0, %s270
      %s273 = sphi 0, %s272
      %s287 = sphi 0, %s273
      %s295 = sphi 0, %s297
      %s298 = sphi 0, %s295
      %s299 = sphi 0, %s298
      %s315 = sphi 0, %s299
      %s323 = sphi 0, %s325
      %s326 = sphi 0, %s323
      %s327 = sphi 0, %s326
      %s343 = sphi 0, %s327
    $region4: #{decoder_layer_forward.11} parent=1 // loop_header_branch
      %24 = sbr.rel (%p22) target = $region8
    $region5: #{decoder_layer_forward.11} parent=1 // loop_body
      %s26 = ssub.s32 %s21, 1
      %s27 = ssub.s32 %s21, 2
      %s34 = sadd.s32 1, %s29
      %p35 = scmp.ge.s32.totalorder %s34, 1
      %s36 = scalar_select %p35, 0, %s34
      %s37 = sadd.s32 1, %s28
      %s38 = scalar_select %p35, %s37, %s28
      %p39 = scmp.ge.s32.totalorder %s38, 2
      %s40 = scalar_select %p39, 0, %s38
      %s41 = ssub.s32 %s28, %s40
      %s42 = ssub.s32 %s29, %s36
      %s43 = sor.u32 %s41, %s42
      %p44 = scmp.eq.s32.totalorder %s43, 0
      %s46 = sadd.s32 %s45, 1
      %s47 = scalar_select %p44, %s45, %s46
      %p50 = pneg %p44
      %p51 = scmp.eq.s32.totalorder %s21, 1
      %p52 = por %p50, %p51
      %p53 = scmp.ne.s32.totalorder %s45, %s48
      %p54 = scmp.eq.s32.totalorder %s21, 0
      %p55 = por %p53, %p54
      %p56 = scmp.ne.s32.totalorder %s45, %s48
      %p57 = scmp.eq.s32.totalorder %s26, 1
      %p58 = por %p56, %p57
      %p59 = scmp.ne.s32.totalorder %s48, %s49
      %p60 = scmp.eq.s32.totalorder %s26, 0
      %p61 = por %p59, %p60
      %p62 = scmp.ne.s32.totalorder %s48, %s49
      %p63 = scmp.eq.s32.totalorder %s27, 1
      %p64 = por %p62, %p63
      %p66 = scmp.ne.s32.totalorder %s49, %s65
      %p67 = scmp.eq.s32.totalorder %s27, 0
      %p68 = por %p66, %p67
      %s69 = ssub.s32 %s28, %s40
      %p70 = scmp.eq.s32.totalorder %s69, 0
      %s72 = sadd.s32 %s71, 1
      %s73 = scalar_select %p70, %s71, %s72
      %p76 = pneg %p70
      %p77 = scmp.eq.s32.totalorder %s21, 1
      %p78 = por %p76, %p77
      %p79 = scmp.ne.s32.totalorder %s71, %s74
      %p80 = scmp.eq.s32.totalorder %s21, 0
      %p81 = por %p79, %p80
      %p82 = scmp.ne.s32.totalorder %s71, %s74
      %p83 = scmp.eq.s32.totalorder %s26, 1
      %p84 = por %p82, %p83
      %p85 = scmp.ne.s32.totalorder %s74, %s75
      %p86 = scmp.eq.s32.totalorder %s26, 0
      %p87 = por %p85, %p86
      %p88 = scmp.ne.s32.totalorder %s74, %s75
      %p89 = scmp.eq.s32.totalorder %s27, 1
      %p90 = por %p88, %p89
      %p92 = scmp.ne.s32.totalorder %s75, %s91
      %p93 = scmp.eq.s32.totalorder %s27, 0
      %p94 = por %p92, %p93
      %s95 = ssub.s32 %s28, %s40
      %s96 = ssub.s32 %s29, %s36
      %s97 = sor.u32 %s95, %s96
      %p98 = scmp.eq.s32.totalorder %s97, 0
      %s100 = sadd.s32 %s99, 1
      %s101 = scalar_select %p98, %s99, %s100
      %p104 = pneg %p98
      %p105 = scmp.eq.s32.totalorder %s21, 1
      %p106 = por %p104, %p105
      %p107 = scmp.ne.s32.totalorder %s99, %s102
      %p108 = scmp.eq.s32.totalorder %s21, 0
      %p109 = por %p107, %p108
      %p110 = scmp.ne.s32.totalorder %s99, %s102
      %p111 = scmp.eq.s32.totalorder %s26, 1
      %p112 = por %p110, %p111
      %p113 = scmp.ne.s32.totalorder %s102, %s103
      %p114 = scmp.eq.s32.totalorder %s26, 0
      %p115 = por %p113, %p114
      %p116 = scmp.ne.s32.totalorder %s102, %s103
      %p117 = scmp.eq.s32.totalorder %s27, 1
      %p118 = por %p116, %p117
      %p120 = scmp.ne.s32.totalorder %s103, %s119
      %p121 = scmp.eq.s32.totalorder %s27, 0
      %p122 = por %p120, %p121
      %s123 = ssub.s32 %s28, %s40
      %s124 = ssub.s32 %s29, %s36
      %s125 = sor.u32 %s123, %s124
      %p126 = scmp.eq.s32.totalorder %s125, 0
      %s128 = sadd.s32 %s127, 1
      %s129 = scalar_select %p126, %s127, %s128
      %p132 = pneg %p126
      %p133 = scmp.eq.s32.totalorder %s21, 1
      %p134 = por %p132, %p133
      %p135 = scmp.ne.s32.totalorder %s127, %s130
      %p136 = scmp.eq.s32.totalorder %s21, 0
      %p137 = por %p135, %p136
      %p138 = scmp.ne.s32.totalorder %s127, %s130
      %p139 = scmp.eq.s32.totalorder %s26, 1
      %p140 = por %p138, %p139
      %p141 = scmp.ne.s32.totalorder %s130, %s131
      %p142 = scmp.eq.s32.totalorder %s26, 0
      %p143 = por %p141, %p142
      %p144 = scmp.ne.s32.totalorder %s130, %s131
      %p145 = scmp.eq.s32.totalorder %s27, 1
      %p146 = por %p144, %p145
      %p148 = scmp.ne.s32.totalorder %s131, %s147
      %p149 = scmp.eq.s32.totalorder %s27, 0
      %p150 = por %p148, %p149
      %s151 = ssub.s32 %s28, %s40
      %s152 = ssub.s32 %s29, %s36
      %s153 = sor.u32 %s151, %s152
      %p154 = scmp.eq.s32.totalorder %s153, 0
      %s156 = sadd.s32 %s155, 1
      %s157 = scalar_select %p154, %s155, %s156
      %p160 = pneg %p154
      %p161 = scmp.eq.s32.totalorder %s21, 1
      %p162 = por %p160, %p161
      %p163 = scmp.ne.s32.totalorder %s155, %s158
      %p164 = scmp.eq.s32.totalorder %s21, 0
      %p165 = por %p163, %p164
      %p166 = scmp.ne.s32.totalorder %s155, %s158
      %p167 = scmp.eq.s32.totalorder %s26, 1
      %p168 = por %p166, %p167
      %p169 = scmp.ne.s32.totalorder %s158, %s159
      %p170 = scmp.eq.s32.totalorder %s26, 0
      %p171 = por %p169, %p170
      %p172 = scmp.ne.s32.totalorder %s158, %s159
      %p173 = scmp.eq.s32.totalorder %s27, 1
      %p174 = por %p172, %p173
      %p176 = scmp.ne.s32.totalorder %s159, %s175
      %p177 = scmp.eq.s32.totalorder %s27, 0
      %p178 = por %p176, %p177
      %s179 = ssub.s32 %s28, %s40
      %s180 = ssub.s32 %s29, %s36
      %s181 = sor.u32 %s179, %s180
      %p182 = scmp.eq.s32.totalorder %s181, 0
      %s184 = sadd.s32 %s183, 1
      %s185 = scalar_select %p182, %s183, %s184
      %p188 = pneg %p182
      %p189 = scmp.eq.s32.totalorder %s21, 1
      %p190 = por %p188, %p189
      %p191 = scmp.ne.s32.totalorder %s183, %s186
      %p192 = scmp.eq.s32.totalorder %s21, 0
      %p193 = por %p191, %p192
      %p194 = scmp.ne.s32.totalorder %s183, %s186
      %p195 = scmp.eq.s32.totalorder %s26, 1
      %p196 = por %p194, %p195
      %p197 = scmp.ne.s32.totalorder %s186, %s187
      %p198 = scmp.eq.s32.totalorder %s26, 0
      %p199 = por %p197, %p198
      %p200 = scmp.ne.s32.totalorder %s186, %s187
      %p201 = scmp.eq.s32.totalorder %s27, 1
      %p202 = por %p200, %p201
      %p204 = scmp.ne.s32.totalorder %s187, %s203
      %p205 = scmp.eq.s32.totalorder %s27, 0
      %p206 = por %p204, %p205
      %s208 = sadd.s32 %s207, 1
      %p211 = scmp.eq.s32.totalorder %s21, 1
      %p212 = scmp.ne.s32.totalorder %s207, %s209
      %p213 = scmp.eq.s32.totalorder %s21, 0
      %p214 = por %p212, %p213
      %p215 = scmp.ne.s32.totalorder %s207, %s209
      %p216 = scmp.eq.s32.totalorder %s26, 1
      %p217 = por %p215, %p216
      %p218 = scmp.ne.s32.totalorder %s209, %s210
      %p219 = scmp.eq.s32.totalorder %s26, 0
      %p220 = por %p218, %p219
      %p221 = scmp.ne.s32.totalorder %s209, %s210
      %p222 = scmp.eq.s32.totalorder %s27, 1
      %p223 = por %p221, %p222
      %p225 = scmp.ne.s32.totalorder %s210, %s224
      %p226 = scmp.eq.s32.totalorder %s27, 0
      %p227 = por %p225, %p226
      %s229 = sadd.s32 %s228, 1
      %p232 = scmp.eq.s32.totalorder %s21, 1
      %p233 = scmp.ne.s32.totalorder %s228, %s230
      %p234 = scmp.eq.s32.totalorder %s21, 0
      %p235 = por %p233, %p234
      %p236 = scmp.ne.s32.totalorder %s228, %s230
      %p237 = scmp.eq.s32.totalorder %s26, 1
      %p238 = por %p236, %p237
      %p239 = scmp.ne.s32.totalorder %s230, %s231
      %p240 = scmp.eq.s32.totalorder %s26, 0
      %p241 = por %p239, %p240
      %p242 = scmp.ne.s32.totalorder %s230, %s231
      %p243 = scmp.eq.s32.totalorder %s27, 1
      %p244 = por %p242, %p243
      %p246 = scmp.ne.s32.totalorder %s231, %s245
      %p247 = scmp.eq.s32.totalorder %s27, 0
      %p248 = por %p246, %p247
      %s250 = sadd.s32 %s249, 1
      %p253 = scmp.eq.s32.totalorder %s21, 1
      %p254 = scmp.ne.s32.totalorder %s249, %s251
      %p255 = scmp.eq.s32.totalorder %s21, 0
      %p256 = por %p254, %p255
      %p257 = scmp.ne.s32.totalorder %s249, %s251
      %p258 = scmp.eq.s32.totalorder %s26, 1
      %p259 = por %p257, %p258
      %p260 = scmp.ne.s32.totalorder %s251, %s252
      %p261 = scmp.eq.s32.totalorder %s26, 0
      %p262 = por %p260, %p261
      %p263 = scmp.ne.s32.totalorder %s251, %s252
      %p264 = scmp.eq.s32.totalorder %s27, 1
      %p265 = por %p263, %p264
      %p267 = scmp.ne.s32.totalorder %s252, %s266
      %p268 = scmp.eq.s32.totalorder %s27, 0
      %p269 = por %p267, %p268
      %s271 = sadd.s32 %s270, 1
      %p274 = scmp.eq.s32.totalorder %s21, 1
      %p275 = scmp.ne.s32.totalorder %s270, %s272
      %p276 = scmp.eq.s32.totalorder %s21, 0
      %p277 = por %p275, %p276
      %p278 = scmp.ne.s32.totalorder %s270, %s272
      %p279 = scmp.eq.s32.totalorder %s26, 1
      %p280 = por %p278, %p279
      %p281 = scmp.ne.s32.totalorder %s272, %s273
      %p282 = scmp.eq.s32.totalorder %s26, 0
      %p283 = por %p281, %p282
      %p284 = scmp.ne.s32.totalorder %s272, %s273
      %p285 = scmp.eq.s32.totalorder %s27, 1
      %p286 = por %p284, %p285
      %p288 = scmp.ne.s32.totalorder %s273, %s287
      %p289 = scmp.eq.s32.totalorder %s27, 0
      %p290 = por %p288, %p289
      %s291 = ssub.s32 %s28, %s40
      %s292 = ssub.s32 %s29, %s36
      %s293 = sor.u32 %s291, %s292
      %p294 = scmp.eq.s32.totalorder %s293, 0
      %s296 = sadd.s32 %s295, 1
      %s297 = scalar_select %p294, %s295, %s296
      %p300 = pneg %p294
      %p301 = scmp.eq.s32.totalorder %s21, 1
      %p302 = por %p300, %p301
      %p303 = scmp.ne.s32.totalorder %s295, %s298
      %p304 = scmp.eq.s32.totalorder %s21, 0
      %p305 = por %p303, %p304
      %p306 = scmp.ne.s32.totalorder %s295, %s298
      %p307 = scmp.eq.s32.totalorder %s26, 1
      %p308 = por %p306, %p307
      %p309 = scmp.ne.s32.totalorder %s298, %s299
      %p310 = scmp.eq.s32.totalorder %s26, 0
      %p311 = por %p309, %p310
      %p312 = scmp.ne.s32.totalorder %s298, %s299
      %p313 = scmp.eq.s32.totalorder %s27, 1
      %p314 = por %p312, %p313
      %p316 = scmp.ne.s32.totalorder %s299, %s315
      %p317 = scmp.eq.s32.totalorder %s27, 0
      %p318 = por %p316, %p317
      %s319 = ssub.s32 %s28, %s40
      %s320 = ssub.s32 %s29, %s36
      %s321 = sor.u32 %s319, %s320
      %p322 = scmp.eq.s32.totalorder %s321, 0
      %s324 = sadd.s32 %s323, 1
      %s325 = scalar_select %p322, %s323, %s324
      %p328 = pneg %p322
      %p329 = scmp.eq.s32.totalorder %s21, 1
      %p330 = por %p328, %p329
      %p331 = scmp.ne.s32.totalorder %s323, %s326
      %p332 = scmp.eq.s32.totalorder %s21, 0
      %p333 = por %p331, %p332
      %p334 = scmp.ne.s32.totalorder %s323, %s326
      %p335 = scmp.eq.s32.totalorder %s26, 1
      %p336 = por %p334, %p335
      %p337 = scmp.ne.s32.totalorder %s326, %s327
      %p338 = scmp.eq.s32.totalorder %s26, 0
      %p339 = por %p337, %p338
      %p340 = scmp.ne.s32.totalorder %s326, %s327
      %p341 = scmp.eq.s32.totalorder %s27, 1
      %p342 = por %p340, %p341
      %p344 = scmp.ne.s32.totalorder %s327, %s343
      %p345 = scmp.eq.s32.totalorder %s27, 0
      %p346 = por %p344, %p345
      %p347 = scmp.le.s32.totalorder 1, %s21
      %p348 = scmp.lt.s32.totalorder %s21, 3
      %p349 = pnand %p347, %p348
      %p350 = pneg %p349
      // Predicated region
      $region9: #{decoder_layer_forward.11} parent=5 // pred_check
        _
      $region10: #{decoder_layer_forward.11} parent=5 // pred_check_branch
        %352 = sbr.rel (%p349) target = $region12
      $region11: #{decoder_layer_forward.11} parent=5 // pred_region
        %s353 = ssub.s32 %s21, 1
        // Predicated region
        $region13: #{decoder_layer_forward.11} parent=11 // pred_check
          %p354 = pneg %p220
        $region14: #{decoder_layer_forward.11} parent=11 // pred_check_branch
          %356 = sbr.rel (%p354) target = $region16
        $region15: #{decoder_layer_forward.11} parent=11 // pred_region
          _
        $region16: #{decoder_layer_forward.11} parent=11 // pred_fallthru
          _
        // Predicated region
        $region17: #{decoder_layer_forward.11} parent=11 // pred_check
          %p357 = pneg %p241
        $region18: #{decoder_layer_forward.11} parent=11 // pred_check_branch
          %359 = sbr.rel (%p357) target = $region20
        $region19: #{decoder_layer_forward.11} parent=11 // pred_region
          _
        $region20: #{decoder_layer_forward.11} parent=11 // pred_fallthru
          _
        // Predicated region
        $region21: #{decoder_layer_forward.11} parent=11 // pred_check
          %p360 = pneg %p262
        $region22: #{decoder_layer_forward.11} parent=11 // pred_check_branch
          %362 = sbr.rel (%p360) target = $region24
        $region23: #{decoder_layer_forward.11} parent=11 // pred_region
          _
        $region24: #{decoder_layer_forward.11} parent=11 // pred_fallthru
          _
        // Predicated region
        $region25: #{decoder_layer_forward.11} parent=11 // pred_check
          %p363 = pneg %p283
        $region26: #{decoder_layer_forward.11} parent=11 // pred_check_branch
          %365 = sbr.rel (%p363) target = $region28
        $region27: #{decoder_layer_forward.11} parent=11 // pred_region
          _
        $region28: #{decoder_layer_forward.11} parent=11 // pred_fallthru
          _
      $region12: #{decoder_layer_forward.11} parent=5 // pred_fallthru
        _
      %p366 = scmp.lt.s32.totalorder %s21, 2
      // Predicated region
      $region29: #{decoder_layer_forward.11} parent=5 // pred_check
        %p367 = pneg %p366
      $region30: #{decoder_layer_forward.11} parent=5 // pred_check_branch
        %369 = sbr.rel (%p367) target = $region32
      $region31: #{decoder_layer_forward.11} parent=5 // pred_region
        // Predicated region
        $region33: #{decoder_layer_forward.11} parent=31 // pred_check
          %p370 = pneg %p55
        $region34: #{decoder_layer_forward.11} parent=31 // pred_check_branch
          %372 = sbr.rel (%p370) target = $region36
        $region35: #{decoder_layer_forward.11} parent=31 // pred_region
          %p373 = scmp.lt.s32.totalorder %s28, 1
          %s374 = scalar_select %p373, %s28, 1
          %p375 = scmp.lt.s32.totalorder %s29, 0
          %s376 = scalar_select %p375, %s29, 0
          %s377 = sadd.s32 %s376, %s374
          %s378 = smul.addr %s377, 2
          %s379 = scalar_lea.vmem %s0, %s378
        $region36: #{decoder_layer_forward.11} parent=31 // pred_fallthru
          _
        // Predicated region
        $region37: #{decoder_layer_forward.11} parent=31 // pred_check
          %p380 = pneg %p81
        $region38: #{decoder_layer_forward.11} parent=31 // pred_check_branch
          %382 = sbr.rel (%p380) target = $region40
        $region39: #{decoder_layer_forward.11} parent=31 // pred_region
          %p383 = scmp.lt.s32.totalorder %s28, 1
          %s384 = scalar_select %p383, %s28, 1
          %s385 = smul.addr %s384, 4
          %s386 = scalar_lea.vmem %s1, %s385
        $region40: #{decoder_layer_forward.11} parent=31 // pred_fallthru
          _
        // Predicated region
        $region41: #{decoder_layer_forward.11} parent=31 // pred_check
          %p387 = pneg %p109
        $region42: #{decoder_layer_forward.11} parent=31 // pred_check_branch
          %389 = sbr.rel (%p387) target = $region44
        $region43: #{decoder_layer_forward.11} parent=31 // pred_region
          %p390 = scmp.lt.s32.totalorder %s28, 1
          %s391 = scalar_select %p390, %s28, 1
          %p392 = scmp.lt.s32.totalorder %s29, 0
          %s393 = scalar_select %p392, %s29, 0
          %s394 = sadd.s32 %s393, %s391
          %s395 = scalar_lea.vmem %s2, %s394
        $region44: #{decoder_layer_forward.11} parent=31 // pred_fallthru
          _
        // Predicated region
        $region45: #{decoder_layer_forward.11} parent=31 // pred_check
          %p396 = pneg %p137
        $region46: #{decoder_layer_forward.11} parent=31 // pred_check_branch
          %398 = sbr.rel (%p396) target = $region48
        $region47: #{decoder_layer_forward.11} parent=31 // pred_region
          %p399 = scmp.lt.s32.totalorder %s28, 1
          %s400 = scalar_select %p399, %s28, 1
          %p401 = scmp.lt.s32.totalorder %s29, 0
          %s402 = scalar_select %p401, %s29, 0
          %s403 = sadd.s32 %s402, %s400
          %s404 = scalar_lea.vmem %s3, %s403
        $region48: #{decoder_layer_forward.11} parent=31 // pred_fallthru
          _
        // Predicated region
        $region49: #{decoder_layer_forward.11} parent=31 // pred_check
          %p405 = pneg %p165
        $region50: #{decoder_layer_forward.11} parent=31 // pred_check_branch
          %407 = sbr.rel (%p405) target = $region52
        $region51: #{decoder_layer_forward.11} parent=31 // pred_region
          %p408 = scmp.lt.s32.totalorder %s28, 1
          %s409 = scalar_select %p408, %s28, 1
          %p410 = scmp.lt.s32.totalorder %s29, 0
          %s411 = scalar_select %p410, %s29, 0
          %s412 = sadd.s32 %s411, %s409
          %s413 = scalar_lea.vmem %s4, %s412
        $region52: #{decoder_layer_forward.11} parent=31 // pred_fallthru
          _
        // Predicated region
        $region53: #{decoder_layer_forward.11} parent=31 // pred_check
          %p414 = pneg %p193
        $region54: #{decoder_layer_forward.11} parent=31 // pred_check_branch
          %416 = sbr.rel (%p414) target = $region56
        $region55: #{decoder_layer_forward.11} parent=31 // pred_region
          %p417 = scmp.lt.s32.totalorder %s28, 1
          %s418 = scalar_select %p417, %s28, 1
          %p419 = scmp.lt.s32.totalorder %s29, 0
          %s420 = scalar_select %p419, %s29, 0
          %s421 = sadd.s32 %s420, %s418
          %s422 = smul.addr %s421, 4
          %s423 = scalar_lea.vmem %s5, %s422
        $region56: #{decoder_layer_forward.11} parent=31 // pred_fallthru
          _
      $region32: #{decoder_layer_forward.11} parent=5 // pred_fallthru
        _
      %p424 = scmp.le.s32.totalorder 1, %s21
      %p425 = scmp.lt.s32.totalorder %s21, 3
      %p426 = pnand %p424, %p425
      %p427 = pneg %p426
      // Predicated region
      $region57: #{decoder_layer_forward.11} parent=5 // pred_check
        _
      $region58: #{decoder_layer_forward.11} parent=5 // pred_check_branch
        %429 = sbr.rel (%p426) target = $region60
      $region59: #{decoder_layer_forward.11} parent=5 // pred_region
        %s430 = ssub.s32 %s21, 1
        %p431 = scmp.lt.s32.totalorder %s30, 1
        %s432 = scalar_select %p431, %s30, 1
        %p433 = scmp.lt.s32.totalorder %s31, 0
        %s434 = scalar_select %p433, %s31, 0
        %s435 = sadd.s32 %s434, %s432
        %s436 = smul.addr %s435, 2
        %s437 = scalar_lea.vmem %s0, %s436
        %p438 = pneg %p61
        %p439 = pneg %p58
        %p440 = scmp.lt.s32.totalorder %s30, 1
        %s441 = scalar_select %p440, %s30, 1
        %s442 = smul.addr %s441, 4
        %s443 = scalar_lea.vmem %s1, %s442
        %p444 = pneg %p87
        %p445 = pneg %p84
        %p446 = scmp.lt.s32.totalorder %s30, 1
        %s447 = scalar_select %p446, %s30, 1
        %p448 = scmp.lt.s32.totalorder %s31, 0
        %s449 = scalar_select %p448, %s31, 0
        %s450 = sadd.s32 %s449, %s447
        %s451 = scalar_lea.vmem %s2, %s450
        %p452 = pneg %p115
        %p453 = pneg %p112
        %p454 = scmp.lt.s32.totalorder %s30, 1
        %s455 = scalar_select %p454, %s30, 1
        %p456 = scmp.lt.s32.totalorder %s31, 0
        %s457 = scalar_select %p456, %s31, 0
        %s458 = sadd.s32 %s457, %s455
        %s459 = scalar_lea.vmem %s3, %s458
        %p460 = pneg %p143
        %p461 = pneg %p140
        %p462 = scmp.lt.s32.totalorder %s30, 1
        %s463 = scalar_select %p462, %s30, 1
        %p464 = scmp.lt.s32.totalorder %s31, 0
        %s465 = scalar_select %p464, %s31, 0
        %s466 = sadd.s32 %s465, %s463
        %s467 = scalar_lea.vmem %s4, %s466
        %p468 = pneg %p171
        %p469 = pneg %p168
        %p470 = scmp.lt.s32.totalorder %s30, 1
        %s471 = scalar_select %p470, %s30, 1
        %p472 = scmp.lt.s32.totalorder %s31, 0
        %s473 = scalar_select %p472, %s31, 0
        %s474 = sadd.s32 %s473, %s471
        %s475 = smul.addr %s474, 4
        %s476 = scalar_lea.vmem %s5, %s475
        %p477 = pneg %p199
        %p478 = pneg %p196
        %p479 = pneg %p220
        %p480 = pneg %p217
        %p481 = pneg %p241
        %p482 = pneg %p238
        %p483 = pneg %p262
        %p484 = pneg %p259
        %p485 = pneg %p283
        %p486 = pneg %p280
        %p487 = pneg %p311
        %p488 = pneg %p308
        %p489 = scmp.lt.s32.totalorder %s30, 1
        %s490 = scalar_select %p489, %s30, 1
        %p491 = scmp.lt.s32.totalorder %s31, 0
        %s492 = scalar_select %p491, %s31, 0
        %s493 = sadd.s32 %s492, %s490
        %s494 = smul.addr %s493, 4
        %s495 = scalar_lea.vmem %s10, %s494
        %p496 = pneg %p339
        %p497 = pneg %p336
        %s498 = sand.u32 %s326, 1
        %s499 = scalar_lea.sflag [#allocation4], %s498
        %s500 = sand.u32 %s326, 1
        %s501 = smul.addr %s500, 16
        %s502 = scalar_lea.vmem [#allocation3], %s501
        %p503 = scmp.lt.s32.totalorder %s30, 1
        %s504 = scalar_select %p503, %s30, 1
        %p505 = scmp.lt.s32.totalorder %s31, 0
        %s506 = scalar_select %p505, %s31, 0
        %s507 = sadd.s32 %s506, %s504
        %s508 = smul.addr %s507, 2
        %s509 = scalar_lea.vmem %s0, %s508
        %p510 = scmp.lt.s32.totalorder %s30, 1
        %s511 = scalar_select %p510, %s30, 1
        %s512 = smul.addr %s511, 4
        %s513 = scalar_lea.vmem %s1, %s512
        %p514 = scmp.lt.s32.totalorder %s30, 1
        %s515 = scalar_select %p514, %s30, 1
        %p516 = scmp.lt.s32.totalorder %s31, 0
        %s517 = scalar_select %p516, %s31, 0
        %s518 = sadd.s32 %s517, %s515
        %s519 = scalar_lea.vmem %s2, %s518
        %p520 = scmp.lt.s32.totalorder %s30, 1
        %s521 = scalar_select %p520, %s30, 1
        %p522 = scmp.lt.s32.totalorder %s31, 0
        %s523 = scalar_select %p522, %s31, 0
        %s524 = sadd.s32 %s523, %s521
        %s525 = scalar_lea.vmem %s3, %s524
        %p526 = scmp.lt.s32.totalorder %s30, 1
        %s527 = scalar_select %p526, %s30, 1
        %p528 = scmp.lt.s32.totalorder %s31, 0
        %s529 = scalar_select %p528, %s31, 0
        %s530 = sadd.s32 %s529, %s527
        %s531 = scalar_lea.vmem %s4, %s530
        %p532 = scmp.lt.s32.totalorder %s30, 1
        %s533 = scalar_select %p532, %s30, 1
        %p534 = scmp.lt.s32.totalorder %s31, 0
        %s535 = scalar_select %p534, %s31, 0
        %s536 = sadd.s32 %s535, %s533
        %s537 = smul.addr %s536, 4
        %s538 = scalar_lea.vmem %s5, %s537
        %p539 = scmp.lt.s32.totalorder %s30, 1
        %s540 = scalar_select %p539, %s30, 1
        %p541 = scmp.lt.s32.totalorder %s31, 0
        %s542 = scalar_select %p541, %s31, 0
        %s543 = sadd.s32 %s542, %s540
        %s544 = smul.addr %s543, 4
        %s545 = scalar_lea.vmem %s10, %s544
        %v547 = vld [vmem:[%s509] sm:$0x3]
        %v548 = vld [vmem:[%s513] sm:$0xf]
        %v549 = vld [vmem:[%s519] sm:$0x1]
        %v550 = vunpack.c.0.s8 %v549
        %v551 = vcvt.s32.f32 %v550
        %v552 = vmul.f32 %v551, -1e+18
        %v553 = vld [vmem:[%s525] sm:$0x1]
        %v554 = vunpack.c.0.s8 %v553
        %v555 = vcvt.s32.f32 %v554
        %v556 = vmul.f32 %v555, -1e+18
        %v557 = vld [vmem:[%s531] sm:$0x1]
        %v558 = vunpack.c.0.s8 %v557
        %v559 = vcvt.s32.f32 %v558
        %v560 = vsub.f32 1.0, %v559
        %vm561 = vcmask 64512
        %v563 = vsel %vm561, %v547, 0
        %v566 = vsel %vm561, %v548, 0
        %568 = vmatprep.subr.bf16.mxu0 0
        %569 = vmatpush1.bf16.xpose.msra.mxu0 0
        %570 = vmatprep.subr.bf16.mxu0 0
        %571 = vmatpush1.bf16.xpose.msra.mxu0 0
        %572 = vmatprep.subr.bf16.mxu0 0
        %573 = vmatpush1.bf16.xpose.msra.mxu0 0
        %574 = vmatprep.subr.bf16.mxu0 0
        %575 = vmatpush1.bf16.xpose.msra.mxu0 0
        %576 = vmatprep.subr.bf16.mxu0 0
        %577 = vmatpush1.bf16.xpose.msra.mxu0 0
        %578 = vmatprep.subr.bf16.mxu0 0
        %579 = vmatpush1.bf16.xpose.msra.mxu0 0
        %580 = vmatprep.subr.bf16.mxu0 0
        %581 = vmatpush1.bf16.xpose.msra.mxu0 0
        %582 = vmatprep.subr.bf16.mxu0 0
        %583 = vmatpush1.bf16.xpose.msra.mxu0 %v566
        %584 = vmatprep.subr.bf16.mxu0 0
        %585 = vmatpush2.bf16.xpose.msra.mxu0 0
        %586 = vmatprep.subr.bf16.mxu0 0
        %587 = vmatpush2.bf16.xpose.msra.mxu0 0
        %588 = vmatprep.subr.bf16.mxu0 0
        %589 = vmatpush2.bf16.xpose.msra.mxu0 0
        %590 = vmatprep.subr.bf16.mxu0 0
        %591 = vmatpush2.bf16.xpose.msra.mxu0 0
        %592 = vmatprep.subr.bf16.mxu0 0
        %593 = vmatpush2.bf16.xpose.msra.mxu0 0
        %594 = vmatprep.subr.bf16.mxu0 0
        %595 = vmatpush2.bf16.xpose.msra.mxu0 0
        %596 = vmatprep.subr.bf16.mxu0 0
        %597 = vmatpush2.bf16.xpose.msra.mxu0 0
        %598 = vmatprep.subr.bf16.mxu0 0
        %599 = vmatpush2.bf16.xpose.msra.mxu0 0
        %600 = vmatprep.mubr.bf16.mxu0 0
        %601 = vmatmul.mubr.bf16.gmra.mxu0 %v563
        %v602 = vpop.f32.mrf.mxu0
        %v603 = vadd.f32 0.0, %v602
        %v604 = vpop.f32.mrf.mxu0
        %v605 = vpop.f32.mrf.mxu0
        %v606 = vpop.f32.mrf.mxu0
        %607 = vdwg.mxu0
        %v608 = vadd.f32 %v603, %v552
        %vm609 = vcmask 60416
        %v610 = vsel %vm609, %v608, -inf
        %611 = vmax.xlane.f32.xlu0 %v610
        %v612 = vpop.xlane.xlu0 %611
        %v613 = vsub.f32 %v608, %v612
        %v614 = vmul.f32 %v613, 1.442695
        %v615 = vpow.pop %v614
        %v616 = vsel %vm609, %v615, 0.0
        %617 = vadd.xlane.f32.xlu0 %v616
        %v618 = vpop.xlane.xlu0 %617
        %v619 = vrcp.pop %v618
        %v620 = vmul.f32 %v615, %v619
        %v621 = vadd.f32 %v603, %v556
        %v622 = vsel %vm609, %v621, -inf
        %623 = vmax.xlane.f32.xlu0 %v622
        %v624 = vpop.xlane.xlu0 %623
        %v625 = vsub.f32 %v621, %v624
        %v626 = vmul.f32 %v625, 1.442695
        %v627 = vpow.pop %v626
        %v628 = vsel %vm609, %v627, 0.0
        %629 = vadd.xlane.f32.xlu0 %v628
        %v630 = vpop.xlane.xlu0 %629
        %v631 = vrcp.pop %v630
        %v632 = vmul.f32 %v627, %v631
        %v633 = vmul.f32 %v615, %v560
        %v634 = vmul.f32 %v627, %v560
        %v635 = vsel %vm609, %v633, 0.0
        %636 = vadd.xlane.f32.xlu0 %v635
        %v637 = vpop.xlane.xlu0 %636
        %v638 = vmax.f32 %v637, 1e-30
        %v639 = vrcp.pop %v638
        %v640 = vmul.f32 %v633, %v639
        %641 = vst.msk [vmem:[%s502] sm:$0xf] %vm609, %v640
        %v642 = vsel %vm609, %v634, 0.0
        %643 = vadd.xlane.f32.xlu0 %v642
        %v644 = vpop.xlane.xlu0 %643
        %v645 = vmax.f32 %v644, 1e-30
        %v646 = vrcp.pop %v645
        %v647 = vmul.f32 %v634, %v646
        %648 = vst.msk [vmem:[#allocation2] sm:$0xf] %vm609, %v647
        %v649 = vpack.c.bf16 %v620, %v620
        %v651 = vunpack.c.l.b16 %v548
        %v652 = vpack.c.b16 %v651, %v651
        %653 = vrot.lane.b32.xlu0 %v652, 96
        %v654 = vpop.permute.xlu0 %653
        %v656 = vsel %vm561, %v649, 0
        %vm658 = vcmask 1043456
        %v660 = vsel %vm658, %v654, 0
        %662 = vmatprep.subr.bf16.mxu0 0
        %663 = vmatpush1.bf16.msra.mxu0 0
        %664 = vmatprep.subr.bf16.mxu0 0
        %665 = vmatpush1.bf16.msra.mxu0 0
        %666 = vmatprep.subr.bf16.mxu0 0
        %667 = vmatpush1.bf16.msra.mxu0 0
        %668 = vmatprep.subr.bf16.mxu0 0
        %669 = vmatpush1.bf16.msra.mxu0 0
        %670 = vmatprep.subr.bf16.mxu0 0
        %671 = vmatpush1.bf16.msra.mxu0 0
        %672 = vmatprep.subr.bf16.mxu0 0
        %673 = vmatpush1.bf16.msra.mxu0 0
        %674 = vmatprep.subr.bf16.mxu0 0
        %675 = vmatpush1.bf16.msra.mxu0 0
        %676 = vmatprep.subr.bf16.mxu0 0
        %677 = vmatpush1.bf16.msra.mxu0 %v660
        %678 = vmatprep.subr.bf16.mxu0 0
        %679 = vmatpush2.bf16.msra.mxu0 0
        %680 = vmatprep.subr.bf16.mxu0 0
        %681 = vmatpush2.bf16.msra.mxu0 0
        %682 = vmatprep.subr.bf16.mxu0 0
        %683 = vmatpush2.bf16.msra.mxu0 0
        %684 = vmatprep.subr.bf16.mxu0 0
        %685 = vmatpush2.bf16.msra.mxu0 0
        %686 = vmatprep.subr.bf16.mxu0 0
        %687 = vmatpush2.bf16.msra.mxu0 0
        %688 = vmatprep.subr.bf16.mxu0 0
        %689 = vmatpush2.bf16.msra.mxu0 0
        %690 = vmatprep.subr.bf16.mxu0 0
        %691 = vmatpush2.bf16.msra.mxu0 0
        %692 = vmatprep.subr.bf16.mxu0 0
        %693 = vmatpush2.bf16.msra.mxu0 0
        %694 = vmatprep.mubr.bf16.mxu0 0
        %695 = vmatmul.mubr.bf16.gmra.mxu0 %v656
        %v696 = vpop.f32.mrf.mxu0
        %v697 = vadd.f32 0.0, %v696
        %v698 = vpop.f32.mrf.mxu0
        %v699 = vpop.f32.mrf.mxu0
        %v700 = vpop.f32.mrf.mxu0
        %701 = vdwg.mxu0
        %v702 = vpack.c.bf16 %v697, %v697
        %v703 = vpack.c.bf16 %v632, %v632
        %v705 = vsel %vm561, %v703, 0
        %707 = vmatprep.subr.bf16.mxu0 0
        %708 = vmatpush1.bf16.msra.mxu0 0
        %709 = vmatprep.subr.bf16.mxu0 0
        %710 = vmatpush1.bf16.msra.mxu0 0
        %711 = vmatprep.subr.bf16.mxu0 0
        %712 = vmatpush1.bf16.msra.mxu0 0
        %713 = vmatprep.subr.bf16.mxu0 0
        %714 = vmatpush1.bf16.msra.mxu0 0
        %715 = vmatprep.subr.bf16.mxu0 0
        %716 = vmatpush1.bf16.msra.mxu0 0
        %717 = vmatprep.subr.bf16.mxu0 0
        %718 = vmatpush1.bf16.msra.mxu0 0
        %719 = vmatprep.subr.bf16.mxu0 0
        %720 = vmatpush1.bf16.msra.mxu0 0
        %721 = vmatprep.subr.bf16.mxu0 0
        %722 = vmatpush1.bf16.msra.mxu0 %v660
        %723 = vmatprep.subr.bf16.mxu0 0
        %724 = vmatpush2.bf16.msra.mxu0 0
        %725 = vmatprep.subr.bf16.mxu0 0
        %726 = vmatpush2.bf16.msra.mxu0 0
        %727 = vmatprep.subr.bf16.mxu0 0
        %728 = vmatpush2.bf16.msra.mxu0 0
        %729 = vmatprep.subr.bf16.mxu0 0
        %730 = vmatpush2.bf16.msra.mxu0 0
        %731 = vmatprep.subr.bf16.mxu0 0
        %732 = vmatpush2.bf16.msra.mxu0 0
        %733 = vmatprep.subr.bf16.mxu0 0
        %734 = vmatpush2.bf16.msra.mxu0 0
        %735 = vmatprep.subr.bf16.mxu0 0
        %736 = vmatpush2.bf16.msra.mxu0 0
        %737 = vmatprep.subr.bf16.mxu0 0
        %738 = vmatpush2.bf16.msra.mxu0 0
        %739 = vmatprep.mubr.bf16.mxu0 0
        %740 = vmatmul.mubr.bf16.gmra.mxu0 %v705
        %v741 = vpop.f32.mrf.mxu0
        %v742 = vadd.f32 0.0, %v741
        %v743 = vpop.f32.mrf.mxu0
        %v744 = vpop.f32.mrf.mxu0
        %v745 = vpop.f32.mrf.mxu0
        %746 = vdwg.mxu0
        %v747 = vpack.c.bf16 %v742, %v742
        %v750 = vunpack.c.l.s4 1983009808
        %v751 = vunpack.c.0.s8 %v750
        %v752 = vlaneseq
        %v753 = vshrl.u32 %v752, 7
        %v754 = vsub.s32 %v751, %v753
        %v755 = vrot.slane %v547, %v754
        %756 = vrot.lane.b32.xlu0 %v755, 120
        %v757 = vpop.permute.xlu0 %756
        %758 = vrot.lane.b32.xlu0 %v652, 120
        %v759 = vpop.permute.xlu0 %758
        %v761 = vsel %vm561, %v757, 0
        %v764 = vsel %vm561, %v759, 0
        %766 = vmatprep.subr.bf16.mxu0 0
        %767 = vmatpush1.bf16.xpose.msra.mxu0 0
        %768 = vmatprep.subr.bf16.mxu0 0
        %769 = vmatpush1.bf16.xpose.msra.mxu0 0
        %770 = vmatprep.subr.bf16.mxu0 0
        %771 = vmatpush1.bf16.xpose.msra.mxu0 0
        %772 = vmatprep.subr.bf16.mxu0 0
        %773 = vmatpush1.bf16.xpose.msra.mxu0 0
        %774 = vmatprep.subr.bf16.mxu0 0
        %775 = vmatpush1.bf16.xpose.msra.mxu0 0
        %776 = vmatprep.subr.bf16.mxu0 0
        %777 = vmatpush1.bf16.xpose.msra.mxu0 0
        %778 = vmatprep.subr.bf16.mxu0 0
        %779 = vmatpush1.bf16.xpose.msra.mxu0 0
        %780 = vmatprep.subr.bf16.mxu0 0
        %781 = vmatpush1.bf16.xpose.msra.mxu0 %v764
        %782 = vmatprep.subr.bf16.mxu0 0
        %783 = vmatpush2.bf16.xpose.msra.mxu0 0
        %784 = vmatprep.subr.bf16.mxu0 0
        %785 = vmatpush2.bf16.xpose.msra.mxu0 0
        %786 = vmatprep.subr.bf16.mxu0 0
        %787 = vmatpush2.bf16.xpose.msra.mxu0 0
        %788 = vmatprep.subr.bf16.mxu0 0
        %789 = vmatpush2.bf16.xpose.msra.mxu0 0
        %790 = vmatprep.subr.bf16.mxu0 0
        %791 = vmatpush2.bf16.xpose.msra.mxu0 0
        %792 = vmatprep.subr.bf16.mxu0 0
        %793 = vmatpush2.bf16.xpose.msra.mxu0 0
        %794 = vmatprep.subr.bf16.mxu0 0
        %795 = vmatpush2.bf16.xpose.msra.mxu0 0
        %796 = vmatprep.subr.bf16.mxu0 0
        %797 = vmatpush2.bf16.xpose.msra.mxu0 0
        %798 = vmatprep.mubr.bf16.mxu0 0
        %799 = vmatmul.mubr.bf16.gmra.mxu0 %v761
        %v800 = vpop.f32.mrf.mxu0
        %v801 = vadd.f32 0.0, %v800
        %v802 = vpop.f32.mrf.mxu0
        %v803 = vpop.f32.mrf.mxu0
        %v804 = vpop.f32.mrf.mxu0
        %805 = vdwg.mxu0
        %v806 = vadd.f32 %v801, %v552
        %v807 = vsel %vm609, %v806, -inf
        %808 = vmax.xlane.f32.xlu0 %v807
        %v809 = vpop.xlane.xlu0 %808
        %v810 = vsub.f32 %v806, %v809
        %v811 = vmul.f32 %v810, 1.442695
        %v812 = vpow.pop %v811
        %v813 = vsel %vm609, %v812, 0.0
        %814 = vadd.xlane.f32.xlu0 %v813
        %v815 = vpop.xlane.xlu0 %814
        %v816 = vrcp.pop %v815
        %v817 = vmul.f32 %v812, %v816
        %v818 = vadd.f32 %v801, %v556
        %v819 = vsel %vm609, %v818, -inf
        %820 = vmax.xlane.f32.xlu0 %v819
        %v821 = vpop.xlane.xlu0 %820
        %v822 = vsub.f32 %v818, %v821
        %v823 = vmul.f32 %v822, 1.442695
        %v824 = vpow.pop %v823
        %v825 = vsel %vm609, %v824, 0.0
        %826 = vadd.xlane.f32.xlu0 %v825
        %v827 = vpop.xlane.xlu0 %826
        %v828 = vrcp.pop %v827
        %v829 = vmul.f32 %v824, %v828
        %v830 = vmul.f32 %v812, %v560
        %v831 = vmul.f32 %v824, %v560
        %v832 = vsel %vm609, %v830, 0.0
        %833 = vadd.xlane.f32.xlu0 %v832
        %v834 = vpop.xlane.xlu0 %833
        %v835 = vmax.f32 %v834, 1e-30
        %v836 = vrcp.pop %v835
        %v837 = vmul.f32 %v830, %v836
        %s838 = scalar_lea.vmem %s502, 4 [#allocation3]
        %839 = vst.msk [vmem:[%s838] sm:$0xf] %vm609, %v837
        %v840 = vsel %vm609, %v831, 0.0
        %841 = vadd.xlane.f32.xlu0 %v840
        %v842 = vpop.xlane.xlu0 %841
        %v843 = vmax.f32 %v842, 1e-30
        %v844 = vrcp.pop %v843
        %v845 = vmul.f32 %v831, %v844
        %s846 = scalar_lea.vmem [#allocation2], 4
        %847 = vst.msk [vmem:[%s846] sm:$0xf] %vm609, %v845
        %v848 = vpack.c.bf16 %v817, %v817
        %849 = vrot.lane.b32.xlu0 %v652, 88
        %v850 = vpop.permute.xlu0 %849
        %v852 = vsel %vm561, %v848, 0
        %v855 = vsel %vm658, %v850, 0
        %857 = vmatprep.subr.bf16.mxu0 0
        %858 = vmatpush1.bf16.msra.mxu0 0
        %859 = vmatprep.subr.bf16.mxu0 0
        %860 = vmatpush1.bf16.msra.mxu0 0
        %861 = vmatprep.subr.bf16.mxu0 0
        %862 = vmatpush1.bf16.msra.mxu0 0
        %863 = vmatprep.subr.bf16.mxu0 0
        %864 = vmatpush1.bf16.msra.mxu0 0
        %865 = vmatprep.subr.bf16.mxu0 0
        %866 = vmatpush1.bf16.msra.mxu0 0
        %867 = vmatprep.subr.bf16.mxu0 0
        %868 = vmatpush1.bf16.msra.mxu0 0
        %869 = vmatprep.subr.bf16.mxu0 0
        %870 = vmatpush1.bf16.msra.mxu0 0
        %871 = vmatprep.subr.bf16.mxu0 0
        %872 = vmatpush1.bf16.msra.mxu0 %v855
        %873 = vmatprep.subr.bf16.mxu0 0
        %874 = vmatpush2.bf16.msra.mxu0 0
        %875 = vmatprep.subr.bf16.mxu0 0
        %876 = vmatpush2.bf16.msra.mxu0 0
        %877 = vmatprep.subr.bf16.mxu0 0
        %878 = vmatpush2.bf16.msra.mxu0 0
        %879 = vmatprep.subr.bf16.mxu0 0
        %880 = vmatpush2.bf16.msra.mxu0 0
        %881 = vmatprep.subr.bf16.mxu0 0
        %882 = vmatpush2.bf16.msra.mxu0 0
        %883 = vmatprep.subr.bf16.mxu0 0
        %884 = vmatpush2.bf16.msra.mxu0 0
        %885 = vmatprep.subr.bf16.mxu0 0
        %886 = vmatpush2.bf16.msra.mxu0 0
        %887 = vmatprep.subr.bf16.mxu0 0
        %888 = vmatpush2.bf16.msra.mxu0 0
        %889 = vmatprep.mubr.bf16.mxu0 0
        %890 = vmatmul.mubr.bf16.gmra.mxu0 %v852
        %v891 = vpop.f32.mrf.mxu0
        %v892 = vadd.f32 0.0, %v891
        %v893 = vpop.f32.mrf.mxu0
        %v894 = vpop.f32.mrf.mxu0
        %v895 = vpop.f32.mrf.mxu0
        %896 = vdwg.mxu0
        %v897 = vpack.c.bf16 %v892, %v892
        %v898 = vpack.c.bf16 %v829, %v829
        %v900 = vsel %vm561, %v898, 0
        %902 = vmatprep.subr.bf16.mxu0 0
        %903 = vmatpush1.bf16.msra.mxu0 0
        %904 = vmatprep.subr.bf16.mxu0 0
        %905 = vmatpush1.bf16.msra.mxu0 0
        %906 = vmatprep.subr.bf16.mxu0 0
        %907 = vmatpush1.bf16.msra.mxu0 0
        %908 = vmatprep.subr.bf16.mxu0 0
        %909 = vmatpush1.bf16.msra.mxu0 0
        %910 = vmatprep.subr.bf16.mxu0 0
        %911 = vmatpush1.bf16.msra.mxu0 0
        %912 = vmatprep.subr.bf16.mxu0 0
        %913 = vmatpush1.bf16.msra.mxu0 0
        %914 = vmatprep.subr.bf16.mxu0 0
        %915 = vmatpush1.bf16.msra.mxu0 0
        %916 = vmatprep.subr.bf16.mxu0 0
        %917 = vmatpush1.bf16.msra.mxu0 %v855
        %918 = vmatprep.subr.bf16.mxu0 0
        %919 = vmatpush2.bf16.msra.mxu0 0
        %920 = vmatprep.subr.bf16.mxu0 0
        %921 = vmatpush2.bf16.msra.mxu0 0
        %922 = vmatprep.subr.bf16.mxu0 0
        %923 = vmatpush2.bf16.msra.mxu0 0
        %924 = vmatprep.subr.bf16.mxu0 0
        %925 = vmatpush2.bf16.msra.mxu0 0
        %926 = vmatprep.subr.bf16.mxu0 0
        %927 = vmatpush2.bf16.msra.mxu0 0
        %928 = vmatprep.subr.bf16.mxu0 0
        %929 = vmatpush2.bf16.msra.mxu0 0
        %930 = vmatprep.subr.bf16.mxu0 0
        %931 = vmatpush2.bf16.msra.mxu0 0
        %932 = vmatprep.subr.bf16.mxu0 0
        %933 = vmatpush2.bf16.msra.mxu0 0
        %934 = vmatprep.mubr.bf16.mxu0 0
        %935 = vmatmul.mubr.bf16.gmra.mxu0 %v900
        %v936 = vpop.f32.mrf.mxu0
        %v937 = vadd.f32 0.0, %v936
        %v938 = vpop.f32.mrf.mxu0
        %v939 = vpop.f32.mrf.mxu0
        %v940 = vpop.f32.mrf.mxu0
        %941 = vdwg.mxu0
        %v942 = vpack.c.bf16 %v937, %v937
        %943 = vrot.lane.b32.xlu0 %v755, 112
        %v944 = vpop.permute.xlu0 %943
        %945 = vrot.lane.b32.xlu0 %v652, 112
        %v946 = vpop.permute.xlu0 %945
        %v948 = vsel %vm561, %v944, 0
        %v951 = vsel %vm561, %v946, 0
        %953 = vmatprep.subr.bf16.mxu0 0
        %954 = vmatpush1.bf16.xpose.msra.mxu0 0
        %955 = vmatprep.subr.bf16.mxu0 0
        %956 = vmatpush1.bf16.xpose.msra.mxu0 0
        %957 = vmatprep.subr.bf16.mxu0 0
        %958 = vmatpush1.bf16.xpose.msra.mxu0 0
        %959 = vmatprep.subr.bf16.mxu0 0
        %960 = vmatpush1.bf16.xpose.msra.mxu0 0
        %961 = vmatprep.subr.bf16.mxu0 0
        %962 = vmatpush1.bf16.xpose.msra.mxu0 0
        %963 = vmatprep.subr.bf16.mxu0 0
        %964 = vmatpush1.bf16.xpose.msra.mxu0 0
        %965 = vmatprep.subr.bf16.mxu0 0
        %966 = vmatpush1.bf16.xpose.msra.mxu0 0
        %967 = vmatprep.subr.bf16.mxu0 0
        %968 = vmatpush1.bf16.xpose.msra.mxu0 %v951
        %969 = vmatprep.subr.bf16.mxu0 0
        %970 = vmatpush2.bf16.xpose.msra.mxu0 0
        %971 = vmatprep.subr.bf16.mxu0 0
        %972 = vmatpush2.bf16.xpose.msra.mxu0 0
        %973 = vmatprep.subr.bf16.mxu0 0
        %974 = vmatpush2.bf16.xpose.msra.mxu0 0
        %975 = vmatprep.subr.bf16.mxu0 0
        %976 = vmatpush2.bf16.xpose.msra.mxu0 0
        %977 = vmatprep.subr.bf16.mxu0 0
        %978 = vmatpush2.bf16.xpose.msra.mxu0 0
        %979 = vmatprep.subr.bf16.mxu0 0
        %980 = vmatpush2.bf16.xpose.msra.mxu0 0
        %981 = vmatprep.subr.bf16.mxu0 0
        %982 = vmatpush2.bf16.xpose.msra.mxu0 0
        %983 = vmatprep.subr.bf16.mxu0 0
        %984 = vmatpush2.bf16.xpose.msra.mxu0 0
        %985 = vmatprep.mubr.bf16.mxu0 0
        %986 = vmatmul.mubr.bf16.gmra.mxu0 %v948
        %v987 = vpop.f32.mrf.mxu0
        %v988 = vadd.f32 0.0, %v987
        %v989 = vpop.f32.mrf.mxu0
        %v990 = vpop.f32.mrf.mxu0
        %v991 = vpop.f32.mrf.mxu0
        %992 = vdwg.mxu0
        %v993 = vadd.f32 %v988, %v552
        %v994 = vsel %vm609, %v993, -inf
        %995 = vmax.xlane.f32.xlu0 %v994
        %v996 = vpop.xlane.xlu0 %995
        %v997 = vsub.f32 %v993, %v996
        %v998 = vmul.f32 %v997, 1.442695
        %v999 = vpow.pop %v998
        %v1000 = vsel %vm609, %v999, 0.0
        %1001 = vadd.xlane.f32.xlu0 %v1000
        %v1002 = vpop.xlane.xlu0 %1001
        %v1003 = vrcp.pop %v1002
        %v1004 = vmul.f32 %v999, %v1003
        %v1005 = vadd.f32 %v988, %v556
        %v1006 = vsel %vm609, %v1005, -inf
        %1007 = vmax.xlane.f32.xlu0 %v1006
        %v1008 = vpop.xlane.xlu0 %1007
        %v1009 = vsub.f32 %v1005, %v1008
        %v1010 = vmul.f32 %v1009, 1.442695
        %v1011 = vpow.pop %v1010
        %v1012 = vsel %vm609, %v1011, 0.0
        %1013 = vadd.xlane.f32.xlu0 %v1012
        %v1014 = vpop.xlane.xlu0 %1013
        %v1015 = vrcp.pop %v1014
        %v1016 = vmul.f32 %v1011, %v1015
        %v1017 = vmul.f32 %v999, %v560
        %v1018 = vmul.f32 %v1011, %v560
        %v1019 = vsel %vm609, %v1017, 0.0
        %1020 = vadd.xlane.f32.xlu0 %v1019
        %v1021 = vpop.xlane.xlu0 %1020
        %v1022 = vmax.f32 %v1021, 1e-30
        %v1023 = vrcp.pop %v1022
        %v1024 = vmul.f32 %v1017, %v1023
        %s1025 = scalar_lea.vmem %s502, 8 [#allocation3]
        %1026 = vst.msk [vmem:[%s1025] sm:$0xf] %vm609, %v1024
        %v1027 = vsel %vm609, %v1018, 0.0
        %1028 = vadd.xlane.f32.xlu0 %v1027
        %v1029 = vpop.xlane.xlu0 %1028
        %v1030 = vmax.f32 %v1029, 1e-30
        %v1031 = vrcp.pop %v1030
        %v1032 = vmul.f32 %v1018, %v1031
        %s1033 = scalar_lea.vmem [#allocation2], 8
        %1034 = vst.msk [vmem:[%s1033] sm:$0xf] %vm609, %v1032
        %v1035 = vpack.c.bf16 %v1004, %v1004
        %1036 = vrot.lane.b32.xlu0 %v652, 80
        %v1037 = vpop.permute.xlu0 %1036
        %v1039 = vsel %vm561, %v1035, 0
        %v1042 = vsel %vm658, %v1037, 0
        %1044 = vmatprep.subr.bf16.mxu0 0
        %1045 = vmatpush1.bf16.msra.mxu0 0
        %1046 = vmatprep.subr.bf16.mxu0 0
        %1047 = vmatpush1.bf16.msra.mxu0 0
        %1048 = vmatprep.subr.bf16.mxu0 0
        %1049 = vmatpush1.bf16.msra.mxu0 0
        %1050 = vmatprep.subr.bf16.mxu0 0
        %1051 = vmatpush1.bf16.msra.mxu0 0
        %1052 = vmatprep.subr.bf16.mxu0 0
        %1053 = vmatpush1.bf16.msra.mxu0 0
        %1054 = vmatprep.subr.bf16.mxu0 0
        %1055 = vmatpush1.bf16.msra.mxu0 0
        %1056 = vmatprep.subr.bf16.mxu0 0
        %1057 = vmatpush1.bf16.msra.mxu0 0
        %1058 = vmatprep.subr.bf16.mxu0 0
        %1059 = vmatpush1.bf16.msra.mxu0 %v1042
        %1060 = vmatprep.subr.bf16.mxu0 0
        %1061 = vmatpush2.bf16.msra.mxu0 0
        %1062 = vmatprep.subr.bf16.mxu0 0
        %1063 = vmatpush2.bf16.msra.mxu0 0
        %1064 = vmatprep.subr.bf16.mxu0 0
        %1065 = vmatpush2.bf16.msra.mxu0 0
        %1066 = vmatprep.subr.bf16.mxu0 0
        %1067 = vmatpush2.bf16.msra.mxu0 0
        %1068 = vmatprep.subr.bf16.mxu0 0
        %1069 = vmatpush2.bf16.msra.mxu0 0
        %1070 = vmatprep.subr.bf16.mxu0 0
        %1071 = vmatpush2.bf16.msra.mxu0 0
        %1072 = vmatprep.subr.bf16.mxu0 0
        %1073 = vmatpush2.bf16.msra.mxu0 0
        %1074 = vmatprep.subr.bf16.mxu0 0
        %1075 = vmatpush2.bf16.msra.mxu0 0
        %1076 = vmatprep.mubr.bf16.mxu0 0
        %1077 = vmatmul.mubr.bf16.gmra.mxu0 %v1039
        %v1078 = vpop.f32.mrf.mxu0
        %v1079 = vadd.f32 0.0, %v1078
        %v1080 = vpop.f32.mrf.mxu0
        %v1081 = vpop.f32.mrf.mxu0
        %v1082 = vpop.f32.mrf.mxu0
        %1083 = vdwg.mxu0
        %v1084 = vpack.c.bf16 %v1079, %v1079
        %v1085 = vpack.c.bf16 %v1016, %v1016
        %v1087 = vsel %vm561, %v1085, 0
        %1089 = vmatprep.subr.bf16.mxu0 0
        %1090 = vmatpush1.bf16.msra.mxu0 0
        %1091 = vmatprep.subr.bf16.mxu0 0
        %1092 = vmatpush1.bf16.msra.mxu0 0
        %1093 = vmatprep.subr.bf16.mxu0 0
        %1094 = vmatpush1.bf16.msra.mxu0 0
        %1095 = vmatprep.subr.bf16.mxu0 0
        %1096 = vmatpush1.bf16.msra.mxu0 0
        %1097 = vmatprep.subr.bf16.mxu0 0
        %1098 = vmatpush1.bf16.msra.mxu0 0
        %1099 = vmatprep.subr.bf16.mxu0 0
        %1100 = vmatpush1.bf16.msra.mxu0 0
        %1101 = vmatprep.subr.bf16.mxu0 0
        %1102 = vmatpush1.bf16.msra.mxu0 0
        %1103 = vmatprep.subr.bf16.mxu0 0
        %1104 = vmatpush1.bf16.msra.mxu0 %v1042
        %1105 = vmatprep.subr.bf16.mxu0 0
        %1106 = vmatpush2.bf16.msra.mxu0 0
        %1107 = vmatprep.subr.bf16.mxu0 0
        %1108 = vmatpush2.bf16.msra.mxu0 0
        %1109 = vmatprep.subr.bf16.mxu0 0
        %1110 = vmatpush2.bf16.msra.mxu0 0
        %1111 = vmatprep.subr.bf16.mxu0 0
        %1112 = vmatpush2.bf16.msra.mxu0 0
        %1113 = vmatprep.subr.bf16.mxu0 0
        %1114 = vmatpush2.bf16.msra.mxu0 0
        %1115 = vmatprep.subr.bf16.mxu0 0
        %1116 = vmatpush2.bf16.msra.mxu0 0
        %1117 = vmatprep.subr.bf16.mxu0 0
        %1118 = vmatpush2.bf16.msra.mxu0 0
        %1119 = vmatprep.subr.bf16.mxu0 0
        %1120 = vmatpush2.bf16.msra.mxu0 0
        %1121 = vmatprep.mubr.bf16.mxu0 0
        %1122 = vmatmul.mubr.bf16.gmra.mxu0 %v1087
        %v1123 = vpop.f32.mrf.mxu0
        %v1124 = vadd.f32 0.0, %v1123
        %v1125 = vpop.f32.mrf.mxu0
        %v1126 = vpop.f32.mrf.mxu0
        %v1127 = vpop.f32.mrf.mxu0
        %1128 = vdwg.mxu0
        %v1129 = vpack.c.bf16 %v1124, %v1124
        %1130 = vrot.lane.b32.xlu0 %v755, 104
        %v1131 = vpop.permute.xlu0 %1130
        %1132 = vrot.lane.b32.xlu0 %v652, 104
        %v1133 = vpop.permute.xlu0 %1132
        %v1135 = vsel %vm561, %v1131, 0
        %v1138 = vsel %vm561, %v1133, 0
        %1140 = vmatprep.subr.bf16.mxu0 0
        %1141 = vmatpush1.bf16.xpose.msra.mxu0 0
        %1142 = vmatprep.subr.bf16.mxu0 0
        %1143 = vmatpush1.bf16.xpose.msra.mxu0 0
        %1144 = vmatprep.subr.bf16.mxu0 0
        %1145 = vmatpush1.bf16.xpose.msra.mxu0 0
        %1146 = vmatprep.subr.bf16.mxu0 0
        %1147 = vmatpush1.bf16.xpose.msra.mxu0 0
        %1148 = vmatprep.subr.bf16.mxu0 0
        %1149 = vmatpush1.bf16.xpose.msra.mxu0 0
        %1150 = vmatprep.subr.bf16.mxu0 0
        %1151 = vmatpush1.bf16.xpose.msra.mxu0 0
        %1152 = vmatprep.subr.bf16.mxu0 0
        %1153 = vmatpush1.bf16.xpose.msra.mxu0 0
        %1154 = vmatprep.subr.bf16.mxu0 0
        %1155 = vmatpush1.bf16.xpose.msra.mxu0 %v1138
        %1156 = vmatprep.subr.bf16.mxu0 0
        %1157 = vmatpush2.bf16.xpose.msra.mxu0 0
        %1158 = vmatprep.subr.bf16.mxu0 0
        %1159 = vmatpush2.bf16.xpose.msra.mxu0 0
        %1160 = vmatprep.subr.bf16.mxu0 0
        %1161 = vmatpush2.bf16.xpose.msra.mxu0 0
        %1162 = vmatprep.subr.bf16.mxu0 0
        %1163 = vmatpush2.bf16.xpose.msra.mxu0 0
        %1164 = vmatprep.subr.bf16.mxu0 0
        %1165 = vmatpush2.bf16.xpose.msra.mxu0 0
        %1166 = vmatprep.subr.bf16.mxu0 0
        %1167 = vmatpush2.bf16.xpose.msra.mxu0 0
        %1168 = vmatprep.subr.bf16.mxu0 0
        %1169 = vmatpush2.bf16.xpose.msra.mxu0 0
        %1170 = vmatprep.subr.bf16.mxu0 0
        %1171 = vmatpush2.bf16.xpose.msra.mxu0 0
        %1172 = vmatprep.mubr.bf16.mxu0 0
        %1173 = vmatmul.mubr.bf16.gmra.mxu0 %v1135
        %v1174 = vpop.f32.mrf.mxu0
        %v1175 = vadd.f32 0.0, %v1174
        %v1176 = vpop.f32.mrf.mxu0
        %v1177 = vpop.f32.mrf.mxu0
        %v1178 = vpop.f32.mrf.mxu0
        %1179 = vdwg.mxu0
        %v1180 = vadd.f32 %v1175, %v552
        %v1181 = vsel %vm609, %v1180, -inf
        %1182 = vmax.xlane.f32.xlu0 %v1181
        %v1183 = vpop.xlane.xlu0 %1182
        %v1184 = vsub.f32 %v1180, %v1183
        %v1185 = vmul.f32 %v1184, 1.442695
        %v1186 = vpow.pop %v1185
        %v1187 = vsel %vm609, %v1186, 0.0
        %1188 = vadd.xlane.f32.xlu0 %v1187
        %v1189 = vpop.xlane.xlu0 %1188
        %v1190 = vrcp.pop %v1189
        %v1191 = vmul.f32 %v1186, %v1190
        %v1192 = vadd.f32 %v1175, %v556
        %v1193 = vsel %vm609, %v1192, -inf
        %1194 = vmax.xlane.f32.xlu0 %v1193
        %v1195 = vpop.xlane.xlu0 %1194
        %v1196 = vsub.f32 %v1192, %v1195
        %v1197 = vmul.f32 %v1196, 1.442695
        %v1198 = vpow.pop %v1197
        %v1199 = vsel %vm609, %v1198, 0.0
        %1200 = vadd.xlane.f32.xlu0 %v1199
        %v1201 = vpop.xlane.xlu0 %1200
        %v1202 = vrcp.pop %v1201
        %v1203 = vmul.f32 %v1198, %v1202
        %v1204 = vmul.f32 %v1186, %v560
        %v1205 = vmul.f32 %v1198, %v560
        %v1206 = vsel %vm609, %v1204, 0.0
        %1207 = vadd.xlane.f32.xlu0 %v1206
        %v1208 = vpop.xlane.xlu0 %1207
        %v1209 = vmax.f32 %v1208, 1e-30
        %v1210 = vrcp.pop %v1209
        %v1211 = vmul.f32 %v1204, %v1210
        %s1212 = scalar_lea.vmem %s502, 12 [#allocation3]
        %1213 = vst.msk [vmem:[%s1212] sm:$0xf] %vm609, %v1211
        %v1214 = vsel %vm609, %v1205, 0.0
        %1215 = vadd.xlane.f32.xlu0 %v1214
        %v1216 = vpop.xlane.xlu0 %1215
        %v1217 = vmax.f32 %v1216, 1e-30
        %v1218 = vrcp.pop %v1217
        %v1219 = vmul.f32 %v1205, %v1218
        %s1220 = scalar_lea.vmem [#allocation2], 12
        %1221 = vst.msk [vmem:[%s1220] sm:$0xf] %vm609, %v1219
        %v1222 = vpack.c.bf16 %v1191, %v1191
        %1223 = vrot.lane.b32.xlu0 %v652, 72
        %v1224 = vpop.permute.xlu0 %1223
        %v1226 = vsel %vm561, %v1222, 0
        %v1229 = vsel %vm658, %v1224, 0
        %1231 = vmatprep.subr.bf16.mxu0 0
        %1232 = vmatpush1.bf16.msra.mxu0 0
        %1233 = vmatprep.subr.bf16.mxu0 0
        %1234 = vmatpush1.bf16.msra.mxu0 0
        %1235 = vmatprep.subr.bf16.mxu0 0
        %1236 = vmatpush1.bf16.msra.mxu0 0
        %1237 = vmatprep.subr.bf16.mxu0 0
        %1238 = vmatpush1.bf16.msra.mxu0 0
        %1239 = vmatprep.subr.bf16.mxu0 0
        %1240 = vmatpush1.bf16.msra.mxu0 0
        %1241 = vmatprep.subr.bf16.mxu0 0
        %1242 = vmatpush1.bf16.msra.mxu0 0
        %1243 = vmatprep.subr.bf16.mxu0 0
        %1244 = vmatpush1.bf16.msra.mxu0 0
        %1245 = vmatprep.subr.bf16.mxu0 0
        %1246 = vmatpush1.bf16.msra.mxu0 %v1229
        %1247 = vmatprep.subr.bf16.mxu0 0
        %1248 = vmatpush2.bf16.msra.mxu0 0
        %1249 = vmatprep.subr.bf16.mxu0 0
        %1250 = vmatpush2.bf16.msra.mxu0 0
        %1251 = vmatprep.subr.bf16.mxu0 0
        %1252 = vmatpush2.bf16.msra.mxu0 0
        %1253 = vmatprep.subr.bf16.mxu0 0
        %1254 = vmatpush2.bf16.msra.mxu0 0
        %1255 = vmatprep.subr.bf16.mxu0 0
        %1256 = vmatpush2.bf16.msra.mxu0 0
        %1257 = vmatprep.subr.bf16.mxu0 0
        %1258 = vmatpush2.bf16.msra.mxu0 0
        %1259 = vmatprep.subr.bf16.mxu0 0
        %1260 = vmatpush2.bf16.msra.mxu0 0
        %1261 = vmatprep.subr.bf16.mxu0 0
        %1262 = vmatpush2.bf16.msra.mxu0 0
        %1263 = vmatprep.mubr.bf16.mxu0 0
        %1264 = vmatmul.mubr.bf16.gmra.mxu0 %v1226
        %v1265 = vpop.f32.mrf.mxu0
        %v1266 = vadd.f32 0.0, %v1265
        %v1267 = vpop.f32.mrf.mxu0
        %v1268 = vpop.f32.mrf.mxu0
        %v1269 = vpop.f32.mrf.mxu0
        %1270 = vdwg.mxu0
        %v1271 = vpack.c.bf16 %v1266, %v1266
        %v1272 = vpack.c.bf16 %v1203, %v1203
        %v1274 = vsel %vm561, %v1272, 0
        %1276 = vmatprep.subr.bf16.mxu0 0
        %1277 = vmatpush1.bf16.msra.mxu0 0
        %1278 = vmatprep.subr.bf16.mxu0 0
        %1279 = vmatpush1.bf16.msra.mxu0 0
        %1280 = vmatprep.subr.bf16.mxu0 0
        %1281 = vmatpush1.bf16.msra.mxu0 0
        %1282 = vmatprep.subr.bf16.mxu0 0
        %1283 = vmatpush1.bf16.msra.mxu0 0
        %1284 = vmatprep.subr.bf16.mxu0 0
        %1285 = vmatpush1.bf16.msra.mxu0 0
        %1286 = vmatprep.subr.bf16.mxu0 0
        %1287 = vmatpush1.bf16.msra.mxu0 0
        %1288 = vmatprep.subr.bf16.mxu0 0
        %1289 = vmatpush1.bf16.msra.mxu0 0
        %1290 = vmatprep.subr.bf16.mxu0 0
        %1291 = vmatpush1.bf16.msra.mxu0 %v1229
        %1292 = vmatprep.subr.bf16.mxu0 0
        %1293 = vmatpush2.bf16.msra.mxu0 0
        %1294 = vmatprep.subr.bf16.mxu0 0
        %1295 = vmatpush2.bf16.msra.mxu0 0
        %1296 = vmatprep.subr.bf16.mxu0 0
        %1297 = vmatpush2.bf16.msra.mxu0 0
        %1298 = vmatprep.subr.bf16.mxu0 0
        %1299 = vmatpush2.bf16.msra.mxu0 0
        %1300 = vmatprep.subr.bf16.mxu0 0
        %1301 = vmatpush2.bf16.msra.mxu0 0
        %1302 = vmatprep.subr.bf16.mxu0 0
        %1303 = vmatpush2.bf16.msra.mxu0 0
        %1304 = vmatprep.subr.bf16.mxu0 0
        %1305 = vmatpush2.bf16.msra.mxu0 0
        %1306 = vmatprep.subr.bf16.mxu0 0
        %1307 = vmatpush2.bf16.msra.mxu0 0
        %1308 = vmatprep.mubr.bf16.mxu0 0
        %1309 = vmatmul.mubr.bf16.gmra.mxu0 %v1274
        %v1310 = vpop.f32.mrf.mxu0
        %v1311 = vadd.f32 0.0, %v1310
        %v1312 = vpop.f32.mrf.mxu0
        %v1313 = vpop.f32.mrf.mxu0
        %v1314 = vpop.f32.mrf.mxu0
        %1315 = vdwg.mxu0
        %v1316 = vpack.c.bf16 %v1311, %v1311
        %v1317 = vld [vmem:[%s7] sm:$0x1]
        %v1318 = vld [vmem:[%s6] sm:$0xf]
        %v1319 = vld [vmem:[%s6 + $0x4] sm:$0xf]
        %v1320 = vld [vmem:[%s6 + $0x8] sm:$0xf]
        %v1321 = vld [vmem:[%s6 + $0xc] sm:$0xf]
        %1323 = vrot.lane.b32.xlu0 %v897, 8
        %v1324 = vpop.permute.xlu0 %1323
        %1326 = vrot.lane.b32.xlu0 %v1084, 16
        %v1327 = vpop.permute.xlu0 %1326
        %1329 = vrot.lane.b32.xlu0 %v1271, 24
        %v1330 = vpop.permute.xlu0 %1329
        %v1333 = vsel %vm561, %v702, %v1324
        %vm1334 = vcmask 130048
        %v1336 = vsel %vm1334, %v1333, %v1327
        %vm1337 = vcmask 195584
        %v1339 = vsel %vm1337, %v1336, %v1330
        %v1341 = vlaneseq
        %v1342 = vshrl.u32 %v1341, 7
        %v1343 = vsub.s32 0, %v1342
        %v1344 = vrot.slane %v1317, %v1343
        %v1350 = vunpack.c.l.b16 %v1318
        %v1351 = vunpack.c.l.b16 %v1319
        %v1352 = vunpack.c.l.b16 %v1320
        %v1353 = vunpack.c.l.b16 %v1321
        %v1354 = vpack.c.b16 %v1351, %v1350
        %v1355 = vpack.c.b16 %v1353, %v1352
        %vm1358 = vcmask 261120
        %v1359 = vsel %vm1358, %v1339, 0
        %1361 = vmatprep.subr.bf16.mxu0 0
        %1362 = vmatpush1.bf16.msra.mxu0 0
        %1363 = vmatprep.subr.bf16.mxu0 0
        %1364 = vmatpush1.bf16.msra.mxu0 0
        %1365 = vmatprep.subr.bf16.mxu0 0
        %1366 = vmatpush1.bf16.msra.mxu0 0
        %1367 = vmatprep.subr.bf16.mxu0 0
        %1368 = vmatpush1.bf16.msra.mxu0 0
        %1369 = vmatprep.subr.bf16.mxu0 0
        %1370 = vmatpush1.bf16.msra.mxu0 0
        %1371 = vmatprep.subr.bf16.mxu0 0
        %1372 = vmatpush1.bf16.msra.mxu0 0
        %1373 = vmatprep.subr.bf16.mxu0 0
        %1374 = vmatpush1.bf16.msra.mxu0 %v1355
        %1375 = vmatprep.subr.bf16.mxu0 0
        %1376 = vmatpush1.bf16.msra.mxu0 %v1354
        %1377 = vmatprep.subr.bf16.mxu0 0
        %1378 = vmatpush2.bf16.msra.mxu0 0
        %1379 = vmatprep.subr.bf16.mxu0 0
        %1380 = vmatpush2.bf16.msra.mxu0 0
        %1381 = vmatprep.subr.bf16.mxu0 0
        %1382 = vmatpush2.bf16.msra.mxu0 0
        %1383 = vmatprep.subr.bf16.mxu0 0
        %1384 = vmatpush2.bf16.msra.mxu0 0
        %1385 = vmatprep.subr.bf16.mxu0 0
        %1386 = vmatpush2.bf16.msra.mxu0 0
        %1387 = vmatprep.subr.bf16.mxu0 0
        %1388 = vmatpush2.bf16.msra.mxu0 0
        %1389 = vmatprep.subr.bf16.mxu0 0
        %1390 = vmatpush2.bf16.msra.mxu0 0
        %1391 = vmatprep.subr.bf16.mxu0 0
        %1392 = vmatpush2.bf16.msra.mxu0 0
        %1393 = vmatprep.mubr.bf16.mxu0 0
        %1394 = vmatmul.mubr.bf16.gmra.mxu0 %v1359
        %v1395 = vpop.f32.mrf.mxu0
        %v1396 = vadd.f32 %v1344, %v1395
        %v1397 = vpop.f32.mrf.mxu0
        %v1398 = vpop.f32.mrf.mxu0
        %v1399 = vpop.f32.mrf.mxu0
        %1400 = vdwg.mxu0
        %1402 = vrot.lane.b32.xlu0 %v942, 8
        %v1403 = vpop.permute.xlu0 %1402
        %1405 = vrot.lane.b32.xlu0 %v1129, 16
        %v1406 = vpop.permute.xlu0 %1405
        %1408 = vrot.lane.b32.xlu0 %v1316, 24
        %v1409 = vpop.permute.xlu0 %1408
        %v1412 = vsel %vm561, %v747, %v1403
        %v1414 = vsel %vm1334, %v1412, %v1406
        %v1416 = vsel %vm1337, %v1414, %v1409
        %v1417 = vsel %vm1358, %v1416, 0
        %1419 = vmatprep.subr.bf16.mxu0 0
        %1420 = vmatpush1.bf16.msra.mxu0 0
        %1421 = vmatprep.subr.bf16.mxu0 0
        %1422 = vmatpush1.bf16.msra.mxu0 0
        %1423 = vmatprep.subr.bf16.mxu0 0
        %1424 = vmatpush1.bf16.msra.mxu0 0
        %1425 = vmatprep.subr.bf16.mxu0 0
        %1426 = vmatpush1.bf16.msra.mxu0 0
        %1427 = vmatprep.subr.bf16.mxu0 0
        %1428 = vmatpush1.bf16.msra.mxu0 0
        %1429 = vmatprep.subr.bf16.mxu0 0
        %1430 = vmatpush1.bf16.msra.mxu0 0
        %1431 = vmatprep.subr.bf16.mxu0 0
        %1432 = vmatpush1.bf16.msra.mxu0 %v1355
        %1433 = vmatprep.subr.bf16.mxu0 0
        %1434 = vmatpush1.bf16.msra.mxu0 %v1354
        %1435 = vmatprep.subr.bf16.mxu0 0
        %1436 = vmatpush2.bf16.msra.mxu0 0
        %1437 = vmatprep.subr.bf16.mxu0 0
        %1438 = vmatpush2.bf16.msra.mxu0 0
        %1439 = vmatprep.subr.bf16.mxu0 0
        %1440 = vmatpush2.bf16.msra.mxu0 0
        %1441 = vmatprep.subr.bf16.mxu0 0
        %1442 = vmatpush2.bf16.msra.mxu0 0
        %1443 = vmatprep.subr.bf16.mxu0 0
        %1444 = vmatpush2.bf16.msra.mxu0 0
        %1445 = vmatprep.subr.bf16.mxu0 0
        %1446 = vmatpush2.bf16.msra.mxu0 0
        %1447 = vmatprep.subr.bf16.mxu0 0
        %1448 = vmatpush2.bf16.msra.mxu0 0
        %1449 = vmatprep.subr.bf16.mxu0 0
        %1450 = vmatpush2.bf16.msra.mxu0 0
        %1451 = vmatprep.mubr.bf16.mxu0 0
        %1452 = vmatmul.mubr.bf16.gmra.mxu0 %v1417
        %v1453 = vpop.f32.mrf.mxu0
        %v1454 = vadd.f32 %v1344, %v1453
        %v1455 = vpop.f32.mrf.mxu0
        %v1456 = vpop.f32.mrf.mxu0
        %v1457 = vpop.f32.mrf.mxu0
        %1458 = vdwg.mxu0
        %v1459 = vld [vmem:[%s8] sm:$0x1]
        %v1461 = vlaneseq
        %v1462 = vshrl.u32 %v1461, 7
        %v1463 = vsub.s32 0, %v1462
        %v1464 = vrot.slane %v1459, %v1463
        %v1466 = vmul.f32 %v1396, %v1464
        %vm1467 = vcmask 257024
        %v1468 = vsel %vm1467, %v1466, 0.0
        %1469 = vadd.xlane.f32.xlu0 %v1468
        %v1470 = vpop.xlane.xlu0 %1469
        %v1471 = vld [vmem:[%s9] sm:$0x1]
        %v1473 = vlaneseq
        %v1474 = vshrl.u32 %v1473, 7
        %v1475 = vsub.s32 0, %v1474
        %v1476 = vrot.slane %v1471, %v1475
        %v1478 = vmul.f32 %v1454, %v1476
        %v1479 = vsel %vm1467, %v1478, 0.0
        %1480 = vadd.xlane.f32.xlu0 %v1479
        %v1481 = vpop.xlane.xlu0 %1480
        %v1482 = vadd.f32 %v1470, %v1481
        %v1483 = vsub.f32 0.0, %v1482
        %v1484 = vmul.f32 %v1483, 1.442695
        %v1485 = vpow.pop %v1484
        %v1486 = vadd.f32 %v1485, 1.0
        %v1487 = vrcp.pop %v1486
        %v1488 = vmul.f32 1.0, %v1487
        %v1489 = vmul.f32 %v1396, %v1488
        %v1490 = vsub.f32 1.0, %v1488
        %v1491 = vmul.f32 %v1454, %v1490
        %v1492 = vadd.f32 %v1489, %v1491
        %v1493 = vld [vmem:[%s538] sm:$0xf]
        %v1494 = vadd.f32 %v1492, %v1493
        %1495 = vst.msk [vmem:[%s545] sm:$0xf] %vm1467, %v1494
        %v1496 = vld [vmem:[%s502] sm:$0xf]
        %v1497 = vmul.f32 %v1496, %v1488
        %v1498 = vld [vmem:[#allocation2] sm:$0xf]
        %v1499 = vmul.f32 %v1498, %v1490
        %v1500 = vadd.f32 %v1497, %v1499
        %1501 = vst.msk [vmem:[%s502] sm:$0xf] %vm609, %v1500
        %v1502 = vld [vmem:[%s838] sm:$0xf]
        %v1503 = vmul.f32 %v1502, %v1488
        %v1504 = vld [vmem:[%s846] sm:$0xf]
        %v1505 = vmul.f32 %v1504, %v1490
        %v1506 = vadd.f32 %v1503, %v1505
        %1507 = vst.msk [vmem:[%s838] sm:$0xf] %vm609, %v1506
        %v1508 = vld [vmem:[%s1025] sm:$0xf]
        %v1509 = vmul.f32 %v1508, %v1488
        %v1510 = vld [vmem:[%s1033] sm:$0xf]
        %v1511 = vmul.f32 %v1510, %v1490
        %v1512 = vadd.f32 %v1509, %v1511
        %1513 = vst.msk [vmem:[%s1025] sm:$0xf] %vm609, %v1512
        %v1514 = vld [vmem:[%s1212] sm:$0xf]
        %v1515 = vmul.f32 %v1514, %v1488
        %v1516 = vld [vmem:[%s1220] sm:$0xf]
        %v1517 = vmul.f32 %v1516, %v1490
        %v1518 = vadd.f32 %v1515, %v1517
        %1519 = vst.msk [vmem:[%s1212] sm:$0xf] %vm609, %v1518
        %p1520 = scmp.lt.s32.totalorder %s30, 1
        %s1521 = scalar_select %p1520, %s30, 1
        %p1522 = scmp.lt.s32.totalorder %s31, 0
        %s1523 = scalar_select %p1522, %s31, 0
        %s1524 = sadd.s32 %s1523, %s1521
        %s1525 = smul.addr %s1524, 4
        %s1526 = scalar_lea.vmem %s10, %s1525
        %s1527 = sand.u32 %s326, 1
        %s1528 = scalar_lea.sflag [#allocation4], %s1527
        %s1529 = sand.u32 %s326, 1
        %s1530 = smul.addr %s1529, 16
        %s1531 = scalar_lea.vmem [#allocation3], %s1530
        // Predicated region
        $region61: #{decoder_layer_forward.11} parent=59 // pred_check
          %p1532 = pneg %p308
        $region62: #{decoder_layer_forward.11} parent=59 // pred_check_branch
          %1534 = sbr.rel (%p1532) target = $region64
        $region63: #{decoder_layer_forward.11} parent=59 // pred_region
          _
        $region64: #{decoder_layer_forward.11} parent=59 // pred_fallthru
          _
        // Predicated region
        $region65: #{decoder_layer_forward.11} parent=59 // pred_check
          %p1535 = pneg %p336
        $region66: #{decoder_layer_forward.11} parent=59 // pred_check_branch
          %1537 = sbr.rel (%p1535) target = $region68
        $region67: #{decoder_layer_forward.11} parent=59 // pred_region
          %s1539 = ssub.s32 256, 256
          %1540 = vsyncadd %s1528, %s1539
          %s1541 = smul.addr %s30, 4
          %s1542 = sadd.s32 %s31, %s1541
          %s1543 = smul.addr %s1542, 64
          %s1544 = scalar_lea.hbm %s11, %s1543
          %s1545 = sshll.u32 %s1531, 4
          %s1546 = int_to_ptr.vmem [resolvable:$true] %s1545
          %1551 = dma.vmem_to_hbm [thread:$0]  %s1546, 256, %s1544, %s1528, 64, 64, 4
        $region68: #{decoder_layer_forward.11} parent=59 // pred_fallthru
          _
      $region60: #{decoder_layer_forward.11} parent=5 // pred_fallthru
        _
      %p1552 = scmp.le.s32.totalorder 2, %s21
      // Predicated region
      $region69: #{decoder_layer_forward.11} parent=5 // pred_check
        %p1553 = pneg %p1552
      $region70: #{decoder_layer_forward.11} parent=5 // pred_check_branch
        %1555 = sbr.rel (%p1553) target = $region72
      $region71: #{decoder_layer_forward.11} parent=5 // pred_region
        %s1556 = ssub.s32 %s21, 2
        // Predicated region
        $region73: #{decoder_layer_forward.11} parent=71 // pred_check
          %p1557 = pneg %p314
        $region74: #{decoder_layer_forward.11} parent=71 // pred_check_branch
          %1559 = sbr.rel (%p1557) target = $region76
        $region75: #{decoder_layer_forward.11} parent=71 // pred_region
          %p1560 = scmp.lt.s32.totalorder %s32, 1
          %s1561 = scalar_select %p1560, %s32, 1
          %p1562 = scmp.lt.s32.totalorder %s33, 0
          %s1563 = scalar_select %p1562, %s33, 0
          %s1564 = sadd.s32 %s1563, %s1561
          %s1565 = smul.addr %s1564, 4
          %s1566 = scalar_lea.vmem %s10, %s1565
        $region76: #{decoder_layer_forward.11} parent=71 // pred_fallthru
          _
        // Predicated region
        $region77: #{decoder_layer_forward.11} parent=71 // pred_check
          %p1567 = pneg %p342
        $region78: #{decoder_layer_forward.11} parent=71 // pred_check_branch
          %1569 = sbr.rel (%p1567) target = $region80
        $region79: #{decoder_layer_forward.11} parent=71 // pred_region
          %s1570 = sand.u32 %s327, 1
          %s1571 = scalar_lea.sflag [#allocation4], %s1570
          %s1572 = sand.u32 %s327, 1
          %s1573 = smul.addr %s1572, 16
          %s1574 = scalar_lea.vmem [#allocation3], %s1573
          %1575 = dma.done %s1571, 256
        $region80: #{decoder_layer_forward.11} parent=71 // pred_fallthru
          _
      $region72: #{decoder_layer_forward.11} parent=5 // pred_fallthru
        _
    $region6: #{decoder_layer_forward.11} parent=1 // loop_footer
      %s25 = sadd.s32 1, %s21
    $region7: #{decoder_layer_forward.11} parent=1 // loop_footer_branch
      %20 = sbr.rel target = $region3
    $region8: #{decoder_layer_forward.11} parent=1 // loop_exit
      _
    %1576 = vsyncpa [#allocation4], 1
    %s1577 = scalar_lea.sflag [#allocation4], 1
    %1578 = vsyncpa %s1577, 1

</llo_original>
